<compile_context>
chip_gen: v5e
topology: v5e:2x2
jax: 0.10.0
libtpu: 0.0.40
codegen_flags: <defaults>
</compile_context>

<pallas_src>
import functools

import jax
import jax.numpy as jnp
import numpy as np
from jax.experimental import pallas as pl
from jax.experimental.pallas import tpu as pltpu

_VMEM_LIMIT_BYTES = 48 * 1024 * 1024   # explicit budget; fits v7x's 64 MiB VMEM


def _round_up(x, m):
    return ((x + m - 1) // m) * m


def _pick_row_tile(H, W, Cin, Cout, budget_bytes=12 << 20):
    """Largest divisor of H whose (lane-padding aware, double-buffered) working set
    fits a conservative VMEM budget; prefers >= 2 row tiles so the BlockSpec
    pipeline has DMA work to overlap."""
    cin_p, cout_p = _round_up(Cin, 128), _round_up(Cout, 128)
    wp8, w8 = _round_up(W + 2, 8), _round_up(W, 8)

    def fits(th):
        inp = (th + 2) * wp8 * cin_p * 4             # main + halo input rows
        outp = 4 * th * w8 * cout_p * 4              # 4 phase planes
        acc = 2 * th * W * _round_up(2 * Cout, 128) * 4
        scratch = (th + 2) * wp8 * cin_p * 4
        return 2 * (inp + outp) + acc + scratch <= budget_bytes

    divs = [d for d in range(1, H + 1) if H % d == 0 and fits(d)]
    if not divs:
        return 1
    th = max(divs)
    smaller = [d for d in divs if d < H]
    if th == H and smaller:
        th = max(smaller)
    return th


def _pick_bn_rows(R, WC, budget_bytes=8 << 20):
    """Row-tile for the elementwise BN+ReLU pass on the (R, WC) lane-dense view."""
    cands = [d for d in range(8, R + 1, 8)
             if R % d == 0 and 4 * d * WC * 4 <= budget_bytes]
    if not cands:
        return R
    multi = [d for d in cands if R // d >= 2]
    return max(multi) if multi else max(cands)


def _pixel_shuffle_weights(weight):
    """(Cout, Cin, 3, 3) -> (2, 9, Cin, 2*Cout) combined pixel-shuffle weights.

    Output index [a, ro*3+co, ci, b*Cout + co_ch] is the weight applied to the
    padded-original-image tap at (row offset ro, col offset co) for the output
    pixel (2i+a, 2j+b), channel co_ch.
    """
    Cout, Cin = weight.shape[0], weight.shape[1]
    w_t = jnp.transpose(weight, (2, 3, 1, 0))        # (ky, kx, Cin, Cout)
    # source-row offset of the upsampled-conv tap, +1 for the zero pad
    rmap = np.zeros((2, 3, 3), np.float32)
    for a in range(2):
        for k in range(3):
            ro = (a + k - 1) // 2 + 1                # in {0, 1, 2}
            rmap[a, k, ro] = 1.0
    cmap = rmap                                      # same mapping for columns
    # W_eff[a, b, ro, co, ci, ch]
    w_eff = jnp.einsum("ayr,bxc,yxio->abrcio",
                       jnp.asarray(rmap), jnp.asarray(cmap), w_t)
    w_comb = jnp.transpose(w_eff, (0, 2, 3, 4, 1, 5))          # (a, ro, co, ci, b, ch)
    return w_comb.reshape(2, 9, Cin, 2 * Cout)


def _upconv_conv_kernel(xm_ref, xh0_ref, xh1_ref, w_ref, y_ref, st_ref, xt_ref):
    """Fused (2x nearest upsample + 3x3 conv) on one (batch, row-tile) block.

    xm_ref : (1, TH, W+2, Cin)    main padded-input rows
    xh0_ref: (1, 1,  W+2, Cin)    first halo row below the tile
    xh1_ref: (1, 1,  W+2, Cin)    second halo row
    w_ref  : (2, 9, Cin, 2*Cout)  combined pixel-shuffle weights
    y_ref  : (1, 4, TH, W, Cout)  4 output phases (a*2+b), original resolution
    st_ref : (1, 1, 2, Cout)      per-tile [sum, sum_of_squares] per channel
    xt_ref : VMEM (TH+2, W+2, Cin) stitched padded tile
    """
    TH = xm_ref.shape[1]
    Cin = xm_ref.shape[3]
    W = xm_ref.shape[2] - 2
    Cout = st_ref.shape[3]

    # Stitch main rows + 2 halo rows into one contiguous padded tile.
    xt_ref[0:TH] = xm_ref[0]
    xt_ref[TH:TH + 1] = xh0_ref[0]
    xt_ref[TH + 1:TH + 2] = xh1_ref[0]

    # 9 taps on the ORIGINAL resolution, accumulated in local f32 values
    # (no scratch read-modify-write, no zero-init).  Columns of acc_a are
    # laid out (b, cout); rows are (i, j) of the original image.
    acc0 = None   # even output rows (a = 0)
    acc1 = None   # odd output rows  (a = 1)
    t = 0
    for r in range(3):
        for c in range(3):
            patch = xt_ref[r:r + TH, c:c + W, :].reshape(TH * W, Cin)
            d0 = jnp.dot(patch, w_ref[0, t], preferred_element_type=jnp.float32)
            d1 = jnp.dot(patch, w_ref[1, t], preferred_element_type=jnp.float32)
            acc0 = d0 if acc0 is None else acc0 + d0
            acc1 = d1 if acc1 is None else acc1 + d1
            t += 1
    # NOTE: the conv bias is intentionally dropped - it cancels exactly in the
    # batch normalization that follows.

    # Partial batch-norm statistics (fold the two column parities together).
    s = jnp.sum(acc0, axis=0, keepdims=True) + jnp.sum(acc1, axis=0, keepdims=True)
    q = (jnp.sum(acc0 * acc0, axis=0, keepdims=True)
         + jnp.sum(acc1 * acc1, axis=0, keepdims=True))
    st_ref[0, 0, 0:1, :] = s[:, :Cout] + s[:, Cout:]
    st_ref[0, 0, 1:2, :] = q[:, :Cout] + q[:, Cout:]

    # Write the four pixel-shuffle phases (p = a*2 + b).  The spatial interleave
    # is folded into the NCHW boundary transpose done by the wrapper.
    y_ref[0, 0] = acc0[:, :Cout].reshape(TH, W, Cout)
    y_ref[0, 1] = acc0[:, Cout:].reshape(TH, W, Cout)
    y_ref[0, 2] = acc1[:, :Cout].reshape(TH, W, Cout)
    y_ref[0, 3] = acc1[:, Cout:].reshape(TH, W, Cout)


def _bn_relu_kernel(y_ref, scale_ref, shift_ref, o_ref):
    """Folded batch-norm affine + ReLU on a lane-dense (rows, W*Cout) view."""
    o_ref[...] = jnp.maximum(
        y_ref[...] * scale_ref[...] + shift_ref[...], 0.0).astype(o_ref.dtype)


@functools.partial(jax.jit, static_argnames=())
def up_conv_forward(x_nchw, weight, bias, gamma, beta, eps=1e-5):
    """Forward pass matching PyTorch up_conv in (default) training mode: BatchNorm
    uses the batch statistics of the current input.

    x_nchw : (N, Cin, H, W) float32
    weight : (Cout, Cin, 3, 3);  bias/gamma/beta : (Cout,)
    returns (N, Cout, 2H, 2W)
    """
    del bias  # exactly cancelled by the following BatchNorm (kept for API parity)

    x = jnp.transpose(x_nchw, (0, 2, 3, 1))                    # NHWC
    N, H, W, Cin = x.shape
    Cout = weight.shape[0]
    Hout, Wout = 2 * H, 2 * W

    # Zero-pad the ORIGINAL image (no 4x upsampled intermediate in HBM).
    xp = jnp.pad(x, ((0, 0), (1, 1), (1, 1), (0, 0)))          # (N, H+2, W+2, Cin)
    w_comb = _pixel_shuffle_weights(weight)                    # (2, 9, Cin, 2*Cout)

    TH = _pick_row_tile(H, W, Cin, Cout)
    nH = H // TH

    y, stats = pl.pallas_call(
        _upconv_conv_kernel,
        out_shape=(jax.ShapeDtypeStruct((N, 4, H, W, Cout), jnp.float32),
                   jax.ShapeDtypeStruct((N, nH, 2, Cout), jnp.float32)),
        grid_spec=pltpu.PrefetchScalarGridSpec(
            num_scalar_prefetch=0,
            grid=(N, nH),
            in_specs=[
                pl.BlockSpec((1, TH, W + 2, Cin),
                             lambda n, h: (n, h, 0, 0)),
                pl.BlockSpec((1, 1, W + 2, Cin),
                             lambda n, h: (n, (h + 1) * TH, 0, 0)),
                pl.BlockSpec((1, 1, W + 2, Cin),
                             lambda n, h: (n, (h + 1) * TH + 1, 0, 0)),
                pl.BlockSpec((2, 9, Cin, 2 * Cout),
                             lambda n, h: (0, 0, 0, 0)),
            ],
            out_specs=[
                pl.BlockSpec((1, 4, TH, W, Cout), lambda n, h: (n, 0, h, 0, 0)),
                pl.BlockSpec((1, 1, 2, Cout), lambda n, h: (n, h, 0, 0)),
            ],
            scratch_shapes=[pltpu.VMEM((TH + 2, W + 2, Cin), jnp.float32)],
        ),
        compiler_params=pltpu.CompilerParams(
            dimension_semantics=("parallel", "parallel"),
            vmem_limit_bytes=_VMEM_LIMIT_BYTES),
    )(xp, xp, xp, w_comb)

    # Finalize the (tiny, Cout-sized) batch statistics in plain JAX.
    # NOTE: E[x^2] - E[x]^2 form; partials were accumulated per tile in f32.
    count = float(N * Hout * Wout)
    s1 = jnp.sum(stats[:, :, 0, :], axis=(0, 1))
    s2 = jnp.sum(stats[:, :, 1, :], axis=(0, 1))
    mean = s1 / count
    var = jnp.maximum(s2 / count - mean * mean, 0.0)
    inv = gamma * jax.lax.rsqrt(var + eps)
    scale_t = jnp.tile(inv, W)[None, :]                        # (1, W*Cout)
    shift_t = jnp.tile(beta - mean * inv, W)[None, :]

    # BN + ReLU on a lane-dense 2D view; output aliased onto the conv buffer.
    R, WCb = N * 4 * H, W * Cout
    TRB = _pick_bn_rows(R, WCb)
    y2 = y.reshape(R, WCb)
    act = pl.pallas_call(
        _bn_relu_kernel,
        out_shape=jax.ShapeDtypeStruct((R, WCb), jnp.float32),
        grid_spec=pltpu.PrefetchScalarGridSpec(
            num_scalar_prefetch=0,
            grid=(R // TRB,),
            in_specs=[
                pl.BlockSpec((TRB, WCb), lambda r: (r, 0)),
                pl.BlockSpec((1, WCb), lambda r: (0, 0)),
                pl.BlockSpec((1, WCb), lambda r: (0, 0)),
            ],
            out_specs=pl.BlockSpec((TRB, WCb), lambda r: (r, 0)),
        ),
        input_output_aliases={0: 0},
        compiler_params=pltpu.CompilerParams(
            dimension_semantics=("parallel",),
            vmem_limit_bytes=_VMEM_LIMIT_BYTES),
    )(y2, scale_t, shift_t)

    # Single boundary transpose: pixel-shuffle interleave + NHWC->NCHW together.
    out = act.reshape(N, 2, 2, H, W, Cout)                     # (n, a, b, i, j, c)
    out = jnp.transpose(out, (0, 5, 3, 1, 4, 2))               # (n, c, i, a, j, b)
    return out.reshape(N, Cout, Hout, Wout)


def _reference_forward(x_nchw, weight, bias, gamma, beta, eps=1e-5):
    """Pure-JAX reference (XLA conv) for a correctness check."""
    x = jnp.transpose(x_nchw, (0, 2, 3, 1))
    xu = jnp.repeat(jnp.repeat(x, 2, axis=1), 2, axis=2)
    w_hwio = jnp.transpose(weight, (2, 3, 1, 0))
    conv = jax.lax.conv_general_dilated(
        xu, w_hwio, window_strides=(1, 1), padding=((1, 1), (1, 1)),
        dimension_numbers=("NHWC", "HWIO", "NHWC")) + bias
    mean = jnp.mean(conv, axis=(0, 1, 2))
    var = jnp.mean(jnp.square(conv - mean), axis=(0, 1, 2))
    y = (conv - mean) / jnp.sqrt(var + eps) * gamma + beta
    y = jnp.maximum(y, 0.0)
    return jnp.transpose(y, (0, 3, 1, 2))


if __name__ == "__main__":
    # Small shapes consistent with the module: N=2, ch_in=4, ch_out=8, 16x16 input.
    N, ch_in, ch_out, H, W = 2, 4, 8, 16, 16

    key = jax.random.PRNGKey(0)
    kx, kw, kb = jax.random.split(key, 3)

    fan_in = ch_in * 3 * 3
    bound = 1.0 / np.sqrt(fan_in)
    weight = jax.random.uniform(kw, (ch_out, ch_in, 3, 3), jnp.float32, -bound, bound)
    bias = jax.random.uniform(kb, (ch_out,), jnp.float32, -bound, bound)
    gamma = jnp.ones((ch_out,), jnp.float32)
    beta = jnp.zeros((ch_out,), jnp.float32)

    x = jax.random.normal(kx, (N, ch_in, H, W), jnp.float32)

    out = jax.block_until_ready(up_conv_forward(x, weight, bias, gamma, beta))
    assert out.shape == (N, ch_out, 2 * H, 2 * W)

    ref = jax.block_until_ready(_reference_forward(x, weight, bias, gamma, beta))
    np.testing.assert_allclose(np.asarray(out), np.asarray(ref), rtol=1e-4, atol=1e-4)

    print("KERNEL_OK")
</pallas_src>

<mosaic_0001>
module attributes {stable_mosaic.version = 11 : i64} {
  func.func @_upconv_conv_kernel(%arg0: i32, %arg1: i32, %arg2: memref<1x8x18x4xf32, #tpu.memory_space<vmem>>, %arg3: memref<1x1x18x4xf32, #tpu.memory_space<vmem>>, %arg4: memref<1x1x18x4xf32, #tpu.memory_space<vmem>>, %arg5: memref<2x9x4x16xf32, #tpu.memory_space<vmem>>, %arg6: memref<1x4x8x16x8xf32, #tpu.memory_space<vmem>>, %arg7: memref<1x1x2x8xf32, #tpu.memory_space<vmem>>, %arg8: memref<10x18x4xf32, #tpu.memory_space<vmem>>) attributes {dimension_semantics = [#tpu.dimension_semantics<parallel>, #tpu.dimension_semantics<parallel>], iteration_bounds = array<i64: 2, 2>, scalar_prefetch = 0 : i64, scratch_operands = 1 : i64, tpu.core_type = #tpu.core_type<tc>, window_params = [{transform_indices = @transform_0, window_bounds = array<i64: 1, 8, 18, 4>}, {transform_indices = @transform_1, window_bounds = array<i64: 1, 1, 18, 4>}, {transform_indices = @transform_2, window_bounds = array<i64: 1, 1, 18, 4>}, {pipeline_mode = #tpu.pipeline_mode<synchronous>, transform_indices = @transform_3, window_bounds = array<i64: 2, 9, 4, 16>}, {transform_indices = @transform_4, window_bounds = array<i64: 1, 4, 8, 16, 8>}, {transform_indices = @transform_5, window_bounds = array<i64: 1, 1, 2, 8>}]} {
    %c0 = arith.constant 0 : index
    %c0_0 = arith.constant 0 : index
    %c0_1 = arith.constant 0 : index
    %c0_2 = arith.constant 0 : index
    %0 = vector.load %arg2[%c0, %c0_0, %c0_1, %c0_2] : memref<1x8x18x4xf32, #tpu.memory_space<vmem>>, vector<1x8x18x4xf32>
    %1 = vector.shape_cast %0 : vector<1x8x18x4xf32> to vector<8x18x4xf32>
    %c0_3 = arith.constant 0 : index
    %c0_4 = arith.constant 0 : index
    %c0_5 = arith.constant 0 : index
    %2 = vector.load %arg8[%c0_3, %c0_4, %c0_5] : memref<10x18x4xf32, #tpu.memory_space<vmem>>, vector<8x18x4xf32>
    tpu.vector_store %arg8[%c0_3, %c0_4, %c0_5], %1 {strides = array<i32>} : memref<10x18x4xf32, #tpu.memory_space<vmem>>, vector<8x18x4xf32>,
    %c0_6 = arith.constant 0 : index
    %c0_7 = arith.constant 0 : index
    %c0_8 = arith.constant 0 : index
    %c0_9 = arith.constant 0 : index
    %3 = vector.load %arg3[%c0_6, %c0_7, %c0_8, %c0_9] : memref<1x1x18x4xf32, #tpu.memory_space<vmem>>, vector<1x1x18x4xf32>
    %4 = vector.shape_cast %3 : vector<1x1x18x4xf32> to vector<1x18x4xf32>
    %c8 = arith.constant 8 : index
    %c0_10 = arith.constant 0 : index
    %c0_11 = arith.constant 0 : index
    %5 = vector.load %arg8[%c8, %c0_10, %c0_11] : memref<10x18x4xf32, #tpu.memory_space<vmem>>, vector<1x18x4xf32>
    tpu.vector_store %arg8[%c8, %c0_10, %c0_11], %4 {strides = array<i32>} : memref<10x18x4xf32, #tpu.memory_space<vmem>>, vector<1x18x4xf32>,
    %c0_12 = arith.constant 0 : index
    %c0_13 = arith.constant 0 : index
    %c0_14 = arith.constant 0 : index
    %c0_15 = arith.constant 0 : index
    %6 = vector.load %arg4[%c0_12, %c0_13, %c0_14, %c0_15] : memref<1x1x18x4xf32, #tpu.memory_space<vmem>>, vector<1x1x18x4xf32>
    %7 = vector.shape_cast %6 : vector<1x1x18x4xf32> to vector<1x18x4xf32>
    %c9 = arith.constant 9 : index
    %c0_16 = arith.constant 0 : index
    %c0_17 = arith.constant 0 : index
    %8 = vector.load %arg8[%c9, %c0_16, %c0_17] : memref<10x18x4xf32, #tpu.memory_space<vmem>>, vector<1x18x4xf32>
    tpu.vector_store %arg8[%c9, %c0_16, %c0_17], %7 {strides = array<i32>} : memref<10x18x4xf32, #tpu.memory_space<vmem>>, vector<1x18x4xf32>,
    %c0_18 = arith.constant 0 : index
    %c0_19 = arith.constant 0 : index
    %c0_20 = arith.constant 0 : index
    %9 = vector.load %arg8[%c0_18, %c0_19, %c0_20] : memref<10x18x4xf32, #tpu.memory_space<vmem>>, vector<8x16x4xf32>
    %10 = vector.shape_cast %9 : vector<8x16x4xf32> to vector<128x4xf32>
    %c0_21 = arith.constant 0 : index
    %c0_22 = arith.constant 0 : index
    %c0_23 = arith.constant 0 : index
    %c0_24 = arith.constant 0 : index
    %11 = vector.load %arg5[%c0_21, %c0_22, %c0_23, %c0_24] : memref<2x9x4x16xf32, #tpu.memory_space<vmem>>, vector<1x1x4x16xf32>
    %12 = vector.shape_cast %11 : vector<1x1x4x16xf32> to vector<4x16xf32>
    %cst = arith.constant dense<0.000000e+00> : vector<128x16xf32>
    %13 = tpu.matmul %10, %12, %cst {dimension_numbers = #tpu.dot_dimension_numbers<[1], [0], [0], [1], [0, 0, 1, 1], [], []>} : vector<128x4xf32>, vector<4x16xf32>, vector<128x16xf32> -> vector<128x16xf32>
    %c1 = arith.constant 1 : index
    %c0_25 = arith.constant 0 : index
    %c0_26 = arith.constant 0 : index
    %c0_27 = arith.constant 0 : index
    %14 = vector.load %arg5[%c1, %c0_25, %c0_26, %c0_27] : memref<2x9x4x16xf32, #tpu.memory_space<vmem>>, vector<1x1x4x16xf32>
    %15 = vector.shape_cast %14 : vector<1x1x4x16xf32> to vector<4x16xf32>
    %cst_28 = arith.constant dense<0.000000e+00> : vector<128x16xf32>
    %16 = tpu.matmul %10, %15, %cst_28 {dimension_numbers = #tpu.dot_dimension_numbers<[1], [0], [0], [1], [0, 0, 1, 1], [], []>} : vector<128x4xf32>, vector<4x16xf32>, vector<128x16xf32> -> vector<128x16xf32>
    %c0_29 = arith.constant 0 : index
    %c1_30 = arith.constant 1 : index
    %c0_31 = arith.constant 0 : index
    %17 = vector.load %arg8[%c0_29, %c1_30, %c0_31] : memref<10x18x4xf32, #tpu.memory_space<vmem>>, vector<8x16x4xf32>
    %18 = vector.shape_cast %17 : vector<8x16x4xf32> to vector<128x4xf32>
    %c0_32 = arith.constant 0 : index
    %c1_33 = arith.constant 1 : index
    %c0_34 = arith.constant 0 : index
    %c0_35 = arith.constant 0 : index
    %19 = vector.load %arg5[%c0_32, %c1_33, %c0_34, %c0_35] : memref<2x9x4x16xf32, #tpu.memory_space<vmem>>, vector<1x1x4x16xf32>
    %20 = vector.shape_cast %19 : vector<1x1x4x16xf32> to vector<4x16xf32>
    %cst_36 = arith.constant dense<0.000000e+00> : vector<128x16xf32>
    %21 = tpu.matmul %18, %20, %cst_36 {dimension_numbers = #tpu.dot_dimension_numbers<[1], [0], [0], [1], [0, 0, 1, 1], [], []>} : vector<128x4xf32>, vector<4x16xf32>, vector<128x16xf32> -> vector<128x16xf32>
    %c1_37 = arith.constant 1 : index
    %c1_38 = arith.constant 1 : index
    %c0_39 = arith.constant 0 : index
    %c0_40 = arith.constant 0 : index
    %22 = vector.load %arg5[%c1_37, %c1_38, %c0_39, %c0_40] : memref<2x9x4x16xf32, #tpu.memory_space<vmem>>, vector<1x1x4x16xf32>
    %23 = vector.shape_cast %22 : vector<1x1x4x16xf32> to vector<4x16xf32>
    %cst_41 = arith.constant dense<0.000000e+00> : vector<128x16xf32>
    %24 = tpu.matmul %18, %23, %cst_41 {dimension_numbers = #tpu.dot_dimension_numbers<[1], [0], [0], [1], [0, 0, 1, 1], [], []>} : vector<128x4xf32>, vector<4x16xf32>, vector<128x16xf32> -> vector<128x16xf32>
    %25 = arith.addf %13, %21 : vector<128x16xf32>
    %26 = arith.addf %16, %24 : vector<128x16xf32>
    %c0_42 = arith.constant 0 : index
    %c2 = arith.constant 2 : index
    %c0_43 = arith.constant 0 : index
    %27 = vector.load %arg8[%c0_42, %c2, %c0_43] : memref<10x18x4xf32, #tpu.memory_space<vmem>>, vector<8x16x4xf32>
    %28 = vector.shape_cast %27 : vector<8x16x4xf32> to vector<128x4xf32>
    %c0_44 = arith.constant 0 : index
    %c2_45 = arith.constant 2 : index
    %c0_46 = arith.constant 0 : index
    %c0_47 = arith.constant 0 : index
    %29 = vector.load %arg5[%c0_44, %c2_45, %c0_46, %c0_47] : memref<2x9x4x16xf32, #tpu.memory_space<vmem>>, vector<1x1x4x16xf32>
    %30 = vector.shape_cast %29 : vector<1x1x4x16xf32> to vector<4x16xf32>
    %cst_48 = arith.constant dense<0.000000e+00> : vector<128x16xf32>
    %31 = tpu.matmul %28, %30, %cst_48 {dimension_numbers = #tpu.dot_dimension_numbers<[1], [0], [0], [1], [0, 0, 1, 1], [], []>} : vector<128x4xf32>, vector<4x16xf32>, vector<128x16xf32> -> vector<128x16xf32>
    %c1_49 = arith.constant 1 : index
    %c2_50 = arith.constant 2 : index
    %c0_51 = arith.constant 0 : index
    %c0_52 = arith.constant 0 : index
    %32 = vector.load %arg5[%c1_49, %c2_50, %c0_51, %c0_52] : memref<2x9x4x16xf32, #tpu.memory_space<vmem>>, vector<1x1x4x16xf32>
    %33 = vector.shape_cast %32 : vector<1x1x4x16xf32> to vector<4x16xf32>
    %cst_53 = arith.constant dense<0.000000e+00> : vector<128x16xf32>
    %34 = tpu.matmul %28, %33, %cst_53 {dimension_numbers = #tpu.dot_dimension_numbers<[1], [0], [0], [1], [0, 0, 1, 1], [], []>} : vector<128x4xf32>, vector<4x16xf32>, vector<128x16xf32> -> vector<128x16xf32>
    %35 = arith.addf %25, %31 : vector<128x16xf32>
    %36 = arith.addf %26, %34 : vector<128x16xf32>
    %c1_54 = arith.constant 1 : index
    %c0_55 = arith.constant 0 : index
    %c0_56 = arith.constant 0 : index
    %37 = vector.load %arg8[%c1_54, %c0_55, %c0_56] : memref<10x18x4xf32, #tpu.memory_space<vmem>>, vector<8x16x4xf32>
    %38 = vector.shape_cast %37 : vector<8x16x4xf32> to vector<128x4xf32>
    %c0_57 = arith.constant 0 : index
    %c3 = arith.constant 3 : index
    %c0_58 = arith.constant 0 : index
    %c0_59 = arith.constant 0 : index
    %39 = vector.load %arg5[%c0_57, %c3, %c0_58, %c0_59] : memref<2x9x4x16xf32, #tpu.memory_space<vmem>>, vector<1x1x4x16xf32>
    %40 = vector.shape_cast %39 : vector<1x1x4x16xf32> to vector<4x16xf32>
    %cst_60 = arith.constant dense<0.000000e+00> : vector<128x16xf32>
    %41 = tpu.matmul %38, %40, %cst_60 {dimension_numbers = #tpu.dot_dimension_numbers<[1], [0], [0], [1], [0, 0, 1, 1], [], []>} : vector<128x4xf32>, vector<4x16xf32>, vector<128x16xf32> -> vector<128x16xf32>
    %c1_61 = arith.constant 1 : index
    %c3_62 = arith.constant 3 : index
    %c0_63 = arith.constant 0 : index
    %c0_64 = arith.constant 0 : index
    %42 = vector.load %arg5[%c1_61, %c3_62, %c0_63, %c0_64] : memref<2x9x4x16xf32, #tpu.memory_space<vmem>>, vector<1x1x4x16xf32>
    %43 = vector.shape_cast %42 : vector<1x1x4x16xf32> to vector<4x16xf32>
    %cst_65 = arith.constant dense<0.000000e+00> : vector<128x16xf32>
    %44 = tpu.matmul %38, %43, %cst_65 {dimension_numbers = #tpu.dot_dimension_numbers<[1], [0], [0], [1], [0, 0, 1, 1], [], []>} : vector<128x4xf32>, vector<4x16xf32>, vector<128x16xf32> -> vector<128x16xf32>
    %45 = arith.addf %35, %41 : vector<128x16xf32>
    %46 = arith.addf %36, %44 : vector<128x16xf32>
    %c1_66 = arith.constant 1 : index
    %c1_67 = arith.constant 1 : index
    %c0_68 = arith.constant 0 : index
    %47 = vector.load %arg8[%c1_66, %c1_67, %c0_68] : memref<10x18x4xf32, #tpu.memory_space<vmem>>, vector<8x16x4xf32>
    %48 = vector.shape_cast %47 : vector<8x16x4xf32> to vector<128x4xf32>
    %c0_69 = arith.constant 0 : index
    %c4 = arith.constant 4 : index
    %c0_70 = arith.constant 0 : index
    %c0_71 = arith.constant 0 : index
    %49 = vector.load %arg5[%c0_69, %c4, %c0_70, %c0_71] : memref<2x9x4x16xf32, #tpu.memory_space<vmem>>, vector<1x1x4x16xf32>
    %50 = vector.shape_cast %49 : vector<1x1x4x16xf32> to vector<4x16xf32>
    %cst_72 = arith.constant dense<0.000000e+00> : vector<128x16xf32>
    %51 = tpu.matmul %48, %50, %cst_72 {dimension_numbers = #tpu.dot_dimension_numbers<[1], [0], [0], [1], [0, 0, 1, 1], [], []>} : vector<128x4xf32>, vector<4x16xf32>, vector<128x16xf32> -> vector<128x16xf32>
    %c1_73 = arith.constant 1 : index
    %c4_74 = arith.constant 4 : index
    %c0_75 = arith.constant 0 : index
    %c0_76 = arith.constant 0 : index
    %52 = vector.load %arg5[%c1_73, %c4_74, %c0_75, %c0_76] : memref<2x9x4x16xf32, #tpu.memory_space<vmem>>, vector<1x1x4x16xf32>
    %53 = vector.shape_cast %52 : vector<1x1x4x16xf32> to vector<4x16xf32>
    %cst_77 = arith.constant dense<0.000000e+00> : vector<128x16xf32>
    %54 = tpu.matmul %48, %53, %cst_77 {dimension_numbers = #tpu.dot_dimension_numbers<[1], [0], [0], [1], [0, 0, 1, 1], [], []>} : vector<128x4xf32>, vector<4x16xf32>, vector<128x16xf32> -> vector<128x16xf32>
    %55 = arith.addf %45, %51 : vector<128x16xf32>
    %56 = arith.addf %46, %54 : vector<128x16xf32>
    %c1_78 = arith.constant 1 : index
    %c2_79 = arith.constant 2 : index
    %c0_80 = arith.constant 0 : index
    %57 = vector.load %arg8[%c1_78, %c2_79, %c0_80] : memref<10x18x4xf32, #tpu.memory_space<vmem>>, vector<8x16x4xf32>
    %58 = vector.shape_cast %57 : vector<8x16x4xf32> to vector<128x4xf32>
    %c0_81 = arith.constant 0 : index
    %c5 = arith.constant 5 : index
    %c0_82 = arith.constant 0 : index
    %c0_83 = arith.constant 0 : index
    %59 = vector.load %arg5[%c0_81, %c5, %c0_82, %c0_83] : memref<2x9x4x16xf32, #tpu.memory_space<vmem>>, vector<1x1x4x16xf32>
    %60 = vector.shape_cast %59 : vector<1x1x4x16xf32> to vector<4x16xf32>
    %cst_84 = arith.constant dense<0.000000e+00> : vector<128x16xf32>
    %61 = tpu.matmul %58, %60, %cst_84 {dimension_numbers = #tpu.dot_dimension_numbers<[1], [0], [0], [1], [0, 0, 1, 1], [], []>} : vector<128x4xf32>, vector<4x16xf32>, vector<128x16xf32> -> vector<128x16xf32>
    %c1_85 = arith.constant 1 : index
    %c5_86 = arith.constant 5 : index
    %c0_87 = arith.constant 0 : index
    %c0_88 = arith.constant 0 : index
    %62 = vector.load %arg5[%c1_85, %c5_86, %c0_87, %c0_88] : memref<2x9x4x16xf32, #tpu.memory_space<vmem>>, vector<1x1x4x16xf32>
    %63 = vector.shape_cast %62 : vector<1x1x4x16xf32> to vector<4x16xf32>
    %cst_89 = arith.constant dense<0.000000e+00> : vector<128x16xf32>
    %64 = tpu.matmul %58, %63, %cst_89 {dimension_numbers = #tpu.dot_dimension_numbers<[1], [0], [0], [1], [0, 0, 1, 1], [], []>} : vector<128x4xf32>, vector<4x16xf32>, vector<128x16xf32> -> vector<128x16xf32>
    %65 = arith.addf %55, %61 : vector<128x16xf32>
    %66 = arith.addf %56, %64 : vector<128x16xf32>
    %c2_90 = arith.constant 2 : index
    %c0_91 = arith.constant 0 : index
    %c0_92 = arith.constant 0 : index
    %67 = vector.load %arg8[%c2_90, %c0_91, %c0_92] : memref<10x18x4xf32, #tpu.memory_space<vmem>>, vector<8x16x4xf32>
    %68 = vector.shape_cast %67 : vector<8x16x4xf32> to vector<128x4xf32>
    %c0_93 = arith.constant 0 : index
    %c6 = arith.constant 6 : index
    %c0_94 = arith.constant 0 : index
    %c0_95 = arith.constant 0 : index
    %69 = vector.load %arg5[%c0_93, %c6, %c0_94, %c0_95] : memref<2x9x4x16xf32, #tpu.memory_space<vmem>>, vector<1x1x4x16xf32>
    %70 = vector.shape_cast %69 : vector<1x1x4x16xf32> to vector<4x16xf32>
    %cst_96 = arith.constant dense<0.000000e+00> : vector<128x16xf32>
    %71 = tpu.matmul %68, %70, %cst_96 {dimension_numbers = #tpu.dot_dimension_numbers<[1], [0], [0], [1], [0, 0, 1, 1], [], []>} : vector<128x4xf32>, vector<4x16xf32>, vector<128x16xf32> -> vector<128x16xf32>
    %c1_97 = arith.constant 1 : index
    %c6_98 = arith.constant 6 : index
    %c0_99 = arith.constant 0 : index
    %c0_100 = arith.constant 0 : index
    %72 = vector.load %arg5[%c1_97, %c6_98, %c0_99, %c0_100] : memref<2x9x4x16xf32, #tpu.memory_space<vmem>>, vector<1x1x4x16xf32>
    %73 = vector.shape_cast %72 : vector<1x1x4x16xf32> to vector<4x16xf32>
    %cst_101 = arith.constant dense<0.000000e+00> : vector<128x16xf32>
    %74 = tpu.matmul %68, %73, %cst_101 {dimension_numbers = #tpu.dot_dimension_numbers<[1], [0], [0], [1], [0, 0, 1, 1], [], []>} : vector<128x4xf32>, vector<4x16xf32>, vector<128x16xf32> -> vector<128x16xf32>
    %75 = arith.addf %65, %71 : vector<128x16xf32>
    %76 = arith.addf %66, %74 : vector<128x16xf32>
    %c2_102 = arith.constant 2 : index
    %c1_103 = arith.constant 1 : index
    %c0_104 = arith.constant 0 : index
    %77 = vector.load %arg8[%c2_102, %c1_103, %c0_104] : memref<10x18x4xf32, #tpu.memory_space<vmem>>, vector<8x16x4xf32>
    %78 = vector.shape_cast %77 : vector<8x16x4xf32> to vector<128x4xf32>
    %c0_105 = arith.constant 0 : index
    %c7 = arith.constant 7 : index
    %c0_106 = arith.constant 0 : index
    %c0_107 = arith.constant 0 : index
    %79 = vector.load %arg5[%c0_105, %c7, %c0_106, %c0_107] : memref<2x9x4x16xf32, #tpu.memory_space<vmem>>, vector<1x1x4x16xf32>
    %80 = vector.shape_cast %79 : vector<1x1x4x16xf32> to vector<4x16xf32>
    %cst_108 = arith.constant dense<0.000000e+00> : vector<128x16xf32>
    %81 = tpu.matmul %78, %80, %cst_108 {dimension_numbers = #tpu.dot_dimension_numbers<[1], [0], [0], [1], [0, 0, 1, 1], [], []>} : vector<128x4xf32>, vector<4x16xf32>, vector<128x16xf32> -> vector<128x16xf32>
    %c1_109 = arith.constant 1 : index
    %c7_110 = arith.constant 7 : index
    %c0_111 = arith.constant 0 : index
    %c0_112 = arith.constant 0 : index
    %82 = vector.load %arg5[%c1_109, %c7_110, %c0_111, %c0_112] : memref<2x9x4x16xf32, #tpu.memory_space<vmem>>, vector<1x1x4x16xf32>
    %83 = vector.shape_cast %82 : vector<1x1x4x16xf32> to vector<4x16xf32>
    %cst_113 = arith.constant dense<0.000000e+00> : vector<128x16xf32>
    %84 = tpu.matmul %78, %83, %cst_113 {dimension_numbers = #tpu.dot_dimension_numbers<[1], [0], [0], [1], [0, 0, 1, 1], [], []>} : vector<128x4xf32>, vector<4x16xf32>, vector<128x16xf32> -> vector<128x16xf32>
    %85 = arith.addf %75, %81 : vector<128x16xf32>
    %86 = arith.addf %76, %84 : vector<128x16xf32>
    %c2_114 = arith.constant 2 : index
    %c2_115 = arith.constant 2 : index
    %c0_116 = arith.constant 0 : index
    %87 = vector.load %arg8[%c2_114, %c2_115, %c0_116] : memref<10x18x4xf32, #tpu.memory_space<vmem>>, vector<8x16x4xf32>
    %88 = vector.shape_cast %87 : vector<8x16x4xf32> to vector<128x4xf32>
    %c0_117 = arith.constant 0 : index
    %c8_118 = arith.constant 8 : index
    %c0_119 = arith.constant 0 : index
    %c0_120 = arith.constant 0 : index
    %89 = vector.load %arg5[%c0_117, %c8_118, %c0_119, %c0_120] : memref<2x9x4x16xf32, #tpu.memory_space<vmem>>, vector<1x1x4x16xf32>
    %90 = vector.shape_cast %89 : vector<1x1x4x16xf32> to vector<4x16xf32>
    %cst_121 = arith.constant dense<0.000000e+00> : vector<128x16xf32>
    %91 = tpu.matmul %88, %90, %cst_121 {dimension_numbers = #tpu.dot_dimension_numbers<[1], [0], [0], [1], [0, 0, 1, 1], [], []>} : vector<128x4xf32>, vector<4x16xf32>, vector<128x16xf32> -> vector<128x16xf32>
    %c1_122 = arith.constant 1 : index
    %c8_123 = arith.constant 8 : index
    %c0_124 = arith.constant 0 : index
    %c0_125 = arith.constant 0 : index
    %92 = vector.load %arg5[%c1_122, %c8_123, %c0_124, %c0_125] : memref<2x9x4x16xf32, #tpu.memory_space<vmem>>, vector<1x1x4x16xf32>
    %93 = vector.shape_cast %92 : vector<1x1x4x16xf32> to vector<4x16xf32>
    %cst_126 = arith.constant dense<0.000000e+00> : vector<128x16xf32>
    %94 = tpu.matmul %88, %93, %cst_126 {dimension_numbers = #tpu.dot_dimension_numbers<[1], [0], [0], [1], [0, 0, 1, 1], [], []>} : vector<128x4xf32>, vector<4x16xf32>, vector<128x16xf32> -> vector<128x16xf32>
    %95 = arith.addf %85, %91 : vector<128x16xf32>
    %96 = arith.addf %86, %94 : vector<128x16xf32>
    %cst_127 = arith.constant dense<0.000000e+00> : vector<16xf32>
    %97 = vector.multi_reduction <add>, %95, %cst_127 [0] : vector<128x16xf32> to vector<16xf32>
    %98 = vector.shape_cast %97 : vector<16xf32> to vector<1x16xf32>
    %cst_128 = arith.constant dense<0.000000e+00> : vector<16xf32>
    %99 = vector.multi_reduction <add>, %96, %cst_128 [0] : vector<128x16xf32> to vector<16xf32>
    %100 = vector.shape_cast %99 : vector<16xf32> to vector<1x16xf32>
    %101 = arith.addf %98, %100 : vector<1x16xf32>
    %102 = arith.mulf %95, %95 : vector<128x16xf32>
    %cst_129 = arith.constant dense<0.000000e+00> : vector<16xf32>
    %103 = vector.multi_reduction <add>, %102, %cst_129 [0] : vector<128x16xf32> to vector<16xf32>
    %104 = vector.shape_cast %103 : vector<16xf32> to vector<1x16xf32>
    %105 = arith.mulf %96, %96 : vector<128x16xf32>
    %cst_130 = arith.constant dense<0.000000e+00> : vector<16xf32>
    %106 = vector.multi_reduction <add>, %105, %cst_130 [0] : vector<128x16xf32> to vector<16xf32>
    %107 = vector.shape_cast %106 : vector<16xf32> to vector<1x16xf32>
    %108 = arith.addf %104, %107 : vector<1x16xf32>
    %109 = vector.extract_strided_slice %101 {offsets = [0, 0], sizes = [1, 8], strides = [1, 1]} : vector<1x16xf32> to vector<1x8xf32>
    %110 = vector.extract_strided_slice %101 {offsets = [0, 8], sizes = [1, 8], strides = [1, 1]} : vector<1x16xf32> to vector<1x8xf32>
    %111 = arith.addf %109, %110 : vector<1x8xf32>
    %c0_131 = arith.constant 0 : index
    %c0_132 = arith.constant 0 : index
    %c0_133 = arith.constant 0 : index
    %c0_134 = arith.constant 0 : index
    %112 = vector.load %arg7[%c0_131, %c0_132, %c0_133, %c0_134] : memref<1x1x2x8xf32, #tpu.memory_space<vmem>>, vector<1x1x1x8xf32>
    %113 = vector.shape_cast %112 : vector<1x1x1x8xf32> to vector<1x8xf32>
    %114 = vector.shape_cast %111 : vector<1x8xf32> to vector<1x1x1x8xf32>
    tpu.vector_store %arg7[%c0_131, %c0_132, %c0_133, %c0_134], %114 {strides = array<i32>} : memref<1x1x2x8xf32, #tpu.memory_space<vmem>>, vector<1x1x1x8xf32>,
    %115 = vector.extract_strided_slice %108 {offsets = [0, 0], sizes = [1, 8], strides = [1, 1]} : vector<1x16xf32> to vector<1x8xf32>
    %116 = vector.extract_strided_slice %108 {offsets = [0, 8], sizes = [1, 8], strides = [1, 1]} : vector<1x16xf32> to vector<1x8xf32>
    %117 = arith.addf %115, %116 : vector<1x8xf32>
    %c0_135 = arith.constant 0 : index
    %c0_136 = arith.constant 0 : index
    %c1_137 = arith.constant 1 : index
    %c0_138 = arith.constant 0 : index
    %118 = vector.load %arg7[%c0_135, %c0_136, %c1_137, %c0_138] : memref<1x1x2x8xf32, #tpu.memory_space<vmem>>, vector<1x1x1x8xf32>
    %119 = vector.shape_cast %118 : vector<1x1x1x8xf32> to vector<1x8xf32>
    %120 = vector.shape_cast %117 : vector<1x8xf32> to vector<1x1x1x8xf32>
    tpu.vector_store %arg7[%c0_135, %c0_136, %c1_137, %c0_138], %120 {strides = array<i32>} : memref<1x1x2x8xf32, #tpu.memory_space<vmem>>, vector<1x1x1x8xf32>,
    %121 = vector.extract_strided_slice %95 {offsets = [0, 0], sizes = [128, 8], strides = [1, 1]} : vector<128x16xf32> to vector<128x8xf32>
    %122 = vector.shape_cast %121 : vector<128x8xf32> to vector<8x16x8xf32>
    %c0_139 = arith.constant 0 : index
    %c0_140 = arith.constant 0 : index
    %c0_141 = arith.constant 0 : index
    %c0_142 = arith.constant 0 : index
    %c0_143 = arith.constant 0 : index
    %123 = vector.load %arg6[%c0_139, %c0_140, %c0_141, %c0_142, %c0_143] : memref<1x4x8x16x8xf32, #tpu.memory_space<vmem>>, vector<1x1x8x16x8xf32>
    %124 = vector.shape_cast %123 : vector<1x1x8x16x8xf32> to vector<8x16x8xf32>
    %125 = vector.shape_cast %122 : vector<8x16x8xf32> to vector<1x1x8x16x8xf32>
    tpu.vector_store %arg6[%c0_139, %c0_140, %c0_141, %c0_142, %c0_143], %125 {strides = array<i32>} : memref<1x4x8x16x8xf32, #tpu.memory_space<vmem>>, vector<1x1x8x16x8xf32>,
    %126 = vector.extract_strided_slice %95 {offsets = [0, 8], sizes = [128, 8], strides = [1, 1]} : vector<128x16xf32> to vector<128x8xf32>
    %127 = vector.shape_cast %126 : vector<128x8xf32> to vector<8x16x8xf32>
    %c0_144 = arith.constant 0 : index
    %c1_145 = arith.constant 1 : index
    %c0_146 = arith.constant 0 : index
    %c0_147 = arith.constant 0 : index
    %c0_148 = arith.constant 0 : index
    %128 = vector.load %arg6[%c0_144, %c1_145, %c0_146, %c0_147, %c0_148] : memref<1x4x8x16x8xf32, #tpu.memory_space<vmem>>, vector<1x1x8x16x8xf32>
    %129 = vector.shape_cast %128 : vector<1x1x8x16x8xf32> to vector<8x16x8xf32>
    %130 = vector.shape_cast %127 : vector<8x16x8xf32> to vector<1x1x8x16x8xf32>
    tpu.vector_store %arg6[%c0_144, %c1_145, %c0_146, %c0_147, %c0_148], %130 {strides = array<i32>} : memref<1x4x8x16x8xf32, #tpu.memory_space<vmem>>, vector<1x1x8x16x8xf32>,
    %131 = vector.extract_strided_slice %96 {offsets = [0, 0], sizes = [128, 8], strides = [1, 1]} : vector<128x16xf32> to vector<128x8xf32>
    %132 = vector.shape_cast %131 : vector<128x8xf32> to vector<8x16x8xf32>
    %c0_149 = arith.constant 0 : index
    %c2_150 = arith.constant 2 : index
    %c0_151 = arith.constant 0 : index
    %c0_152 = arith.constant 0 : index
    %c0_153 = arith.constant 0 : index
    %133 = vector.load %arg6[%c0_149, %c2_150, %c0_151, %c0_152, %c0_153] : memref<1x4x8x16x8xf32, #tpu.memory_space<vmem>>, vector<1x1x8x16x8xf32>
    %134 = vector.shape_cast %133 : vector<1x1x8x16x8xf32> to vector<8x16x8xf32>
    %135 = vector.shape_cast %132 : vector<8x16x8xf32> to vector<1x1x8x16x8xf32>
    tpu.vector_store %arg6[%c0_149, %c2_150, %c0_151, %c0_152, %c0_153], %135 {strides = array<i32>} : memref<1x4x8x16x8xf32, #tpu.memory_space<vmem>>, vector<1x1x8x16x8xf32>,
    %136 = vector.extract_strided_slice %96 {offsets = [0, 8], sizes = [128, 8], strides = [1, 1]} : vector<128x16xf32> to vector<128x8xf32>
    %137 = vector.shape_cast %136 : vector<128x8xf32> to vector<8x16x8xf32>
    %c0_154 = arith.constant 0 : index
    %c3_155 = arith.constant 3 : index
    %c0_156 = arith.constant 0 : index
    %c0_157 = arith.constant 0 : index
    %c0_158 = arith.constant 0 : index
    %138 = vector.load %arg6[%c0_154, %c3_155, %c0_156, %c0_157, %c0_158] : memref<1x4x8x16x8xf32, #tpu.memory_space<vmem>>, vector<1x1x8x16x8xf32>
    %139 = vector.shape_cast %138 : vector<1x1x8x16x8xf32> to vector<8x16x8xf32>
    %140 = vector.shape_cast %137 : vector<8x16x8xf32> to vector<1x1x8x16x8xf32>
    tpu.vector_store %arg6[%c0_154, %c3_155, %c0_156, %c0_157, %c0_158], %140 {strides = array<i32>} : memref<1x4x8x16x8xf32, #tpu.memory_space<vmem>>, vector<1x1x8x16x8xf32>,
    return
  }
  func.func @transform_0(%arg0: i32, %arg1: i32) -> (i32, i32, i32, i32) {
    %c0_i32 = arith.constant 0 : i32
    %c0_i32_0 = arith.constant 0 : i32
    %c0_i32_1 = arith.constant 0 : i32
    return %arg0, %arg1, %c0_i32, %c0_i32_0 : i32, i32, i32, i32
  }
  func.func @transform_1(%arg0: i32, %arg1: i32) -> (i32, i32, i32, i32) {
    %c1_i32 = arith.constant 1 : i32
    %0 = arith.addi %arg1, %c1_i32 : i32
    %c8_i32 = arith.constant 8 : i32
    %1 = arith.muli %0, %c8_i32 : i32
    %c0_i32 = arith.constant 0 : i32
    %c0_i32_0 = arith.constant 0 : i32
    %c0_i32_1 = arith.constant 0 : i32
    return %arg0, %1, %c0_i32, %c0_i32_0 : i32, i32, i32, i32
  }
  func.func @transform_2(%arg0: i32, %arg1: i32) -> (i32, i32, i32, i32) {
    %c1_i32 = arith.constant 1 : i32
    %0 = arith.addi %arg1, %c1_i32 : i32
    %c8_i32 = arith.constant 8 : i32
    %1 = arith.muli %0, %c8_i32 : i32
    %c1_i32_0 = arith.constant 1 : i32
    %2 = arith.addi %1, %c1_i32_0 : i32
    %c0_i32 = arith.constant 0 : i32
    %c0_i32_1 = arith.constant 0 : i32
    %c0_i32_2 = arith.constant 0 : i32
    return %arg0, %2, %c0_i32, %c0_i32_1 : i32, i32, i32, i32
  }
  func.func @transform_3(%arg0: i32, %arg1: i32) -> (i32, i32, i32, i32) {
    %c0_i32 = arith.constant 0 : i32
    %c0_i32_0 = arith.constant 0 : i32
    %c0_i32_1 = arith.constant 0 : i32
    %c0_i32_2 = arith.constant 0 : i32
    %c0_i32_3 = arith.constant 0 : i32
    return %c0_i32, %c0_i32_0, %c0_i32_1, %c0_i32_2 : i32, i32, i32, i32
  }
  func.func @transform_4(%arg0: i32, %arg1: i32) -> (i32, i32, i32, i32, i32) {
    %c0_i32 = arith.constant 0 : i32
    %c0_i32_0 = arith.constant 0 : i32
    %c0_i32_1 = arith.constant 0 : i32
    %c0_i32_2 = arith.constant 0 : i32
    return %arg0, %c0_i32, %arg1, %c0_i32_0, %c0_i32_1 : i32, i32, i32, i32, i32
  }
  func.func @transform_5(%arg0: i32, %arg1: i32) -> (i32, i32, i32, i32) {
    %c0_i32 = arith.constant 0 : i32
    %c0_i32_0 = arith.constant 0 : i32
    %c0_i32_1 = arith.constant 0 : i32
    return %arg0, %arg1, %c0_i32, %c0_i32_0 : i32, i32, i32, i32
  }
}

module attributes {stable_mosaic.version = 11 : i64} {
  func.func @_bn_relu_kernel(%arg0: i32, %arg1: memref<64x128xf32, #tpu.memory_space<vmem>>, %arg2: memref<1x128xf32, #tpu.memory_space<vmem>>, %arg3: memref<1x128xf32, #tpu.memory_space<vmem>>, %arg4: memref<64x128xf32, #tpu.memory_space<vmem>>) attributes {dimension_semantics = [#tpu.dimension_semantics<parallel>], iteration_bounds = array<i64: 2>, scalar_prefetch = 0 : i64, scratch_operands = 0 : i64, tpu.core_type = #tpu.core_type<tc>, window_params = [{transform_indices = @transform_0, window_bounds = array<i64: 64, 128>}, {pipeline_mode = #tpu.pipeline_mode<synchronous>, transform_indices = @transform_1, window_bounds = array<i64: 1, 128>}, {pipeline_mode = #tpu.pipeline_mode<synchronous>, transform_indices = @transform_2, window_bounds = array<i64: 1, 128>}, {transform_indices = @transform_3, window_bounds = array<i64: 64, 128>}]} {
    %c0 = arith.constant 0 : index
    %c0_0 = arith.constant 0 : index
    %0 = vector.load %arg1[%c0, %c0_0] : memref<64x128xf32, #tpu.memory_space<vmem>>, vector<64x128xf32>
    %c0_1 = arith.constant 0 : index
    %c0_2 = arith.constant 0 : index
    %1 = vector.load %arg2[%c0_1, %c0_2] : memref<1x128xf32, #tpu.memory_space<vmem>>, vector<1x128xf32>
    %2 = vector.broadcast %1 : vector<1x128xf32> to vector<64x128xf32>
    %3 = arith.mulf %0, %2 : vector<64x128xf32>
    %c0_3 = arith.constant 0 : index
    %c0_4 = arith.constant 0 : index
    %4 = vector.load %arg3[%c0_3, %c0_4] : memref<1x128xf32, #tpu.memory_space<vmem>>, vector<1x128xf32>
    %5 = vector.broadcast %4 : vector<1x128xf32> to vector<64x128xf32>
    %6 = arith.addf %3, %5 : vector<64x128xf32>
    %cst = arith.constant 0.000000e+00 : f32
    %7 = vector.broadcast %cst : f32 to vector<64x128xf32>
    %8 = arith.maximumf %6, %7 : vector<64x128xf32>
    %c0_5 = arith.constant 0 : index
    %c0_6 = arith.constant 0 : index
    %9 = vector.load %arg4[%c0_5, %c0_6] : memref<64x128xf32, #tpu.memory_space<vmem>>, vector<64x128xf32>
    tpu.vector_store %arg4[%c0_5, %c0_6], %8 {strides = array<i32>} : memref<64x128xf32, #tpu.memory_space<vmem>>, vector<64x128xf32>,
    return
  }
  func.func @transform_0(%arg0: i32) -> (i32, i32) {
    %c0_i32 = arith.constant 0 : i32
    %c0_i32_0 = arith.constant 0 : i32
    return %arg0, %c0_i32 : i32, i32
  }
  func.func @transform_1(%arg0: i32) -> (i32, i32) {
    %c0_i32 = arith.constant 0 : i32
    %c0_i32_0 = arith.constant 0 : i32
    %c0_i32_1 = arith.constant 0 : i32
    return %c0_i32, %c0_i32_0 : i32, i32
  }
  func.func @transform_2(%arg0: i32) -> (i32, i32) {
    %c0_i32 = arith.constant 0 : i32
    %c0_i32_0 = arith.constant 0 : i32
    %c0_i32_1 = arith.constant 0 : i32
    return %c0_i32, %c0_i32_0 : i32, i32
  }
  func.func @transform_3(%arg0: i32) -> (i32, i32) {
    %c0_i32 = arith.constant 0 : i32
    %c0_i32_0 = arith.constant 0 : i32
    return %arg0, %c0_i32 : i32, i32
  }
}

</mosaic_0001>

<llo_original>
// kernel: tile.18
$region0: #{tile.18}
  #allocation0 [shape = 's32[1]{0}', space=sflag, size = 0x4, scoped, tag = 'scoped memory for tile.18']
  %s0 = inlined_call_operand.vmem [shape: f32[8], index: 0, kind: input, shape index: {}]
  %s1 = inlined_call_operand.vmem [shape: f32[16,8], index: 1, kind: output, shape index: {}]
  // Predicated region
  $region2: #{tile.18} parent=0 // pred_check
    _
  $region3: #{tile.18} parent=0 // pred_check_branch
    %3 = sbr.rel (0) target = $region5
  $region4: #{tile.18} parent=0 // pred_region
    _
  $region5: #{tile.18} parent=0 // pred_fallthru
    _
  %v4 = vld [vmem:[%s0] ss:$0 sm:$0xff]
  %5 = vst [vmem:[%s1] sm:$0xff] %v4
  %s6 = scalar_lea.vmem %s1, 8
  %7 = vst [vmem:[%s6] sm:$0xff] %v4

// kernel: tile.19
$region0: #{tile.19}
  %s0 = inlined_call_operand.vmem [shape: f32[16,8], index: 0, kind: input, shape index: {}]
  %s1 = inlined_call_operand.vmem [shape: f32[1,128], index: 1, kind: output, shape index: {}]
  $region1: #{tile.19} parent=0
    #allocation0 [shape = 'u8[4096]{0}', space=vmem, size = 0x1000, scoped, tag = 'scoped mem for output reshape']
    %v2 = vld [vmem:[%s0] sm:$0x1]
    %vm3 = vcmask 64512
    %4 = vst.msk [vmem:[#allocation0] sm:$0x1] %vm3, %v2
    %s5 = scalar_lea.vmem %s0, 15
    %v6 = vld [vmem:[%s5] sm:$0x1]
    %7 = vrot.lane.b32.xlu0 %v6, 120
    %v8 = vpop.permute.xlu0 %7
    %vm9 = vcmask 1048512
    %10 = vst.msk [vmem:[#allocation0] sm:$0x1] %vm9, %v8
    %s11 = scalar_lea.vmem %s0, 14
    %v12 = vld [vmem:[%s11] sm:$0x1]
    %13 = vrot.lane.b32.xlu0 %v12, 112
    %v14 = vpop.permute.xlu0 %13
    %vm15 = vcmask 982912
    %16 = vst.msk [vmem:[#allocation0] sm:$0x1] %vm15, %v14
    %s17 = scalar_lea.vmem %s0, 13
    %v18 = vld [vmem:[%s17] sm:$0x1]
    %19 = vrot.lane.b32.xlu0 %v18, 104
    %v20 = vpop.permute.xlu0 %19
    %vm21 = vcmask 917312
    %22 = vst.msk [vmem:[#allocation0] sm:$0x1] %vm21, %v20
    %s23 = scalar_lea.vmem %s0, 12
    %v24 = vld [vmem:[%s23] sm:$0x1]
    %25 = vrot.lane.b32.xlu0 %v24, 96
    %v26 = vpop.permute.xlu0 %25
    %vm27 = vcmask 851712
    %28 = vst.msk [vmem:[#allocation0] sm:$0x1] %vm27, %v26
    %s29 = scalar_lea.vmem %s0, 11
    %v30 = vld [vmem:[%s29] sm:$0x1]
    %31 = vrot.lane.b32.xlu0 %v30, 88
    %v32 = vpop.permute.xlu0 %31
    %vm33 = vcmask 786112
    %34 = vst.msk [vmem:[#allocation0] sm:$0x1] %vm33, %v32
    %s35 = scalar_lea.vmem %s0, 10
    %v36 = vld [vmem:[%s35] sm:$0x1]
    %37 = vrot.lane.b32.xlu0 %v36, 80
    %v38 = vpop.permute.xlu0 %37
    %vm39 = vcmask 720512
    %40 = vst.msk [vmem:[#allocation0] sm:$0x1] %vm39, %v38
    %s41 = scalar_lea.vmem %s0, 9
    %v42 = vld [vmem:[%s41] sm:$0x1]
    %43 = vrot.lane.b32.xlu0 %v42, 72
    %v44 = vpop.permute.xlu0 %43
    %vm45 = vcmask 654912
    %46 = vst.msk [vmem:[#allocation0] sm:$0x1] %vm45, %v44
    %s47 = scalar_lea.vmem %s0, 8
    %v48 = vld [vmem:[%s47] sm:$0x1]
    %49 = vrot.lane.b32.xlu0 %v48, 64
    %v50 = vpop.permute.xlu0 %49
    %vm51 = vcmask 589312
    %52 = vst.msk [vmem:[#allocation0] sm:$0x1] %vm51, %v50
    %s53 = scalar_lea.vmem %s0, 7
    %v54 = vld [vmem:[%s53] sm:$0x1]
    %55 = vrot.lane.b32.xlu0 %v54, 56
    %v56 = vpop.permute.xlu0 %55
    %vm57 = vcmask 523712
    %58 = vst.msk [vmem:[#allocation0] sm:$0x1] %vm57, %v56
    %s59 = scalar_lea.vmem %s0, 6
    %v60 = vld [vmem:[%s59] sm:$0x1]
    %61 = vrot.lane.b32.xlu0 %v60, 48
    %v62 = vpop.permute.xlu0 %61
    %vm63 = vcmask 458112
    %64 = vst.msk [vmem:[#allocation0] sm:$0x1] %vm63, %v62
    %s65 = scalar_lea.vmem %s0, 5
    %v66 = vld [vmem:[%s65] sm:$0x1]
    %67 = vrot.lane.b32.xlu0 %v66, 40
    %v68 = vpop.permute.xlu0 %67
    %vm69 = vcmask 392512
    %70 = vst.msk [vmem:[#allocation0] sm:$0x1] %vm69, %v68
    %s71 = scalar_lea.vmem %s0, 4
    %v72 = vld [vmem:[%s71] sm:$0x1]
    %73 = vrot.lane.b32.xlu0 %v72, 32
    %v74 = vpop.permute.xlu0 %73
    %vm75 = vcmask 326912
    %76 = vst.msk [vmem:[#allocation0] sm:$0x1] %vm75, %v74
    %s77 = scalar_lea.vmem %s0, 3
    %v78 = vld [vmem:[%s77] sm:$0x1]
    %79 = vrot.lane.b32.xlu0 %v78, 24
    %v80 = vpop.permute.xlu0 %79
    %vm81 = vcmask 261312
    %82 = vst.msk [vmem:[#allocation0] sm:$0x1] %vm81, %v80
    %s83 = scalar_lea.vmem %s0, 2
    %v84 = vld [vmem:[%s83] sm:$0x1]
    %85 = vrot.lane.b32.xlu0 %v84, 16
    %v86 = vpop.permute.xlu0 %85
    %vm87 = vcmask 195712
    %88 = vst.msk [vmem:[#allocation0] sm:$0x1] %vm87, %v86
    %s89 = scalar_lea.vmem %s0, 1
    %v90 = vld [vmem:[%s89] sm:$0x1]
    %91 = vrot.lane.b32.xlu0 %v90, 8
    %v92 = vpop.permute.xlu0 %91
    %vm93 = vcmask 130112
    %94 = vst.msk [vmem:[#allocation0] sm:$0x1] %vm93, %v92
    %s96 = ssub.s32 2, 1
    %v97 = vld [vmem:[#allocation0] sm:%s96]
    %s99 = ssub.s32 2, 1
    %100 = vst [vmem:[%s1] sm:%s99] %v97

// kernel: up_conv_forward.3
$region0: #{up_conv_forward.3}
  #allocation0 [shape = 'u32[]', space=smem, size = 0x4, offset = 0x4, fixed_abs, tag = 'smem constant byte address 0x4 - core index']
  #allocation1 [shape = 'u32[72,128]{1,0:T(1,128)}', space=vmem, size = 0x9000, scoped, tag = 'internal scratch']
  %s0 = inlined_call_operand.vmem [shape: f32[128,128], index: 0, kind: input, shape index: {}, may-alias: {0,3}]
  %s1 = inlined_call_operand.vmem [shape: f32[1,128], index: 1, kind: input, shape index: {}]
  %s2 = inlined_call_operand.vmem [shape: f32[1,128], index: 2, kind: input, shape index: {}]
  %s3 = inlined_call_operand.vmem [shape: f32[128,128], index: 3, kind: output, shape index: {}, may-alias: {0,3}]
  %s4 = sld [smem:[#allocation0]]
  $region45: #{up_conv_forward.3} parent=0
    _
  %s6 = ssub.s32 1, %s4
  %s7 = scalar_select 0, %s6, %s4
  loop: start=0, step=1, limit=4
  $region2: #{up_conv_forward.3} parent=0 // loop_pre_header
    _
  $region3: #{up_conv_forward.3} parent=0 // loop_header
    %s9 = sphi 0, %s13
    %p10 = scmp.ge.s32.totalorder %s9, 4
    %s19 = sphi 0, %s21
    %s22 = sphi 0, %s19
    %s23 = sphi 0, %s22
    %s39 = sphi 0, %s23
    %s43 = sphi 0, %s43
    %s45 = sphi 0, %s43
    %s46 = sphi 0, %s45
    %s60 = sphi 0, %s46
    %s64 = sphi 0, %s64
    %s66 = sphi 0, %s64
    %s67 = sphi 0, %s66
    %s81 = sphi 0, %s67
    %s87 = sphi 0, %s89
    %s90 = sphi 0, %s87
    %s91 = sphi 0, %s90
    %s107 = sphi 0, %s91
  $region4: #{up_conv_forward.3} parent=0 // loop_header_branch
    %12 = sbr.rel (%p10) target = $region8
  $region5: #{up_conv_forward.3} parent=0 // loop_body
    %s14 = ssub.s32 %s9, 1
    %s15 = ssub.s32 %s9, 2
    %s16 = sadd.s32 %s9, 1
    %s17 = ssub.s32 %s9, %s16
    %p18 = scmp.eq.s32.totalorder %s17, 0
    %s20 = sadd.s32 %s19, 1
    %s21 = scalar_select %p18, %s19, %s20
    %p24 = pneg %p18
    %p25 = scmp.eq.s32.totalorder %s9, 1
    %p26 = por %p24, %p25
    %p27 = scmp.ne.s32.totalorder %s19, %s22
    %p28 = scmp.eq.s32.totalorder %s9, 0
    %p29 = por %p27, %p28
    %p30 = scmp.ne.s32.totalorder %s19, %s22
    %p31 = scmp.eq.s32.totalorder %s14, 1
    %p32 = por %p30, %p31
    %p33 = scmp.ne.s32.totalorder %s22, %s23
    %p34 = scmp.eq.s32.totalorder %s14, 0
    %p35 = por %p33, %p34
    %p36 = scmp.ne.s32.totalorder %s22, %s23
    %p37 = scmp.eq.s32.totalorder %s15, 1
    %p38 = por %p36, %p37
    %p40 = scmp.ne.s32.totalorder %s23, %s39
    %p41 = scmp.eq.s32.totalorder %s15, 0
    %p42 = por %p40, %p41
    %s44 = sadd.s32 %s43, 1
    %p47 = scmp.eq.s32.totalorder %s9, 1
    %p48 = scmp.ne.s32.totalorder %s43, %s45
    %p49 = scmp.eq.s32.totalorder %s9, 0
    %p50 = por %p48, %p49
    %p51 = scmp.ne.s32.totalorder %s43, %s45
    %p52 = scmp.eq.s32.totalorder %s14, 1
    %p53 = por %p51, %p52
    %p54 = scmp.ne.s32.totalorder %s45, %s46
    %p55 = scmp.eq.s32.totalorder %s14, 0
    %p56 = por %p54, %p55
    %p57 = scmp.ne.s32.totalorder %s45, %s46
    %p58 = scmp.eq.s32.totalorder %s15, 1
    %p59 = por %p57, %p58
    %p61 = scmp.ne.s32.totalorder %s46, %s60
    %p62 = scmp.eq.s32.totalorder %s15, 0
    %p63 = por %p61, %p62
    %s65 = sadd.s32 %s64, 1
    %p68 = scmp.eq.s32.totalorder %s9, 1
    %p69 = scmp.ne.s32.totalorder %s64, %s66
    %p70 = scmp.eq.s32.totalorder %s9, 0
    %p71 = por %p69, %p70
    %p72 = scmp.ne.s32.totalorder %s64, %s66
    %p73 = scmp.eq.s32.totalorder %s14, 1
    %p74 = por %p72, %p73
    %p75 = scmp.ne.s32.totalorder %s66, %s67
    %p76 = scmp.eq.s32.totalorder %s14, 0
    %p77 = por %p75, %p76
    %p78 = scmp.ne.s32.totalorder %s66, %s67
    %p79 = scmp.eq.s32.totalorder %s15, 1
    %p80 = por %p78, %p79
    %p82 = scmp.ne.s32.totalorder %s67, %s81
    %p83 = scmp.eq.s32.totalorder %s15, 0
    %p84 = por %p82, %p83
    %s85 = ssub.s32 %s9, %s16
    %p86 = scmp.eq.s32.totalorder %s85, 0
    %s88 = sadd.s32 %s87, 1
    %s89 = scalar_select %p86, %s87, %s88
    %p92 = pneg %p86
    %p93 = scmp.eq.s32.totalorder %s9, 1
    %p94 = por %p92, %p93
    %p95 = scmp.ne.s32.totalorder %s87, %s90
    %p96 = scmp.eq.s32.totalorder %s9, 0
    %p97 = por %p95, %p96
    %p98 = scmp.ne.s32.totalorder %s87, %s90
    %p99 = scmp.eq.s32.totalorder %s14, 1
    %p100 = por %p98, %p99
    %p101 = scmp.ne.s32.totalorder %s90, %s91
    %p102 = scmp.eq.s32.totalorder %s14, 0
    %p103 = por %p101, %p102
    %p104 = scmp.ne.s32.totalorder %s90, %s91
    %p105 = scmp.eq.s32.totalorder %s15, 1
    %p106 = por %p104, %p105
    %p108 = scmp.ne.s32.totalorder %s91, %s107
    %p109 = scmp.eq.s32.totalorder %s15, 0
    %p110 = por %p108, %p109
    %p111 = scmp.le.s32.totalorder 1, %s9
    %p112 = scmp.lt.s32.totalorder %s9, 3
    %p113 = pnand %p111, %p112
    %p114 = pneg %p113
    // Predicated region
    $region9: #{up_conv_forward.3} parent=5 // pred_check
      _
    $region10: #{up_conv_forward.3} parent=5 // pred_check_branch
      %116 = sbr.rel (%p113) target = $region12
    $region11: #{up_conv_forward.3} parent=5 // pred_region
      %s117 = ssub.s32 %s9, 1
      // Predicated region
      $region13: #{up_conv_forward.3} parent=11 // pred_check
        %p118 = pneg %p56
      $region14: #{up_conv_forward.3} parent=11 // pred_check_branch
        %120 = sbr.rel (%p118) target = $region16
      $region15: #{up_conv_forward.3} parent=11 // pred_region
        _
      $region16: #{up_conv_forward.3} parent=11 // pred_fallthru
        _
      // Predicated region
      $region17: #{up_conv_forward.3} parent=11 // pred_check
        %p121 = pneg %p77
      $region18: #{up_conv_forward.3} parent=11 // pred_check_branch
        %123 = sbr.rel (%p121) target = $region20
      $region19: #{up_conv_forward.3} parent=11 // pred_region
        _
      $region20: #{up_conv_forward.3} parent=11 // pred_fallthru
        _
    $region12: #{up_conv_forward.3} parent=5 // pred_fallthru
      _
    %p124 = scmp.lt.s32.totalorder %s9, 2
    // Predicated region
    $region21: #{up_conv_forward.3} parent=5 // pred_check
      %p125 = pneg %p124
    $region22: #{up_conv_forward.3} parent=5 // pred_check_branch
      %127 = sbr.rel (%p125) target = $region24
    $region23: #{up_conv_forward.3} parent=5 // pred_region
      // Predicated region
      $region25: #{up_conv_forward.3} parent=23 // pred_check
        %p128 = pneg %p29
      $region26: #{up_conv_forward.3} parent=23 // pred_check_branch
        %130 = sbr.rel (%p128) target = $region28
      $region27: #{up_conv_forward.3} parent=23 // pred_region
        %s131 = smul.u32 8, %s9
        %p132 = scmp.lt.s32.totalorder %s131, 15
        %s133 = scalar_select %p132, %s131, 15
        %s134 = smul.addr %s133, 8
        %s135 = scalar_lea.vmem %s0, %s134
        %s136 = smul.u32 8, %s9
      $region28: #{up_conv_forward.3} parent=23 // pred_fallthru
        _
    $region24: #{up_conv_forward.3} parent=5 // pred_fallthru
      _
    %p137 = scmp.le.s32.totalorder 1, %s9
    %p138 = scmp.lt.s32.totalorder %s9, 3
    %p139 = pnand %p137, %p138
    %p140 = pneg %p139
    // Predicated region
    $region29: #{up_conv_forward.3} parent=5 // pred_check
      _
    $region30: #{up_conv_forward.3} parent=5 // pred_check_branch
      %142 = sbr.rel (%p139) target = $region32
    $region31: #{up_conv_forward.3} parent=5 // pred_region
      %s143 = ssub.s32 %s9, 1
      %s144 = smul.u32 8, %s14
      %p145 = scmp.lt.s32.totalorder %s144, 15
      %s146 = scalar_select %p145, %s144, 15
      %s147 = smul.addr %s146, 8
      %s148 = scalar_lea.vmem %s0, %s147
      %p149 = pneg %p35
      %p150 = pneg %p32
      %p151 = pneg %p56
      %p152 = pneg %p53
      %p153 = pneg %p77
      %p154 = pneg %p74
      %p155 = pneg %p103
      %p156 = pneg %p100
      %s157 = smul.u32 8, %s14
      %p158 = scmp.lt.s32.totalorder %s157, 15
      %s159 = scalar_select %p158, %s157, 15
      %s160 = smul.addr %s159, 8
      %s161 = scalar_lea.vmem %s3, %s160
      %s162 = smul.u32 8, %s14
      %p163 = scmp.lt.s32.totalorder %s162, 15
      %s164 = scalar_select %p163, %s162, 15
      %s165 = smul.addr %s164, 8
      %s166 = scalar_lea.vmem %s0, %s165
      %s167 = smul.u32 8, %s14
      %s168 = smul.u32 8, %s14
      %p169 = scmp.lt.s32.totalorder %s168, 15
      %s170 = scalar_select %p169, %s168, 15
      %s171 = smul.addr %s170, 8
      %s172 = scalar_lea.vmem %s3, %s171
      %s173 = smul.u32 8, %s14
      %v174 = vld [vmem:[%s166] sm:$0xff]
      %v175 = vld [vmem:[%s166 + $0x8] sm:$0xff]
      %v176 = vld [vmem:[%s166 + $0x10] sm:$0xff]
      %v177 = vld [vmem:[%s166 + $0x18] sm:$0xff]
      %v178 = vld [vmem:[%s166 + $0x20] sm:$0xff]
      %v179 = vld [vmem:[%s166 + $0x28] sm:$0xff]
      %v180 = vld [vmem:[%s166 + $0x30] sm:$0xff]
      %v181 = vld [vmem:[%s166 + $0x38] sm:$0xff]
      %v182 = vld [vmem:[%s1] sm:$0x1]
      %v184 = vperm.slane %v182, 0
      %v186 = vmul.f32 %v174, %v184
      %v187 = vmul.f32 %v175, %v184
      %v188 = vmul.f32 %v176, %v184
      %v189 = vmul.f32 %v177, %v184
      %v190 = vmul.f32 %v178, %v184
      %v191 = vmul.f32 %v179, %v184
      %v192 = vmul.f32 %v180, %v184
      %v193 = vmul.f32 %v181, %v184
      %v194 = vld [vmem:[%s2] sm:$0x1]
      %v196 = vperm.slane %v194, 0
      %v198 = vadd.f32 %v186, %v196
      %v199 = vadd.f32 %v187, %v196
      %v200 = vadd.f32 %v188, %v196
      %v201 = vadd.f32 %v189, %v196
      %v202 = vadd.f32 %v190, %v196
      %v203 = vadd.f32 %v191, %v196
      %v204 = vadd.f32 %v192, %v196
      %v205 = vadd.f32 %v193, %v196
      %v206 = vmax.f32 %v198, 0.0
      %v207 = vmax.f32 %v199, 0.0
      %v208 = vmax.f32 %v200, 0.0
      %v209 = vmax.f32 %v201, 0.0
      %v210 = vmax.f32 %v202, 0.0
      %v211 = vmax.f32 %v203, 0.0
      %v212 = vmax.f32 %v204, 0.0
      %v213 = vmax.f32 %v205, 0.0
      %214 = vst [vmem:[%s172] sm:$0xff] %v206
      %215 = vst [vmem:[%s172 + $0x8] sm:$0xff] %v207
      %216 = vst [vmem:[%s172 + $0x10] sm:$0xff] %v208
      %217 = vst [vmem:[%s172 + $0x18] sm:$0xff] %v209
      %218 = vst [vmem:[%s172 + $0x20] sm:$0xff] %v210
      %219 = vst [vmem:[%s172 + $0x28] sm:$0xff] %v211
      %220 = vst [vmem:[%s172 + $0x30] sm:$0xff] %v212
      %221 = vst [vmem:[%s172 + $0x38] sm:$0xff] %v213
      %s222 = smul.u32 8, %s14
      %p223 = scmp.lt.s32.totalorder %s222, 15
      %s224 = scalar_select %p223, %s222, 15
      %s225 = smul.addr %s224, 8
      %s226 = scalar_lea.vmem %s3, %s225
      // Predicated region
      $region33: #{up_conv_forward.3} parent=31 // pred_check
        %p227 = pneg %p100
      $region34: #{up_conv_forward.3} parent=31 // pred_check_branch
        %229 = sbr.rel (%p227) target = $region36
      $region35: #{up_conv_forward.3} parent=31 // pred_region
        %s230 = smul.u32 8, %s14
      $region36: #{up_conv_forward.3} parent=31 // pred_fallthru
        _
    $region32: #{up_conv_forward.3} parent=5 // pred_fallthru
      _
    %p231 = scmp.le.s32.totalorder 2, %s9
    // Predicated region
    $region37: #{up_conv_forward.3} parent=5 // pred_check
      %p232 = pneg %p231
    $region38: #{up_conv_forward.3} parent=5 // pred_check_branch
      %234 = sbr.rel (%p232) target = $region40
    $region39: #{up_conv_forward.3} parent=5 // pred_region
      %s235 = ssub.s32 %s9, 2
      // Predicated region
      $region41: #{up_conv_forward.3} parent=39 // pred_check
        %p236 = pneg %p106
      $region42: #{up_conv_forward.3} parent=39 // pred_check_branch
        %238 = sbr.rel (%p236) target = $region44
      $region43: #{up_conv_forward.3} parent=39 // pred_region
        %s239 = smul.u32 8, %s15
        %p240 = scmp.lt.s32.totalorder %s239, 15
        %s241 = scalar_select %p240, %s239, 15
        %s242 = smul.addr %s241, 8
        %s243 = scalar_lea.vmem %s3, %s242
      $region44: #{up_conv_forward.3} parent=39 // pred_fallthru
        _
    $region40: #{up_conv_forward.3} parent=5 // pred_fallthru
      _
  $region6: #{up_conv_forward.3} parent=0 // loop_footer
    %s13 = sadd.s32 1, %s9
  $region7: #{up_conv_forward.3} parent=0 // loop_footer_branch
    %8 = sbr.rel target = $region3
  $region8: #{up_conv_forward.3} parent=0 // loop_exit
    _

// kernel: up_conv_forward.2
$region0: #{up_conv_forward.2}
  #allocation0 [shape = 'u32[]', space=smem, size = 0x4, offset = 0x4, fixed_abs, tag = 'smem constant byte address 0x4 - core index']
  #allocation1 [shape = 'u32[72,128]{1,0:T(1,128)}', space=vmem, size = 0x9000, scoped, tag = 'internal scratch']
  #allocation2 [shape = 'f32[10,18,4]{2,1,0:T(8,128)}', space=vmem, size = 0x1e000, scoped, tag = 'scratch operand']
  %s0 = inlined_call_operand.vmem [shape: f32[2,18,18,4], index: 0, kind: input, shape index: {}, may-alias: {0,1,2}]
  %s1 = inlined_call_operand.vmem [shape: f32[2,18,18,4], index: 1, kind: input, shape index: {}, may-alias: {0,1,2}]
  %s2 = inlined_call_operand.vmem [shape: f32[2,18,18,4], index: 2, kind: input, shape index: {}, may-alias: {0,1,2}]
  %s3 = inlined_call_operand.vmem [shape: f32[2,9,4,16], index: 3, kind: input, shape index: {}]
  %s4 = inlined_call_operand.vmem [shape: f32[2,4,16,16,8], index: 4, kind: output, shape index: {0}]
  %s5 = inlined_call_operand.vmem [shape: f32[2,2,2,8], index: 5, kind: output, shape index: {1}]
  %6 = xla_tuple %s4, %s5
  %s7 = sld [smem:[#allocation0]]
  $region91: #{up_conv_forward.2} parent=0
    _
  %s9 = ssub.s32 1, %s7
  %s10 = scalar_select 0, %s9, %s7
  $region1: #{up_conv_forward.2} parent=0
    #allocation3 [shape = 'u8[524288]{0}', space=vmem, size = 0x80000, scoped, tag = 'output window, operand 0']
    loop: start=0, step=1, limit=6
    $region2: #{up_conv_forward.2} parent=1 // loop_pre_header
      _
    $region3: #{up_conv_forward.2} parent=1 // loop_header
      %s12 = sphi 0, %s16
      %p13 = scmp.ge.s32.totalorder %s12, 6
      %s19 = sphi 0, %s31
      %s20 = sphi 0, %s27
      %s21 = sphi 0, %s19
      %s22 = sphi 0, %s20
      %s23 = sphi 0, %s21
      %s24 = sphi 0, %s22
      %s36 = sphi 0, %s38
      %s39 = sphi 0, %s36
      %s40 = sphi 0, %s39
      %s56 = sphi 0, %s40
      %s68 = sphi 0, %s70
      %s71 = sphi 0, %s68
      %s72 = sphi 0, %s71
      %s88 = sphi 0, %s72
      %s102 = sphi 0, %s104
      %s105 = sphi 0, %s102
      %s106 = sphi 0, %s105
      %s122 = sphi 0, %s106
      %s126 = sphi 0, %s126
      %s128 = sphi 0, %s126
      %s129 = sphi 0, %s128
      %s143 = sphi 0, %s129
      %s151 = sphi 0, %s153
      %s154 = sphi 0, %s151
      %s155 = sphi 0, %s154
      %s171 = sphi 0, %s155
      %s179 = sphi 0, %s181
      %s182 = sphi 0, %s179
      %s183 = sphi 0, %s182
      %s199 = sphi 0, %s183
    $region4: #{up_conv_forward.2} parent=1 // loop_header_branch
      %15 = sbr.rel (%p13) target = $region8
    $region5: #{up_conv_forward.2} parent=1 // loop_body
      %s17 = ssub.s32 %s12, 1
      %s18 = ssub.s32 %s12, 2
      %s25 = sadd.s32 1, %s20
      %p26 = scmp.ge.s32.totalorder %s25, 2
      %s27 = scalar_select %p26, 0, %s25
      %s28 = sadd.s32 1, %s19
      %s29 = scalar_select %p26, %s28, %s19
      %p30 = scmp.ge.s32.totalorder %s29, 2
      %s31 = scalar_select %p30, 0, %s29
      %s32 = ssub.s32 %s19, %s31
      %s33 = ssub.s32 %s20, %s27
      %s34 = sor.u32 %s32, %s33
      %p35 = scmp.eq.s32.totalorder %s34, 0
      %s37 = sadd.s32 %s36, 1
      %s38 = scalar_select %p35, %s36, %s37
      %p41 = pneg %p35
      %p42 = scmp.eq.s32.totalorder %s12, 3
      %p43 = por %p41, %p42
      %p44 = scmp.ne.s32.totalorder %s36, %s39
      %p45 = scmp.eq.s32.totalorder %s12, 0
      %p46 = por %p44, %p45
      %p47 = scmp.ne.s32.totalorder %s36, %s39
      %p48 = scmp.eq.s32.totalorder %s17, 3
      %p49 = por %p47, %p48
      %p50 = scmp.ne.s32.totalorder %s39, %s40
      %p51 = scmp.eq.s32.totalorder %s17, 0
      %p52 = por %p50, %p51
      %p53 = scmp.ne.s32.totalorder %s39, %s40
      %p54 = scmp.eq.s32.totalorder %s18, 3
      %p55 = por %p53, %p54
      %p57 = scmp.ne.s32.totalorder %s40, %s56
      %p58 = scmp.eq.s32.totalorder %s18, 0
      %p59 = por %p57, %p58
      %s60 = sadd.s32 %s20, 1
      %s61 = smul.u32 %s60, 8
      %s62 = sadd.s32 %s27, 1
      %s63 = smul.u32 %s62, 8
      %s64 = ssub.s32 %s19, %s31
      %s65 = ssub.s32 %s61, %s63
      %s66 = sor.u32 %s64, %s65
      %p67 = scmp.eq.s32.totalorder %s66, 0
      %s69 = sadd.s32 %s68, 1
      %s70 = scalar_select %p67, %s68, %s69
      %p73 = pneg %p67
      %p74 = scmp.eq.s32.totalorder %s12, 3
      %p75 = por %p73, %p74
      %p76 = scmp.ne.s32.totalorder %s68, %s71
      %p77 = scmp.eq.s32.totalorder %s12, 0
      %p78 = por %p76, %p77
      %p79 = scmp.ne.s32.totalorder %s68, %s71
      %p80 = scmp.eq.s32.totalorder %s17, 3
      %p81 = por %p79, %p80
      %p82 = scmp.ne.s32.totalorder %s71, %s72
      %p83 = scmp.eq.s32.totalorder %s17, 0
      %p84 = por %p82, %p83
      %p85 = scmp.ne.s32.totalorder %s71, %s72
      %p86 = scmp.eq.s32.totalorder %s18, 3
      %p87 = por %p85, %p86
      %p89 = scmp.ne.s32.totalorder %s72, %s88
      %p90 = scmp.eq.s32.totalorder %s18, 0
      %p91 = por %p89, %p90
      %s92 = sadd.s32 %s20, 1
      %s93 = smul.u32 %s92, 8
      %s94 = sadd.s32 %s93, 1
      %s95 = sadd.s32 %s27, 1
      %s96 = smul.u32 %s95, 8
      %s97 = sadd.s32 %s96, 1
      %s98 = ssub.s32 %s19, %s31
      %s99 = ssub.s32 %s94, %s97
      %s100 = sor.u32 %s98, %s99
      %p101 = scmp.eq.s32.totalorder %s100, 0
      %s103 = sadd.s32 %s102, 1
      %s104 = scalar_select %p101, %s102, %s103
      %p107 = pneg %p101
      %p108 = scmp.eq.s32.totalorder %s12, 3
      %p109 = por %p107, %p108
      %p110 = scmp.ne.s32.totalorder %s102, %s105
      %p111 = scmp.eq.s32.totalorder %s12, 0
      %p112 = por %p110, %p111
      %p113 = scmp.ne.s32.totalorder %s102, %s105
      %p114 = scmp.eq.s32.totalorder %s17, 3
      %p115 = por %p113, %p114
      %p116 = scmp.ne.s32.totalorder %s105, %s106
      %p117 = scmp.eq.s32.totalorder %s17, 0
      %p118 = por %p116, %p117
      %p119 = scmp.ne.s32.totalorder %s105, %s106
      %p120 = scmp.eq.s32.totalorder %s18, 3
      %p121 = por %p119, %p120
      %p123 = scmp.ne.s32.totalorder %s106, %s122
      %p124 = scmp.eq.s32.totalorder %s18, 0
      %p125 = por %p123, %p124
      %s127 = sadd.s32 %s126, 1
      %p130 = scmp.eq.s32.totalorder %s12, 3
      %p131 = scmp.ne.s32.totalorder %s126, %s128
      %p132 = scmp.eq.s32.totalorder %s12, 0
      %p133 = por %p131, %p132
      %p134 = scmp.ne.s32.totalorder %s126, %s128
      %p135 = scmp.eq.s32.totalorder %s17, 3
      %p136 = por %p134, %p135
      %p137 = scmp.ne.s32.totalorder %s128, %s129
      %p138 = scmp.eq.s32.totalorder %s17, 0
      %p139 = por %p137, %p138
      %p140 = scmp.ne.s32.totalorder %s128, %s129
      %p141 = scmp.eq.s32.totalorder %s18, 3
      %p142 = por %p140, %p141
      %p144 = scmp.ne.s32.totalorder %s129, %s143
      %p145 = scmp.eq.s32.totalorder %s18, 0
      %p146 = por %p144, %p145
      %s147 = ssub.s32 %s19, %s31
      %s148 = ssub.s32 %s20, %s27
      %s149 = sor.u32 %s147, %s148
      %p150 = scmp.eq.s32.totalorder %s149, 0
      %s152 = sadd.s32 %s151, 1
      %s153 = scalar_select %p150, %s151, %s152
      %p156 = pneg %p150
      %p157 = scmp.eq.s32.totalorder %s12, 3
      %p158 = por %p156, %p157
      %p159 = scmp.ne.s32.totalorder %s151, %s154
      %p160 = scmp.eq.s32.totalorder %s12, 0
      %p161 = por %p159, %p160
      %p162 = scmp.ne.s32.totalorder %s151, %s154
      %p163 = scmp.eq.s32.totalorder %s17, 3
      %p164 = por %p162, %p163
      %p165 = scmp.ne.s32.totalorder %s154, %s155
      %p166 = scmp.eq.s32.totalorder %s17, 0
      %p167 = por %p165, %p166
      %p168 = scmp.ne.s32.totalorder %s154, %s155
      %p169 = scmp.eq.s32.totalorder %s18, 3
      %p170 = por %p168, %p169
      %p172 = scmp.ne.s32.totalorder %s155, %s171
      %p173 = scmp.eq.s32.totalorder %s18, 0
      %p174 = por %p172, %p173
      %s175 = ssub.s32 %s19, %s31
      %s176 = ssub.s32 %s20, %s27
      %s177 = sor.u32 %s175, %s176
      %p178 = scmp.eq.s32.totalorder %s177, 0
      %s180 = sadd.s32 %s179, 1
      %s181 = scalar_select %p178, %s179, %s180
      %p184 = pneg %p178
      %p185 = scmp.eq.s32.totalorder %s12, 3
      %p186 = por %p184, %p185
      %p187 = scmp.ne.s32.totalorder %s179, %s182
      %p188 = scmp.eq.s32.totalorder %s12, 0
      %p189 = por %p187, %p188
      %p190 = scmp.ne.s32.totalorder %s179, %s182
      %p191 = scmp.eq.s32.totalorder %s17, 3
      %p192 = por %p190, %p191
      %p193 = scmp.ne.s32.totalorder %s182, %s183
      %p194 = scmp.eq.s32.totalorder %s17, 0
      %p195 = por %p193, %p194
      %p196 = scmp.ne.s32.totalorder %s182, %s183
      %p197 = scmp.eq.s32.totalorder %s18, 3
      %p198 = por %p196, %p197
      %p200 = scmp.ne.s32.totalorder %s183, %s199
      %p201 = scmp.eq.s32.totalorder %s18, 0
      %p202 = por %p200, %p201
      %p203 = scmp.le.s32.totalorder 1, %s12
      %p204 = scmp.lt.s32.totalorder %s12, 5
      %p205 = pnand %p203, %p204
      %p206 = pneg %p205
      // Predicated region
      $region9: #{up_conv_forward.2} parent=5 // pred_check
        _
      $region10: #{up_conv_forward.2} parent=5 // pred_check_branch
        %208 = sbr.rel (%p205) target = $region12
      $region11: #{up_conv_forward.2} parent=5 // pred_region
        %s209 = ssub.s32 %s12, 1
        // Predicated region
        $region13: #{up_conv_forward.2} parent=11 // pred_check
          %p210 = pneg %p139
        $region14: #{up_conv_forward.2} parent=11 // pred_check_branch
          %212 = sbr.rel (%p210) target = $region16
        $region15: #{up_conv_forward.2} parent=11 // pred_region
          _
        $region16: #{up_conv_forward.2} parent=11 // pred_fallthru
          _
      $region12: #{up_conv_forward.2} parent=5 // pred_fallthru
        _
      %p213 = scmp.lt.s32.totalorder %s12, 4
      // Predicated region
      $region17: #{up_conv_forward.2} parent=5 // pred_check
        %p214 = pneg %p213
      $region18: #{up_conv_forward.2} parent=5 // pred_check_branch
        %216 = sbr.rel (%p214) target = $region20
      $region19: #{up_conv_forward.2} parent=5 // pred_region
        // Predicated region
        $region21: #{up_conv_forward.2} parent=19 // pred_check
          %p217 = pneg %p46
        $region22: #{up_conv_forward.2} parent=19 // pred_check_branch
          %219 = sbr.rel (%p217) target = $region24
        $region23: #{up_conv_forward.2} parent=19 // pred_region
          %s220 = smul.u32 8, %s20
          %s221 = ssub.s32 18, %s220
          %p222 = scmp.lt.s32.totalorder %s221, 8
          %s223 = scalar_select %p222, %s221, 8
          %s224 = smul.u32 8, %s223
          %s225 = smul.u32 %s224, 3
          %p226 = scmp.lt.s32.totalorder %s19, 1
          %s227 = scalar_select %p226, %s19, 1
          %p228 = scmp.lt.s32.totalorder %s220, 17
          %s229 = scalar_select %p228, %s220, 17
          %s230 = smul.addr %s229, 3
          %s231 = smul.addr %s227, 54
          %s232 = sadd.s32 %s230, %s231
          %s233 = smul.addr %s232, 8
          %s234 = scalar_lea.vmem %s0, %s233
          %s235 = smul.u32 8, %s20
          %s236 = ssub.s32 18, %s235
          %p237 = scmp.lt.s32.totalorder %s236, 8
          %s238 = scalar_select %p237, %s236, 8
          %s239 = smul.u32 8, %s238
          %s240 = smul.u32 %s239, 3
        $region24: #{up_conv_forward.2} parent=19 // pred_fallthru
          _
        // Predicated region
        $region25: #{up_conv_forward.2} parent=19 // pred_check
          %p241 = pneg %p78
        $region26: #{up_conv_forward.2} parent=19 // pred_check_branch
          %243 = sbr.rel (%p241) target = $region28
        $region27: #{up_conv_forward.2} parent=19 // pred_region
          %s244 = sadd.s32 %s20, 1
          %s245 = smul.u32 %s244, 8
          %p246 = scmp.lt.s32.totalorder %s19, 1
          %s247 = scalar_select %p246, %s19, 1
          %p248 = scmp.lt.s32.totalorder %s245, 17
          %s249 = scalar_select %p248, %s245, 17
          %s250 = smul.addr %s249, 3
          %s251 = smul.addr %s247, 54
          %s252 = sadd.s32 %s250, %s251
          %s253 = smul.addr %s252, 8
          %s254 = scalar_lea.vmem %s1, %s253
          %s255 = sadd.s32 %s20, 1
          %s256 = smul.u32 %s255, 8
        $region28: #{up_conv_forward.2} parent=19 // pred_fallthru
          _
        // Predicated region
        $region29: #{up_conv_forward.2} parent=19 // pred_check
          %p257 = pneg %p112
        $region30: #{up_conv_forward.2} parent=19 // pred_check_branch
          %259 = sbr.rel (%p257) target = $region32
        $region31: #{up_conv_forward.2} parent=19 // pred_region
          %s260 = sadd.s32 %s20, 1
          %s261 = smul.u32 %s260, 8
          %s262 = sadd.s32 %s261, 1
          %p263 = scmp.lt.s32.totalorder %s19, 1
          %s264 = scalar_select %p263, %s19, 1
          %p265 = scmp.lt.s32.totalorder %s262, 17
          %s266 = scalar_select %p265, %s262, 17
          %s267 = smul.addr %s266, 3
          %s268 = smul.addr %s264, 54
          %s269 = sadd.s32 %s267, %s268
          %s270 = smul.addr %s269, 8
          %s271 = scalar_lea.vmem %s2, %s270
          %s272 = sadd.s32 %s20, 1
          %s273 = smul.u32 %s272, 8
          %s274 = sadd.s32 %s273, 1
        $region32: #{up_conv_forward.2} parent=19 // pred_fallthru
          _
      $region20: #{up_conv_forward.2} parent=5 // pred_fallthru
        _
      %p275 = scmp.le.s32.totalorder 1, %s12
      %p276 = scmp.lt.s32.totalorder %s12, 5
      %p277 = pnand %p275, %p276
      %p278 = pneg %p277
      // Predicated region
      $region33: #{up_conv_forward.2} parent=5 // pred_check
        _
      $region34: #{up_conv_forward.2} parent=5 // pred_check_branch
        %280 = sbr.rel (%p277) target = $region36
      $region35: #{up_conv_forward.2} parent=5 // pred_region
        %s281 = ssub.s32 %s12, 1
        %s282 = smul.u32 8, %s22
        %s283 = ssub.s32 18, %s282
        %p284 = scmp.lt.s32.totalorder %s283, 8
        %s285 = scalar_select %p284, %s283, 8
        %s286 = smul.u32 8, %s285
        %s287 = smul.u32 %s286, 3
        %p288 = scmp.lt.s32.totalorder %s21, 1
        %s289 = scalar_select %p288, %s21, 1
        %p290 = scmp.lt.s32.totalorder %s282, 17
        %s291 = scalar_select %p290, %s282, 17
        %s292 = smul.addr %s291, 3
        %s293 = smul.addr %s289, 54
        %s294 = sadd.s32 %s292, %s293
        %s295 = smul.addr %s294, 8
        %s296 = scalar_lea.vmem %s0, %s295
        %p297 = pneg %p52
        %p298 = pneg %p49
        %s299 = sadd.s32 %s22, 1
        %s300 = smul.u32 %s299, 8
        %p301 = scmp.lt.s32.totalorder %s21, 1
        %s302 = scalar_select %p301, %s21, 1
        %p303 = scmp.lt.s32.totalorder %s300, 17
        %s304 = scalar_select %p303, %s300, 17
        %s305 = smul.addr %s304, 3
        %s306 = smul.addr %s302, 54
        %s307 = sadd.s32 %s305, %s306
        %s308 = smul.addr %s307, 8
        %s309 = scalar_lea.vmem %s1, %s308
        %p310 = pneg %p84
        %p311 = pneg %p81
        %s312 = sadd.s32 %s22, 1
        %s313 = smul.u32 %s312, 8
        %s314 = sadd.s32 %s313, 1
        %p315 = scmp.lt.s32.totalorder %s21, 1
        %s316 = scalar_select %p315, %s21, 1
        %p317 = scmp.lt.s32.totalorder %s314, 17
        %s318 = scalar_select %p317, %s314, 17
        %s319 = smul.addr %s318, 3
        %s320 = smul.addr %s316, 54
        %s321 = sadd.s32 %s319, %s320
        %s322 = smul.addr %s321, 8
        %s323 = scalar_lea.vmem %s2, %s322
        %p324 = pneg %p118
        %p325 = pneg %p115
        %p326 = pneg %p139
        %p327 = pneg %p136
        %p328 = pneg %p167
        %p329 = pneg %p164
        %s330 = sand.u32 %s154, 1
        %s331 = sand.u32 %s154, 1
        %s332 = smul.addr %s331, 512
        %s333 = scalar_lea.vmem [#allocation3], %s332
        %p334 = pneg %p195
        %p335 = pneg %p192
        %p336 = scmp.lt.s32.totalorder %s21, 1
        %s337 = scalar_select %p336, %s21, 1
        %p338 = scmp.lt.s32.totalorder %s22, 1
        %s339 = scalar_select %p338, %s22, 1
        %s340 = smul.addr %s337, 2
        %s341 = sadd.s32 %s339, %s340
        %s342 = smul.addr %s341, 2
        %s343 = scalar_lea.vmem %s5, %s342
        %s344 = smul.u32 8, %s22
        %s345 = ssub.s32 18, %s344
        %p346 = scmp.lt.s32.totalorder %s345, 8
        %s347 = scalar_select %p346, %s345, 8
        %s348 = smul.u32 8, %s347
        %s349 = smul.u32 %s348, 3
        %p350 = scmp.lt.s32.totalorder %s21, 1
        %s351 = scalar_select %p350, %s21, 1
        %p352 = scmp.lt.s32.totalorder %s344, 17
        %s353 = scalar_select %p352, %s344, 17
        %s354 = smul.addr %s353, 3
        %s355 = smul.addr %s351, 54
        %s356 = sadd.s32 %s354, %s355
        %s357 = smul.addr %s356, 8
        %s358 = scalar_lea.vmem %s0, %s357
        %s359 = smul.u32 8, %s22
        %s360 = ssub.s32 18, %s359
        %p361 = scmp.lt.s32.totalorder %s360, 8
        %s362 = scalar_select %p361, %s360, 8
        %s363 = smul.u32 8, %s362
        %s364 = smul.u32 %s363, 3
        %s365 = sadd.s32 %s22, 1
        %s366 = smul.u32 %s365, 8
        %p367 = scmp.lt.s32.totalorder %s21, 1
        %s368 = scalar_select %p367, %s21, 1
        %p369 = scmp.lt.s32.totalorder %s366, 17
        %s370 = scalar_select %p369, %s366, 17
        %s371 = smul.addr %s370, 3
        %s372 = smul.addr %s368, 54
        %s373 = sadd.s32 %s371, %s372
        %s374 = smul.addr %s373, 8
        %s375 = scalar_lea.vmem %s1, %s374
        %s376 = sadd.s32 %s22, 1
        %s377 = smul.u32 %s376, 8
        %s378 = sadd.s32 %s22, 1
        %s379 = smul.u32 %s378, 8
        %s380 = sadd.s32 %s379, 1
        %p381 = scmp.lt.s32.totalorder %s21, 1
        %s382 = scalar_select %p381, %s21, 1
        %p383 = scmp.lt.s32.totalorder %s380, 17
        %s384 = scalar_select %p383, %s380, 17
        %s385 = smul.addr %s384, 3
        %s386 = smul.addr %s382, 54
        %s387 = sadd.s32 %s385, %s386
        %s388 = smul.addr %s387, 8
        %s389 = scalar_lea.vmem %s2, %s388
        %s390 = sadd.s32 %s22, 1
        %s391 = smul.u32 %s390, 8
        %s392 = sadd.s32 %s391, 1
        %s393 = smul.u32 8, %s22
        %p394 = scmp.lt.s32.totalorder %s21, 1
        %s395 = scalar_select %p394, %s21, 1
        %p396 = scmp.lt.s32.totalorder %s22, 1
        %s397 = scalar_select %p396, %s22, 1
        %s398 = smul.addr %s395, 2
        %s399 = sadd.s32 %s397, %s398
        %s400 = smul.addr %s399, 2
        %s401 = scalar_lea.vmem %s5, %s400
        %v402 = vld [vmem:[%s358] sm:$0xff]
        %v403 = vld [vmem:[%s358 + $0x8] sm:$0xff]
        %v404 = vld [vmem:[%s358 + $0x10] sm:$0x3]
        %v405 = vld [vmem:[%s358 + $0x18] sm:$0xff]
        %v406 = vld [vmem:[%s358 + $0x20] sm:$0xff]
        %v407 = vld [vmem:[%s358 + $0x28] sm:$0x3]
        %v408 = vld [vmem:[%s358 + $0x30] sm:$0xff]
        %v409 = vld [vmem:[%s358 + $0x38] sm:$0xff]
        %v410 = vld [vmem:[%s358 + $0x40] sm:$0x3]
        %v411 = vld [vmem:[%s358 + $0x48] sm:$0xff]
        %v412 = vld [vmem:[%s358 + $0x50] sm:$0xff]
        %v413 = vld [vmem:[%s358 + $0x58] sm:$0x3]
        %v414 = vld [vmem:[%s358 + $0x60] sm:$0xff]
        %v415 = vld [vmem:[%s358 + $0x68] sm:$0xff]
        %v416 = vld [vmem:[%s358 + $0x70] sm:$0x3]
        %v417 = vld [vmem:[%s358 + $0x78] sm:$0xff]
        %v418 = vld [vmem:[%s358 + $0x80] sm:$0xff]
        %v419 = vld [vmem:[%s358 + $0x88] sm:$0x3]
        %v420 = vld [vmem:[%s358 + $0x90] sm:$0xff]
        %v421 = vld [vmem:[%s358 + $0x98] sm:$0xff]
        %v422 = vld [vmem:[%s358 + $0xa0] sm:$0x3]
        %v423 = vld [vmem:[%s358 + $0xa8] sm:$0xff]
        %v424 = vld [vmem:[%s358 + $0xb0] sm:$0xff]
        %v425 = vld [vmem:[%s358 + $0xb8] sm:$0x3]
        %vm426 = vcmask 31744
        %427 = vst.msk [vmem:[#allocation2] sm:$0xff] %vm426, %v402
        %428 = vst.msk [vmem:[#allocation2 + $0x8] sm:$0xff] %vm426, %v403
        %vm429 = vcmask 25600
        %430 = vst.msk [vmem:[#allocation2 + $0x10] sm:$0x3] %vm429, %v404
        %431 = vst.msk [vmem:[#allocation2 + $0x18] sm:$0xff] %vm426, %v405
        %432 = vst.msk [vmem:[#allocation2 + $0x20] sm:$0xff] %vm426, %v406
        %433 = vst.msk [vmem:[#allocation2 + $0x28] sm:$0x3] %vm429, %v407
        %434 = vst.msk [vmem:[#allocation2 + $0x30] sm:$0xff] %vm426, %v408
        %435 = vst.msk [vmem:[#allocation2 + $0x38] sm:$0xff] %vm426, %v409
        %436 = vst.msk [vmem:[#allocation2 + $0x40] sm:$0x3] %vm429, %v410
        %437 = vst.msk [vmem:[#allocation2 + $0x48] sm:$0xff] %vm426, %v411
        %438 = vst.msk [vmem:[#allocation2 + $0x50] sm:$0xff] %vm426, %v412
        %439 = vst.msk [vmem:[#allocation2 + $0x58] sm:$0x3] %vm429, %v413
        %440 = vst.msk [vmem:[#allocation2 + $0x60] sm:$0xff] %vm426, %v414
        %441 = vst.msk [vmem:[#allocation2 + $0x68] sm:$0xff] %vm426, %v415
        %442 = vst.msk [vmem:[#allocation2 + $0x70] sm:$0x3] %vm429, %v416
        %443 = vst.msk [vmem:[#allocation2 + $0x78] sm:$0xff] %vm426, %v417
        %444 = vst.msk [vmem:[#allocation2 + $0x80] sm:$0xff] %vm426, %v418
        %445 = vst.msk [vmem:[#allocation2 + $0x88] sm:$0x3] %vm429, %v419
        %446 = vst.msk [vmem:[#allocation2 + $0x90] sm:$0xff] %vm426, %v420
        %447 = vst.msk [vmem:[#allocation2 + $0x98] sm:$0xff] %vm426, %v421
        %448 = vst.msk [vmem:[#allocation2 + $0xa0] sm:$0x3] %vm429, %v422
        %449 = vst.msk [vmem:[#allocation2 + $0xa8] sm:$0xff] %vm426, %v423
        %450 = vst.msk [vmem:[#allocation2 + $0xb0] sm:$0xff] %vm426, %v424
        %451 = vst.msk [vmem:[#allocation2 + $0xb8] sm:$0x3] %vm429, %v425
        %v452 = vld [vmem:[%s375] sm:$0xff]
        %v453 = vld [vmem:[%s375 + $0x8] sm:$0xff]
        %v454 = vld [vmem:[%s375 + $0x10] sm:$0x3]
        %s455 = scalar_lea.vmem [#allocation2], 192
        %456 = vst.msk [vmem:[%s455] sm:$0xff] %vm426, %v452
        %457 = vst.msk [vmem:[%s455 + $0x8] sm:$0xff] %vm426, %v453
        %458 = vst.msk [vmem:[%s455 + $0x10] sm:$0x3] %vm429, %v454
        %v459 = vld [vmem:[%s389] sm:$0xff]
        %v460 = vld [vmem:[%s389 + $0x8] sm:$0xff]
        %v461 = vld [vmem:[%s389 + $0x10] sm:$0x3]
        %s462 = scalar_lea.vmem [#allocation2], 216
        %463 = vst.msk [vmem:[%s462] sm:$0xff] %vm426, %v459
        %464 = vst.msk [vmem:[%s462 + $0x8] sm:$0xff] %vm426, %v460
        %465 = vst.msk [vmem:[%s462 + $0x10] sm:$0x3] %vm429, %v461
        %v466 = vld [vmem:[#allocation2] sm:$0xff]
        %v467 = vld [vmem:[#allocation2 + $0x8] sm:$0xff]
        %v468 = vld [vmem:[#allocation2 + $0x18] sm:$0xff]
        %v469 = vld [vmem:[#allocation2 + $0x20] sm:$0xff]
        %v470 = vld [vmem:[#allocation2 + $0x30] sm:$0xff]
        %v471 = vld [vmem:[#allocation2 + $0x38] sm:$0xff]
        %v472 = vld [vmem:[#allocation2 + $0x48] sm:$0xff]
        %v473 = vld [vmem:[#allocation2 + $0x50] sm:$0xff]
        %v474 = vld [vmem:[#allocation2 + $0x60] sm:$0xff]
        %v475 = vld [vmem:[#allocation2 + $0x68] sm:$0xff]
        %v476 = vld [vmem:[#allocation2 + $0x78] sm:$0xff]
        %v477 = vld [vmem:[#allocation2 + $0x80] sm:$0xff]
        %v478 = vld [vmem:[#allocation2 + $0x90] sm:$0xff]
        %v479 = vld [vmem:[#allocation2 + $0x98] sm:$0xff]
        %v480 = vld [vmem:[#allocation2 + $0xa8] sm:$0xff]
        %v481 = vld [vmem:[#allocation2 + $0xb0] sm:$0xff]
        %v482 = vld [vmem:[%s3] sm:$0xf]
        %s483 = scalar_lea.vmem %s3, 36
        %v484 = vld [vmem:[%s483] sm:$0xf]
        %v485 = vld [vmem:[#allocation2 + $0x1] sm:$0xff]
        %v486 = vld [vmem:[#allocation2 + $0x9] sm:$0xff]
        %v487 = vld [vmem:[#allocation2 + $0x19] sm:$0xff]
        %v488 = vld [vmem:[#allocation2 + $0x21] sm:$0xff]
        %v489 = vld [vmem:[#allocation2 + $0x31] sm:$0xff]
        %v490 = vld [vmem:[#allocation2 + $0x39] sm:$0xff]
        %v491 = vld [vmem:[#allocation2 + $0x49] sm:$0xff]
        %v492 = vld [vmem:[#allocation2 + $0x51] sm:$0xff]
        %v493 = vld [vmem:[#allocation2 + $0x61] sm:$0xff]
        %v494 = vld [vmem:[#allocation2 + $0x69] sm:$0xff]
        %v495 = vld [vmem:[#allocation2 + $0x79] sm:$0xff]
        %v496 = vld [vmem:[#allocation2 + $0x81] sm:$0xff]
        %v497 = vld [vmem:[#allocation2 + $0x91] sm:$0xff]
        %v498 = vld [vmem:[#allocation2 + $0x99] sm:$0xff]
        %v499 = vld [vmem:[#allocation2 + $0xa9] sm:$0xff]
        %v500 = vld [vmem:[#allocation2 + $0xb1] sm:$0xff]
        %s501 = scalar_lea.vmem %s3, 4
        %v502 = vld [vmem:[%s501] sm:$0xf]
        %v504 = vsel %vm426, %v485, 0
        %v507 = vsel %vm426, %v486, 0
        %v510 = vsel %vm426, %v487, 0
        %v513 = vsel %vm426, %v488, 0
        %v516 = vsel %vm426, %v489, 0
        %v519 = vsel %vm426, %v490, 0
        %v522 = vsel %vm426, %v491, 0
        %v525 = vsel %vm426, %v492, 0
        %v528 = vsel %vm426, %v493, 0
        %v531 = vsel %vm426, %v494, 0
        %v534 = vsel %vm426, %v495, 0
        %v537 = vsel %vm426, %v496, 0
        %v540 = vsel %vm426, %v497, 0
        %v543 = vsel %vm426, %v498, 0
        %v546 = vsel %vm426, %v499, 0
        %v549 = vsel %vm426, %v500, 0
        %vm551 = vcmask 1043456
        %v553 = vsel %vm551, %v502, 0
        %555 = vmatpush.msra.mxu0 0.0
        %556 = vmatpush.msra.mxu0 0.0
        %557 = vmatpush.msra.mxu0 0.0
        %558 = vmatpush.msra.mxu0 0.0
        %559 = vmatpush.msra.mxu0 0.0
        %560 = vmatpush.msra.mxu0 0.0
        %561 = vmatpush.msra.mxu0 0.0
        %562 = vmatpush.msra.mxu0 0.0
        %563 = vmatpush.msra.mxu0 0.0
        %564 = vmatpush.msra.mxu0 0.0
        %565 = vmatpush.msra.mxu0 0.0
        %566 = vmatpush.msra.mxu0 0.0
        %567 = vmatpush.msra.mxu0 0.0
        %568 = vmatpush.msra.mxu0 0.0
        %569 = vmatpush.msra.mxu0 0.0
        %570 = vmatpush.msra.mxu0 %v553
        %571 = vmatmul.f32.gmra.mxu0 %v504
        %v572 = vpop.f32.mrf.mxu0
        %v573 = vadd.f32 0.0, %v572
        %574 = vmatmul.f32.gmra.mxu0 %v507
        %v575 = vpop.f32.mrf.mxu0
        %v576 = vadd.f32 0.0, %v575
        %577 = vmatmul.f32.gmra.mxu0 %v510
        %v578 = vpop.f32.mrf.mxu0
        %v579 = vadd.f32 0.0, %v578
        %580 = vmatmul.f32.gmra.mxu0 %v513
        %v581 = vpop.f32.mrf.mxu0
        %v582 = vadd.f32 0.0, %v581
        %583 = vmatmul.f32.gmra.mxu0 %v516
        %v584 = vpop.f32.mrf.mxu0
        %v585 = vadd.f32 0.0, %v584
        %586 = vmatmul.f32.gmra.mxu0 %v519
        %v587 = vpop.f32.mrf.mxu0
        %v588 = vadd.f32 0.0, %v587
        %589 = vmatmul.f32.gmra.mxu0 %v522
        %v590 = vpop.f32.mrf.mxu0
        %v591 = vadd.f32 0.0, %v590
        %592 = vmatmul.f32.gmra.mxu0 %v525
        %v593 = vpop.f32.mrf.mxu0
        %v594 = vadd.f32 0.0, %v593
        %595 = vmatmul.f32.gmra.mxu0 %v528
        %v596 = vpop.f32.mrf.mxu0
        %v597 = vadd.f32 0.0, %v596
        %598 = vmatmul.f32.gmra.mxu0 %v531
        %v599 = vpop.f32.mrf.mxu0
        %v600 = vadd.f32 0.0, %v599
        %601 = vmatmul.f32.gmra.mxu0 %v534
        %v602 = vpop.f32.mrf.mxu0
        %v603 = vadd.f32 0.0, %v602
        %604 = vmatmul.f32.gmra.mxu0 %v537
        %v605 = vpop.f32.mrf.mxu0
        %v606 = vadd.f32 0.0, %v605
        %607 = vmatmul.f32.gmra.mxu0 %v540
        %v608 = vpop.f32.mrf.mxu0
        %v609 = vadd.f32 0.0, %v608
        %610 = vmatmul.f32.gmra.mxu0 %v543
        %v611 = vpop.f32.mrf.mxu0
        %v612 = vadd.f32 0.0, %v611
        %613 = vmatmul.f32.gmra.mxu0 %v546
        %v614 = vpop.f32.mrf.mxu0
        %v615 = vadd.f32 0.0, %v614
        %616 = vmatmul.f32.gmra.mxu0 %v549
        %v617 = vpop.f32.mrf.mxu0
        %v618 = vadd.f32 0.0, %v617
        %619 = vdwg.mxu0
        %s620 = scalar_lea.vmem %s3, 40
        %v621 = vld [vmem:[%s620] sm:$0xf]
        %v623 = vsel %vm551, %v621, 0
        %625 = vmatpush.msra.mxu0 0.0
        %626 = vmatpush.msra.mxu0 0.0
        %627 = vmatpush.msra.mxu0 0.0
        %628 = vmatpush.msra.mxu0 0.0
        %629 = vmatpush.msra.mxu0 0.0
        %630 = vmatpush.msra.mxu0 0.0
        %631 = vmatpush.msra.mxu0 0.0
        %632 = vmatpush.msra.mxu0 0.0
        %633 = vmatpush.msra.mxu0 0.0
        %634 = vmatpush.msra.mxu0 0.0
        %635 = vmatpush.msra.mxu0 0.0
        %636 = vmatpush.msra.mxu0 0.0
        %637 = vmatpush.msra.mxu0 0.0
        %638 = vmatpush.msra.mxu0 0.0
        %639 = vmatpush.msra.mxu0 0.0
        %640 = vmatpush.msra.mxu0 %v623
        %641 = vmatmul.f32.gmra.mxu0 %v504
        %v642 = vpop.f32.mrf.mxu0
        %v643 = vadd.f32 0.0, %v642
        %644 = vmatmul.f32.gmra.mxu0 %v507
        %v645 = vpop.f32.mrf.mxu0
        %v646 = vadd.f32 0.0, %v645
        %647 = vmatmul.f32.gmra.mxu0 %v510
        %v648 = vpop.f32.mrf.mxu0
        %v649 = vadd.f32 0.0, %v648
        %650 = vmatmul.f32.gmra.mxu0 %v513
        %v651 = vpop.f32.mrf.mxu0
        %v652 = vadd.f32 0.0, %v651
        %653 = vmatmul.f32.gmra.mxu0 %v516
        %v654 = vpop.f32.mrf.mxu0
        %v655 = vadd.f32 0.0, %v654
        %656 = vmatmul.f32.gmra.mxu0 %v519
        %v657 = vpop.f32.mrf.mxu0
        %v658 = vadd.f32 0.0, %v657
        %659 = vmatmul.f32.gmra.mxu0 %v522
        %v660 = vpop.f32.mrf.mxu0
        %v661 = vadd.f32 0.0, %v660
        %662 = vmatmul.f32.gmra.mxu0 %v525
        %v663 = vpop.f32.mrf.mxu0
        %v664 = vadd.f32 0.0, %v663
        %665 = vmatmul.f32.gmra.mxu0 %v528
        %v666 = vpop.f32.mrf.mxu0
        %v667 = vadd.f32 0.0, %v666
        %668 = vmatmul.f32.gmra.mxu0 %v531
        %v669 = vpop.f32.mrf.mxu0
        %v670 = vadd.f32 0.0, %v669
        %671 = vmatmul.f32.gmra.mxu0 %v534
        %v672 = vpop.f32.mrf.mxu0
        %v673 = vadd.f32 0.0, %v672
        %674 = vmatmul.f32.gmra.mxu0 %v537
        %v675 = vpop.f32.mrf.mxu0
        %v676 = vadd.f32 0.0, %v675
        %677 = vmatmul.f32.gmra.mxu0 %v540
        %v678 = vpop.f32.mrf.mxu0
        %v679 = vadd.f32 0.0, %v678
        %680 = vmatmul.f32.gmra.mxu0 %v543
        %v681 = vpop.f32.mrf.mxu0
        %v682 = vadd.f32 0.0, %v681
        %683 = vmatmul.f32.gmra.mxu0 %v546
        %v684 = vpop.f32.mrf.mxu0
        %v685 = vadd.f32 0.0, %v684
        %686 = vmatmul.f32.gmra.mxu0 %v549
        %v687 = vpop.f32.mrf.mxu0
        %v688 = vadd.f32 0.0, %v687
        %689 = vdwg.mxu0
        %v691 = vsel %vm426, %v466, 0
        %v694 = vsel %vm426, %v467, 0
        %v697 = vsel %vm426, %v468, 0
        %v700 = vsel %vm426, %v469, 0
        %v703 = vsel %vm426, %v470, 0
        %v706 = vsel %vm426, %v471, 0
        %v709 = vsel %vm426, %v472, 0
        %v712 = vsel %vm426, %v473, 0
        %v715 = vsel %vm426, %v474, 0
        %v718 = vsel %vm426, %v475, 0
        %v721 = vsel %vm426, %v476, 0
        %v724 = vsel %vm426, %v477, 0
        %v727 = vsel %vm426, %v478, 0
        %v730 = vsel %vm426, %v479, 0
        %v733 = vsel %vm426, %v480, 0
        %v736 = vsel %vm426, %v481, 0
        %v739 = vsel %vm551, %v482, 0
        %741 = vmatpush.msra.mxu0 0.0
        %742 = vmatpush.msra.mxu0 0.0
        %743 = vmatpush.msra.mxu0 0.0
        %744 = vmatpush.msra.mxu0 0.0
        %745 = vmatpush.msra.mxu0 0.0
        %746 = vmatpush.msra.mxu0 0.0
        %747 = vmatpush.msra.mxu0 0.0
        %748 = vmatpush.msra.mxu0 0.0
        %749 = vmatpush.msra.mxu0 0.0
        %750 = vmatpush.msra.mxu0 0.0
        %751 = vmatpush.msra.mxu0 0.0
        %752 = vmatpush.msra.mxu0 0.0
        %753 = vmatpush.msra.mxu0 0.0
        %754 = vmatpush.msra.mxu0 0.0
        %755 = vmatpush.msra.mxu0 0.0
        %756 = vmatpush.msra.mxu0 %v739
        %757 = vmatmul.f32.gmra.mxu0 %v691
        %v758 = vpop.f32.mrf.mxu0
        %v759 = vadd.f32 %v573, %v758
        %760 = vmatmul.f32.gmra.mxu0 %v694
        %v761 = vpop.f32.mrf.mxu0
        %v762 = vadd.f32 %v576, %v761
        %763 = vmatmul.f32.gmra.mxu0 %v697
        %v764 = vpop.f32.mrf.mxu0
        %v765 = vadd.f32 %v579, %v764
        %766 = vmatmul.f32.gmra.mxu0 %v700
        %v767 = vpop.f32.mrf.mxu0
        %v768 = vadd.f32 %v582, %v767
        %769 = vmatmul.f32.gmra.mxu0 %v703
        %v770 = vpop.f32.mrf.mxu0
        %v771 = vadd.f32 %v585, %v770
        %772 = vmatmul.f32.gmra.mxu0 %v706
        %v773 = vpop.f32.mrf.mxu0
        %v774 = vadd.f32 %v588, %v773
        %775 = vmatmul.f32.gmra.mxu0 %v709
        %v776 = vpop.f32.mrf.mxu0
        %v777 = vadd.f32 %v591, %v776
        %778 = vmatmul.f32.gmra.mxu0 %v712
        %v779 = vpop.f32.mrf.mxu0
        %v780 = vadd.f32 %v594, %v779
        %781 = vmatmul.f32.gmra.mxu0 %v715
        %v782 = vpop.f32.mrf.mxu0
        %v783 = vadd.f32 %v597, %v782
        %784 = vmatmul.f32.gmra.mxu0 %v718
        %v785 = vpop.f32.mrf.mxu0
        %v786 = vadd.f32 %v600, %v785
        %787 = vmatmul.f32.gmra.mxu0 %v721
        %v788 = vpop.f32.mrf.mxu0
        %v789 = vadd.f32 %v603, %v788
        %790 = vmatmul.f32.gmra.mxu0 %v724
        %v791 = vpop.f32.mrf.mxu0
        %v792 = vadd.f32 %v606, %v791
        %793 = vmatmul.f32.gmra.mxu0 %v727
        %v794 = vpop.f32.mrf.mxu0
        %v795 = vadd.f32 %v609, %v794
        %796 = vmatmul.f32.gmra.mxu0 %v730
        %v797 = vpop.f32.mrf.mxu0
        %v798 = vadd.f32 %v612, %v797
        %799 = vmatmul.f32.gmra.mxu0 %v733
        %v800 = vpop.f32.mrf.mxu0
        %v801 = vadd.f32 %v615, %v800
        %802 = vmatmul.f32.gmra.mxu0 %v736
        %v803 = vpop.f32.mrf.mxu0
        %v804 = vadd.f32 %v618, %v803
        %805 = vdwg.mxu0
        %v807 = vsel %vm551, %v484, 0
        %809 = vmatpush.msra.mxu0 0.0
        %810 = vmatpush.msra.mxu0 0.0
        %811 = vmatpush.msra.mxu0 0.0
        %812 = vmatpush.msra.mxu0 0.0
        %813 = vmatpush.msra.mxu0 0.0
        %814 = vmatpush.msra.mxu0 0.0
        %815 = vmatpush.msra.mxu0 0.0
        %816 = vmatpush.msra.mxu0 0.0
        %817 = vmatpush.msra.mxu0 0.0
        %818 = vmatpush.msra.mxu0 0.0
        %819 = vmatpush.msra.mxu0 0.0
        %820 = vmatpush.msra.mxu0 0.0
        %821 = vmatpush.msra.mxu0 0.0
        %822 = vmatpush.msra.mxu0 0.0
        %823 = vmatpush.msra.mxu0 0.0
        %824 = vmatpush.msra.mxu0 %v807
        %825 = vmatmul.f32.gmra.mxu0 %v691
        %v826 = vpop.f32.mrf.mxu0
        %v827 = vadd.f32 %v643, %v826
        %828 = vmatmul.f32.gmra.mxu0 %v694
        %v829 = vpop.f32.mrf.mxu0
        %v830 = vadd.f32 %v646, %v829
        %831 = vmatmul.f32.gmra.mxu0 %v697
        %v832 = vpop.f32.mrf.mxu0
        %v833 = vadd.f32 %v649, %v832
        %834 = vmatmul.f32.gmra.mxu0 %v700
        %v835 = vpop.f32.mrf.mxu0
        %v836 = vadd.f32 %v652, %v835
        %837 = vmatmul.f32.gmra.mxu0 %v703
        %v838 = vpop.f32.mrf.mxu0
        %v839 = vadd.f32 %v655, %v838
        %840 = vmatmul.f32.gmra.mxu0 %v706
        %v841 = vpop.f32.mrf.mxu0
        %v842 = vadd.f32 %v658, %v841
        %843 = vmatmul.f32.gmra.mxu0 %v709
        %v844 = vpop.f32.mrf.mxu0
        %v845 = vadd.f32 %v661, %v844
        %846 = vmatmul.f32.gmra.mxu0 %v712
        %v847 = vpop.f32.mrf.mxu0
        %v848 = vadd.f32 %v664, %v847
        %849 = vmatmul.f32.gmra.mxu0 %v715
        %v850 = vpop.f32.mrf.mxu0
        %v851 = vadd.f32 %v667, %v850
        %852 = vmatmul.f32.gmra.mxu0 %v718
        %v853 = vpop.f32.mrf.mxu0
        %v854 = vadd.f32 %v670, %v853
        %855 = vmatmul.f32.gmra.mxu0 %v721
        %v856 = vpop.f32.mrf.mxu0
        %v857 = vadd.f32 %v673, %v856
        %858 = vmatmul.f32.gmra.mxu0 %v724
        %v859 = vpop.f32.mrf.mxu0
        %v860 = vadd.f32 %v676, %v859
        %861 = vmatmul.f32.gmra.mxu0 %v727
        %v862 = vpop.f32.mrf.mxu0
        %v863 = vadd.f32 %v679, %v862
        %864 = vmatmul.f32.gmra.mxu0 %v730
        %v865 = vpop.f32.mrf.mxu0
        %v866 = vadd.f32 %v682, %v865
        %867 = vmatmul.f32.gmra.mxu0 %v733
        %v868 = vpop.f32.mrf.mxu0
        %v869 = vadd.f32 %v685, %v868
        %870 = vmatmul.f32.gmra.mxu0 %v736
        %v871 = vpop.f32.mrf.mxu0
        %v872 = vadd.f32 %v688, %v871
        %873 = vdwg.mxu0
        %v874 = vld [vmem:[#allocation2 + $0x2] sm:$0xff]
        %v875 = vld [vmem:[#allocation2 + $0xa] sm:$0xff]
        %v876 = vld [vmem:[#allocation2 + $0x1a] sm:$0xff]
        %v877 = vld [vmem:[#allocation2 + $0x22] sm:$0xff]
        %v878 = vld [vmem:[#allocation2 + $0x32] sm:$0xff]
        %v879 = vld [vmem:[#allocation2 + $0x3a] sm:$0xff]
        %v880 = vld [vmem:[#allocation2 + $0x4a] sm:$0xff]
        %v881 = vld [vmem:[#allocation2 + $0x52] sm:$0xff]
        %v882 = vld [vmem:[#allocation2 + $0x62] sm:$0xff]
        %v883 = vld [vmem:[#allocation2 + $0x6a] sm:$0xff]
        %v884 = vld [vmem:[#allocation2 + $0x7a] sm:$0xff]
        %v885 = vld [vmem:[#allocation2 + $0x82] sm:$0xff]
        %v886 = vld [vmem:[#allocation2 + $0x92] sm:$0xff]
        %v887 = vld [vmem:[#allocation2 + $0x9a] sm:$0xff]
        %v888 = vld [vmem:[#allocation2 + $0xaa] sm:$0xff]
        %v889 = vld [vmem:[#allocation2 + $0xb2] sm:$0xff]
        %s890 = scalar_lea.vmem %s3, 8
        %v891 = vld [vmem:[%s890] sm:$0xf]
        %v893 = vsel %vm426, %v874, 0
        %v896 = vsel %vm426, %v875, 0
        %v899 = vsel %vm426, %v876, 0
        %v902 = vsel %vm426, %v877, 0
        %v905 = vsel %vm426, %v878, 0
        %v908 = vsel %vm426, %v879, 0
        %v911 = vsel %vm426, %v880, 0
        %v914 = vsel %vm426, %v881, 0
        %v917 = vsel %vm426, %v882, 0
        %v920 = vsel %vm426, %v883, 0
        %v923 = vsel %vm426, %v884, 0
        %v926 = vsel %vm426, %v885, 0
        %v929 = vsel %vm426, %v886, 0
        %v932 = vsel %vm426, %v887, 0
        %v935 = vsel %vm426, %v888, 0
        %v938 = vsel %vm426, %v889, 0
        %v941 = vsel %vm551, %v891, 0
        %943 = vmatpush.msra.mxu0 0.0
        %944 = vmatpush.msra.mxu0 0.0
        %945 = vmatpush.msra.mxu0 0.0
        %946 = vmatpush.msra.mxu0 0.0
        %947 = vmatpush.msra.mxu0 0.0
        %948 = vmatpush.msra.mxu0 0.0
        %949 = vmatpush.msra.mxu0 0.0
        %950 = vmatpush.msra.mxu0 0.0
        %951 = vmatpush.msra.mxu0 0.0
        %952 = vmatpush.msra.mxu0 0.0
        %953 = vmatpush.msra.mxu0 0.0
        %954 = vmatpush.msra.mxu0 0.0
        %955 = vmatpush.msra.mxu0 0.0
        %956 = vmatpush.msra.mxu0 0.0
        %957 = vmatpush.msra.mxu0 0.0
        %958 = vmatpush.msra.mxu0 %v941
        %959 = vmatmul.f32.gmra.mxu0 %v893
        %v960 = vpop.f32.mrf.mxu0
        %v961 = vadd.f32 0.0, %v960
        %962 = vmatmul.f32.gmra.mxu0 %v896
        %v963 = vpop.f32.mrf.mxu0
        %v964 = vadd.f32 0.0, %v963
        %965 = vmatmul.f32.gmra.mxu0 %v899
        %v966 = vpop.f32.mrf.mxu0
        %v967 = vadd.f32 0.0, %v966
        %968 = vmatmul.f32.gmra.mxu0 %v902
        %v969 = vpop.f32.mrf.mxu0
        %v970 = vadd.f32 0.0, %v969
        %971 = vmatmul.f32.gmra.mxu0 %v905
        %v972 = vpop.f32.mrf.mxu0
        %v973 = vadd.f32 0.0, %v972
        %974 = vmatmul.f32.gmra.mxu0 %v908
        %v975 = vpop.f32.mrf.mxu0
        %v976 = vadd.f32 0.0, %v975
        %977 = vmatmul.f32.gmra.mxu0 %v911
        %v978 = vpop.f32.mrf.mxu0
        %v979 = vadd.f32 0.0, %v978
        %980 = vmatmul.f32.gmra.mxu0 %v914
        %v981 = vpop.f32.mrf.mxu0
        %v982 = vadd.f32 0.0, %v981
        %983 = vmatmul.f32.gmra.mxu0 %v917
        %v984 = vpop.f32.mrf.mxu0
        %v985 = vadd.f32 0.0, %v984
        %986 = vmatmul.f32.gmra.mxu0 %v920
        %v987 = vpop.f32.mrf.mxu0
        %v988 = vadd.f32 0.0, %v987
        %989 = vmatmul.f32.gmra.mxu0 %v923
        %v990 = vpop.f32.mrf.mxu0
        %v991 = vadd.f32 0.0, %v990
        %992 = vmatmul.f32.gmra.mxu0 %v926
        %v993 = vpop.f32.mrf.mxu0
        %v994 = vadd.f32 0.0, %v993
        %995 = vmatmul.f32.gmra.mxu0 %v929
        %v996 = vpop.f32.mrf.mxu0
        %v997 = vadd.f32 0.0, %v996
        %998 = vmatmul.f32.gmra.mxu0 %v932
        %v999 = vpop.f32.mrf.mxu0
        %v1000 = vadd.f32 0.0, %v999
        %1001 = vmatmul.f32.gmra.mxu0 %v935
        %v1002 = vpop.f32.mrf.mxu0
        %v1003 = vadd.f32 0.0, %v1002
        %1004 = vmatmul.f32.gmra.mxu0 %v938
        %v1005 = vpop.f32.mrf.mxu0
        %v1006 = vadd.f32 0.0, %v1005
        %1007 = vdwg.mxu0
        %s1008 = scalar_lea.vmem %s3, 44
        %v1009 = vld [vmem:[%s1008] sm:$0xf]
        %v1011 = vsel %vm551, %v1009, 0
        %1013 = vmatpush.msra.mxu0 0.0
        %1014 = vmatpush.msra.mxu0 0.0
        %1015 = vmatpush.msra.mxu0 0.0
        %1016 = vmatpush.msra.mxu0 0.0
        %1017 = vmatpush.msra.mxu0 0.0
        %1018 = vmatpush.msra.mxu0 0.0
        %1019 = vmatpush.msra.mxu0 0.0
        %1020 = vmatpush.msra.mxu0 0.0
        %1021 = vmatpush.msra.mxu0 0.0
        %1022 = vmatpush.msra.mxu0 0.0
        %1023 = vmatpush.msra.mxu0 0.0
        %1024 = vmatpush.msra.mxu0 0.0
        %1025 = vmatpush.msra.mxu0 0.0
        %1026 = vmatpush.msra.mxu0 0.0
        %1027 = vmatpush.msra.mxu0 0.0
        %1028 = vmatpush.msra.mxu0 %v1011
        %1029 = vmatmul.f32.gmra.mxu0 %v893
        %v1030 = vpop.f32.mrf.mxu0
        %v1031 = vadd.f32 0.0, %v1030
        %1032 = vmatmul.f32.gmra.mxu0 %v896
        %v1033 = vpop.f32.mrf.mxu0
        %v1034 = vadd.f32 0.0, %v1033
        %1035 = vmatmul.f32.gmra.mxu0 %v899
        %v1036 = vpop.f32.mrf.mxu0
        %v1037 = vadd.f32 0.0, %v1036
        %1038 = vmatmul.f32.gmra.mxu0 %v902
        %v1039 = vpop.f32.mrf.mxu0
        %v1040 = vadd.f32 0.0, %v1039
        %1041 = vmatmul.f32.gmra.mxu0 %v905
        %v1042 = vpop.f32.mrf.mxu0
        %v1043 = vadd.f32 0.0, %v1042
        %1044 = vmatmul.f32.gmra.mxu0 %v908
        %v1045 = vpop.f32.mrf.mxu0
        %v1046 = vadd.f32 0.0, %v1045
        %1047 = vmatmul.f32.gmra.mxu0 %v911
        %v1048 = vpop.f32.mrf.mxu0
        %v1049 = vadd.f32 0.0, %v1048
        %1050 = vmatmul.f32.gmra.mxu0 %v914
        %v1051 = vpop.f32.mrf.mxu0
        %v1052 = vadd.f32 0.0, %v1051
        %1053 = vmatmul.f32.gmra.mxu0 %v917
        %v1054 = vpop.f32.mrf.mxu0
        %v1055 = vadd.f32 0.0, %v1054
        %1056 = vmatmul.f32.gmra.mxu0 %v920
        %v1057 = vpop.f32.mrf.mxu0
        %v1058 = vadd.f32 0.0, %v1057
        %1059 = vmatmul.f32.gmra.mxu0 %v923
        %v1060 = vpop.f32.mrf.mxu0
        %v1061 = vadd.f32 0.0, %v1060
        %1062 = vmatmul.f32.gmra.mxu0 %v926
        %v1063 = vpop.f32.mrf.mxu0
        %v1064 = vadd.f32 0.0, %v1063
        %1065 = vmatmul.f32.gmra.mxu0 %v929
        %v1066 = vpop.f32.mrf.mxu0
        %v1067 = vadd.f32 0.0, %v1066
        %1068 = vmatmul.f32.gmra.mxu0 %v932
        %v1069 = vpop.f32.mrf.mxu0
        %v1070 = vadd.f32 0.0, %v1069
        %1071 = vmatmul.f32.gmra.mxu0 %v935
        %v1072 = vpop.f32.mrf.mxu0
        %v1073 = vadd.f32 0.0, %v1072
        %1074 = vmatmul.f32.gmra.mxu0 %v938
        %v1075 = vpop.f32.mrf.mxu0
        %v1076 = vadd.f32 0.0, %v1075
        %1077 = vdwg.mxu0
        %v1078 = vadd.f32 %v759, %v961
        %v1079 = vadd.f32 %v762, %v964
        %v1080 = vadd.f32 %v765, %v967
        %v1081 = vadd.f32 %v768, %v970
        %v1082 = vadd.f32 %v771, %v973
        %v1083 = vadd.f32 %v774, %v976
        %v1084 = vadd.f32 %v777, %v979
        %v1085 = vadd.f32 %v780, %v982
        %v1086 = vadd.f32 %v783, %v985
        %v1087 = vadd.f32 %v786, %v988
        %v1088 = vadd.f32 %v789, %v991
        %v1089 = vadd.f32 %v792, %v994
        %v1090 = vadd.f32 %v795, %v997
        %v1091 = vadd.f32 %v798, %v1000
        %v1092 = vadd.f32 %v801, %v1003
        %v1093 = vadd.f32 %v804, %v1006
        %v1094 = vadd.f32 %v827, %v1031
        %v1095 = vadd.f32 %v830, %v1034
        %v1096 = vadd.f32 %v833, %v1037
        %v1097 = vadd.f32 %v836, %v1040
        %v1098 = vadd.f32 %v839, %v1043
        %v1099 = vadd.f32 %v842, %v1046
        %v1100 = vadd.f32 %v845, %v1049
        %v1101 = vadd.f32 %v848, %v1052
        %v1102 = vadd.f32 %v851, %v1055
        %v1103 = vadd.f32 %v854, %v1058
        %v1104 = vadd.f32 %v857, %v1061
        %v1105 = vadd.f32 %v860, %v1064
        %v1106 = vadd.f32 %v863, %v1067
        %v1107 = vadd.f32 %v866, %v1070
        %v1108 = vadd.f32 %v869, %v1073
        %v1109 = vadd.f32 %v872, %v1076
        %s1110 = scalar_lea.vmem [#allocation2], 24
        %v1111 = vld [vmem:[%s1110] sm:$0xff]
        %v1112 = vld [vmem:[%s1110 + $0x8] sm:$0xff]
        %v1113 = vld [vmem:[%s1110 + $0x18] sm:$0xff]
        %v1114 = vld [vmem:[%s1110 + $0x20] sm:$0xff]
        %v1115 = vld [vmem:[%s1110 + $0x30] sm:$0xff]
        %v1116 = vld [vmem:[%s1110 + $0x38] sm:$0xff]
        %v1117 = vld [vmem:[%s1110 + $0x48] sm:$0xff]
        %v1118 = vld [vmem:[%s1110 + $0x50] sm:$0xff]
        %v1119 = vld [vmem:[%s1110 + $0x60] sm:$0xff]
        %v1120 = vld [vmem:[%s1110 + $0x68] sm:$0xff]
        %v1121 = vld [vmem:[%s1110 + $0x78] sm:$0xff]
        %v1122 = vld [vmem:[%s1110 + $0x80] sm:$0xff]
        %v1123 = vld [vmem:[%s1110 + $0x90] sm:$0xff]
        %v1124 = vld [vmem:[%s1110 + $0x98] sm:$0xff]
        %v1125 = vld [vmem:[%s1110 + $0xa8] sm:$0xff]
        %v1126 = vld [vmem:[%s1110 + $0xb0] sm:$0xff]
        %s1127 = scalar_lea.vmem %s3, 12
        %v1128 = vld [vmem:[%s1127] sm:$0xf]
        %v1130 = vsel %vm426, %v1111, 0
        %v1133 = vsel %vm426, %v1112, 0
        %v1136 = vsel %vm426, %v1113, 0
        %v1139 = vsel %vm426, %v1114, 0
        %v1142 = vsel %vm426, %v1115, 0
        %v1145 = vsel %vm426, %v1116, 0
        %v1148 = vsel %vm426, %v1117, 0
        %v1151 = vsel %vm426, %v1118, 0
        %v1154 = vsel %vm426, %v1119, 0
        %v1157 = vsel %vm426, %v1120, 0
        %v1160 = vsel %vm426, %v1121, 0
        %v1163 = vsel %vm426, %v1122, 0
        %v1166 = vsel %vm426, %v1123, 0
        %v1169 = vsel %vm426, %v1124, 0
        %v1172 = vsel %vm426, %v1125, 0
        %v1175 = vsel %vm426, %v1126, 0
        %v1178 = vsel %vm551, %v1128, 0
        %1180 = vmatpush.msra.mxu0 0.0
        %1181 = vmatpush.msra.mxu0 0.0
        %1182 = vmatpush.msra.mxu0 0.0
        %1183 = vmatpush.msra.mxu0 0.0
        %1184 = vmatpush.msra.mxu0 0.0
        %1185 = vmatpush.msra.mxu0 0.0
        %1186 = vmatpush.msra.mxu0 0.0
        %1187 = vmatpush.msra.mxu0 0.0
        %1188 = vmatpush.msra.mxu0 0.0
        %1189 = vmatpush.msra.mxu0 0.0
        %1190 = vmatpush.msra.mxu0 0.0
        %1191 = vmatpush.msra.mxu0 0.0
        %1192 = vmatpush.msra.mxu0 0.0
        %1193 = vmatpush.msra.mxu0 0.0
        %1194 = vmatpush.msra.mxu0 0.0
        %1195 = vmatpush.msra.mxu0 %v1178
        %1196 = vmatmul.f32.gmra.mxu0 %v1130
        %v1197 = vpop.f32.mrf.mxu0
        %v1198 = vadd.f32 0.0, %v1197
        %1199 = vmatmul.f32.gmra.mxu0 %v1133
        %v1200 = vpop.f32.mrf.mxu0
        %v1201 = vadd.f32 0.0, %v1200
        %1202 = vmatmul.f32.gmra.mxu0 %v1136
        %v1203 = vpop.f32.mrf.mxu0
        %v1204 = vadd.f32 0.0, %v1203
        %1205 = vmatmul.f32.gmra.mxu0 %v1139
        %v1206 = vpop.f32.mrf.mxu0
        %v1207 = vadd.f32 0.0, %v1206
        %1208 = vmatmul.f32.gmra.mxu0 %v1142
        %v1209 = vpop.f32.mrf.mxu0
        %v1210 = vadd.f32 0.0, %v1209
        %1211 = vmatmul.f32.gmra.mxu0 %v1145
        %v1212 = vpop.f32.mrf.mxu0
        %v1213 = vadd.f32 0.0, %v1212
        %1214 = vmatmul.f32.gmra.mxu0 %v1148
        %v1215 = vpop.f32.mrf.mxu0
        %v1216 = vadd.f32 0.0, %v1215
        %1217 = vmatmul.f32.gmra.mxu0 %v1151
        %v1218 = vpop.f32.mrf.mxu0
        %v1219 = vadd.f32 0.0, %v1218
        %1220 = vmatmul.f32.gmra.mxu0 %v1154
        %v1221 = vpop.f32.mrf.mxu0
        %v1222 = vadd.f32 0.0, %v1221
        %1223 = vmatmul.f32.gmra.mxu0 %v1157
        %v1224 = vpop.f32.mrf.mxu0
        %v1225 = vadd.f32 0.0, %v1224
        %1226 = vmatmul.f32.gmra.mxu0 %v1160
        %v1227 = vpop.f32.mrf.mxu0
        %v1228 = vadd.f32 0.0, %v1227
        %1229 = vmatmul.f32.gmra.mxu0 %v1163
        %v1230 = vpop.f32.mrf.mxu0
        %v1231 = vadd.f32 0.0, %v1230
        %1232 = vmatmul.f32.gmra.mxu0 %v1166
        %v1233 = vpop.f32.mrf.mxu0
        %v1234 = vadd.f32 0.0, %v1233
        %1235 = vmatmul.f32.gmra.mxu0 %v1169
        %v1236 = vpop.f32.mrf.mxu0
        %v1237 = vadd.f32 0.0, %v1236
        %1238 = vmatmul.f32.gmra.mxu0 %v1172
        %v1239 = vpop.f32.mrf.mxu0
        %v1240 = vadd.f32 0.0, %v1239
        %1241 = vmatmul.f32.gmra.mxu0 %v1175
        %v1242 = vpop.f32.mrf.mxu0
        %v1243 = vadd.f32 0.0, %v1242
        %1244 = vdwg.mxu0
        %s1245 = scalar_lea.vmem %s3, 48
        %v1246 = vld [vmem:[%s1245] sm:$0xf]
        %v1248 = vsel %vm551, %v1246, 0
        %1250 = vmatpush.msra.mxu0 0.0
        %1251 = vmatpush.msra.mxu0 0.0
        %1252 = vmatpush.msra.mxu0 0.0
        %1253 = vmatpush.msra.mxu0 0.0
        %1254 = vmatpush.msra.mxu0 0.0
        %1255 = vmatpush.msra.mxu0 0.0
        %1256 = vmatpush.msra.mxu0 0.0
        %1257 = vmatpush.msra.mxu0 0.0
        %1258 = vmatpush.msra.mxu0 0.0
        %1259 = vmatpush.msra.mxu0 0.0
        %1260 = vmatpush.msra.mxu0 0.0
        %1261 = vmatpush.msra.mxu0 0.0
        %1262 = vmatpush.msra.mxu0 0.0
        %1263 = vmatpush.msra.mxu0 0.0
        %1264 = vmatpush.msra.mxu0 0.0
        %1265 = vmatpush.msra.mxu0 %v1248
        %1266 = vmatmul.f32.gmra.mxu0 %v1130
        %v1267 = vpop.f32.mrf.mxu0
        %v1268 = vadd.f32 0.0, %v1267
        %1269 = vmatmul.f32.gmra.mxu0 %v1133
        %v1270 = vpop.f32.mrf.mxu0
        %v1271 = vadd.f32 0.0, %v1270
        %1272 = vmatmul.f32.gmra.mxu0 %v1136
        %v1273 = vpop.f32.mrf.mxu0
        %v1274 = vadd.f32 0.0, %v1273
        %1275 = vmatmul.f32.gmra.mxu0 %v1139
        %v1276 = vpop.f32.mrf.mxu0
        %v1277 = vadd.f32 0.0, %v1276
        %1278 = vmatmul.f32.gmra.mxu0 %v1142
        %v1279 = vpop.f32.mrf.mxu0
        %v1280 = vadd.f32 0.0, %v1279
        %1281 = vmatmul.f32.gmra.mxu0 %v1145
        %v1282 = vpop.f32.mrf.mxu0
        %v1283 = vadd.f32 0.0, %v1282
        %1284 = vmatmul.f32.gmra.mxu0 %v1148
        %v1285 = vpop.f32.mrf.mxu0
        %v1286 = vadd.f32 0.0, %v1285
        %1287 = vmatmul.f32.gmra.mxu0 %v1151
        %v1288 = vpop.f32.mrf.mxu0
        %v1289 = vadd.f32 0.0, %v1288
        %1290 = vmatmul.f32.gmra.mxu0 %v1154
        %v1291 = vpop.f32.mrf.mxu0
        %v1292 = vadd.f32 0.0, %v1291
        %1293 = vmatmul.f32.gmra.mxu0 %v1157
        %v1294 = vpop.f32.mrf.mxu0
        %v1295 = vadd.f32 0.0, %v1294
        %1296 = vmatmul.f32.gmra.mxu0 %v1160
        %v1297 = vpop.f32.mrf.mxu0
        %v1298 = vadd.f32 0.0, %v1297
        %1299 = vmatmul.f32.gmra.mxu0 %v1163
        %v1300 = vpop.f32.mrf.mxu0
        %v1301 = vadd.f32 0.0, %v1300
        %1302 = vmatmul.f32.gmra.mxu0 %v1166
        %v1303 = vpop.f32.mrf.mxu0
        %v1304 = vadd.f32 0.0, %v1303
        %1305 = vmatmul.f32.gmra.mxu0 %v1169
        %v1306 = vpop.f32.mrf.mxu0
        %v1307 = vadd.f32 0.0, %v1306
        %1308 = vmatmul.f32.gmra.mxu0 %v1172
        %v1309 = vpop.f32.mrf.mxu0
        %v1310 = vadd.f32 0.0, %v1309
        %1311 = vmatmul.f32.gmra.mxu0 %v1175
        %v1312 = vpop.f32.mrf.mxu0
        %v1313 = vadd.f32 0.0, %v1312
        %1314 = vdwg.mxu0
        %v1315 = vadd.f32 %v1078, %v1198
        %v1316 = vadd.f32 %v1079, %v1201
        %v1317 = vadd.f32 %v1080, %v1204
        %v1318 = vadd.f32 %v1081, %v1207
        %v1319 = vadd.f32 %v1082, %v1210
        %v1320 = vadd.f32 %v1083, %v1213
        %v1321 = vadd.f32 %v1084, %v1216
        %v1322 = vadd.f32 %v1085, %v1219
        %v1323 = vadd.f32 %v1086, %v1222
        %v1324 = vadd.f32 %v1087, %v1225
        %v1325 = vadd.f32 %v1088, %v1228
        %v1326 = vadd.f32 %v1089, %v1231
        %v1327 = vadd.f32 %v1090, %v1234
        %v1328 = vadd.f32 %v1091, %v1237
        %v1329 = vadd.f32 %v1092, %v1240
        %v1330 = vadd.f32 %v1093, %v1243
        %v1331 = vadd.f32 %v1094, %v1268
        %v1332 = vadd.f32 %v1095, %v1271
        %v1333 = vadd.f32 %v1096, %v1274
        %v1334 = vadd.f32 %v1097, %v1277
        %v1335 = vadd.f32 %v1098, %v1280
        %v1336 = vadd.f32 %v1099, %v1283
        %v1337 = vadd.f32 %v1100, %v1286
        %v1338 = vadd.f32 %v1101, %v1289
        %v1339 = vadd.f32 %v1102, %v1292
        %v1340 = vadd.f32 %v1103, %v1295
        %v1341 = vadd.f32 %v1104, %v1298
        %v1342 = vadd.f32 %v1105, %v1301
        %v1343 = vadd.f32 %v1106, %v1304
        %v1344 = vadd.f32 %v1107, %v1307
        %v1345 = vadd.f32 %v1108, %v1310
        %v1346 = vadd.f32 %v1109, %v1313
        %v1347 = vld [vmem:[%s1110 + $0x1] sm:$0xff]
        %v1348 = vld [vmem:[%s1110 + $0x9] sm:$0xff]
        %v1349 = vld [vmem:[%s1110 + $0x19] sm:$0xff]
        %v1350 = vld [vmem:[%s1110 + $0x21] sm:$0xff]
        %v1351 = vld [vmem:[%s1110 + $0x31] sm:$0xff]
        %v1352 = vld [vmem:[%s1110 + $0x39] sm:$0xff]
        %v1353 = vld [vmem:[%s1110 + $0x49] sm:$0xff]
        %v1354 = vld [vmem:[%s1110 + $0x51] sm:$0xff]
        %v1355 = vld [vmem:[%s1110 + $0x61] sm:$0xff]
        %v1356 = vld [vmem:[%s1110 + $0x69] sm:$0xff]
        %v1357 = vld [vmem:[%s1110 + $0x79] sm:$0xff]
        %v1358 = vld [vmem:[%s1110 + $0x81] sm:$0xff]
        %v1359 = vld [vmem:[%s1110 + $0x91] sm:$0xff]
        %v1360 = vld [vmem:[%s1110 + $0x99] sm:$0xff]
        %v1361 = vld [vmem:[%s1110 + $0xa9] sm:$0xff]
        %v1362 = vld [vmem:[%s1110 + $0xb1] sm:$0xff]
        %s1363 = scalar_lea.vmem %s3, 16
        %v1364 = vld [vmem:[%s1363] sm:$0xf]
        %v1366 = vsel %vm426, %v1347, 0
        %v1369 = vsel %vm426, %v1348, 0
        %v1372 = vsel %vm426, %v1349, 0
        %v1375 = vsel %vm426, %v1350, 0
        %v1378 = vsel %vm426, %v1351, 0
        %v1381 = vsel %vm426, %v1352, 0
        %v1384 = vsel %vm426, %v1353, 0
        %v1387 = vsel %vm426, %v1354, 0
        %v1390 = vsel %vm426, %v1355, 0
        %v1393 = vsel %vm426, %v1356, 0
        %v1396 = vsel %vm426, %v1357, 0
        %v1399 = vsel %vm426, %v1358, 0
        %v1402 = vsel %vm426, %v1359, 0
        %v1405 = vsel %vm426, %v1360, 0
        %v1408 = vsel %vm426, %v1361, 0
        %v1411 = vsel %vm426, %v1362, 0
        %v1414 = vsel %vm551, %v1364, 0
        %1416 = vmatpush.msra.mxu0 0.0
        %1417 = vmatpush.msra.mxu0 0.0
        %1418 = vmatpush.msra.mxu0 0.0
        %1419 = vmatpush.msra.mxu0 0.0
        %1420 = vmatpush.msra.mxu0 0.0
        %1421 = vmatpush.msra.mxu0 0.0
        %1422 = vmatpush.msra.mxu0 0.0
        %1423 = vmatpush.msra.mxu0 0.0
        %1424 = vmatpush.msra.mxu0 0.0
        %1425 = vmatpush.msra.mxu0 0.0
        %1426 = vmatpush.msra.mxu0 0.0
        %1427 = vmatpush.msra.mxu0 0.0
        %1428 = vmatpush.msra.mxu0 0.0
        %1429 = vmatpush.msra.mxu0 0.0
        %1430 = vmatpush.msra.mxu0 0.0
        %1431 = vmatpush.msra.mxu0 %v1414
        %1432 = vmatmul.f32.gmra.mxu0 %v1366
        %v1433 = vpop.f32.mrf.mxu0
        %v1434 = vadd.f32 0.0, %v1433
        %1435 = vmatmul.f32.gmra.mxu0 %v1369
        %v1436 = vpop.f32.mrf.mxu0
        %v1437 = vadd.f32 0.0, %v1436
        %1438 = vmatmul.f32.gmra.mxu0 %v1372
        %v1439 = vpop.f32.mrf.mxu0
        %v1440 = vadd.f32 0.0, %v1439
        %1441 = vmatmul.f32.gmra.mxu0 %v1375
        %v1442 = vpop.f32.mrf.mxu0
        %v1443 = vadd.f32 0.0, %v1442
        %1444 = vmatmul.f32.gmra.mxu0 %v1378
        %v1445 = vpop.f32.mrf.mxu0
        %v1446 = vadd.f32 0.0, %v1445
        %1447 = vmatmul.f32.gmra.mxu0 %v1381
        %v1448 = vpop.f32.mrf.mxu0
        %v1449 = vadd.f32 0.0, %v1448
        %1450 = vmatmul.f32.gmra.mxu0 %v1384
        %v1451 = vpop.f32.mrf.mxu0
        %v1452 = vadd.f32 0.0, %v1451
        %1453 = vmatmul.f32.gmra.mxu0 %v1387
        %v1454 = vpop.f32.mrf.mxu0
        %v1455 = vadd.f32 0.0, %v1454
        %1456 = vmatmul.f32.gmra.mxu0 %v1390
        %v1457 = vpop.f32.mrf.mxu0
        %v1458 = vadd.f32 0.0, %v1457
        %1459 = vmatmul.f32.gmra.mxu0 %v1393
        %v1460 = vpop.f32.mrf.mxu0
        %v1461 = vadd.f32 0.0, %v1460
        %1462 = vmatmul.f32.gmra.mxu0 %v1396
        %v1463 = vpop.f32.mrf.mxu0
        %v1464 = vadd.f32 0.0, %v1463
        %1465 = vmatmul.f32.gmra.mxu0 %v1399
        %v1466 = vpop.f32.mrf.mxu0
        %v1467 = vadd.f32 0.0, %v1466
        %1468 = vmatmul.f32.gmra.mxu0 %v1402
        %v1469 = vpop.f32.mrf.mxu0
        %v1470 = vadd.f32 0.0, %v1469
        %1471 = vmatmul.f32.gmra.mxu0 %v1405
        %v1472 = vpop.f32.mrf.mxu0
        %v1473 = vadd.f32 0.0, %v1472
        %1474 = vmatmul.f32.gmra.mxu0 %v1408
        %v1475 = vpop.f32.mrf.mxu0
        %v1476 = vadd.f32 0.0, %v1475
        %1477 = vmatmul.f32.gmra.mxu0 %v1411
        %v1478 = vpop.f32.mrf.mxu0
        %v1479 = vadd.f32 0.0, %v1478
        %1480 = vdwg.mxu0
        %s1481 = scalar_lea.vmem %s3, 52
        %v1482 = vld [vmem:[%s1481] sm:$0xf]
        %v1484 = vsel %vm551, %v1482, 0
        %1486 = vmatpush.msra.mxu0 0.0
        %1487 = vmatpush.msra.mxu0 0.0
        %1488 = vmatpush.msra.mxu0 0.0
        %1489 = vmatpush.msra.mxu0 0.0
        %1490 = vmatpush.msra.mxu0 0.0
        %1491 = vmatpush.msra.mxu0 0.0
        %1492 = vmatpush.msra.mxu0 0.0
        %1493 = vmatpush.msra.mxu0 0.0
        %1494 = vmatpush.msra.mxu0 0.0
        %1495 = vmatpush.msra.mxu0 0.0
        %1496 = vmatpush.msra.mxu0 0.0
        %1497 = vmatpush.msra.mxu0 0.0
        %1498 = vmatpush.msra.mxu0 0.0
        %1499 = vmatpush.msra.mxu0 0.0
        %1500 = vmatpush.msra.mxu0 0.0
        %1501 = vmatpush.msra.mxu0 %v1484
        %1502 = vmatmul.f32.gmra.mxu0 %v1366
        %v1503 = vpop.f32.mrf.mxu0
        %v1504 = vadd.f32 0.0, %v1503
        %1505 = vmatmul.f32.gmra.mxu0 %v1369
        %v1506 = vpop.f32.mrf.mxu0
        %v1507 = vadd.f32 0.0, %v1506
        %1508 = vmatmul.f32.gmra.mxu0 %v1372
        %v1509 = vpop.f32.mrf.mxu0
        %v1510 = vadd.f32 0.0, %v1509
        %1511 = vmatmul.f32.gmra.mxu0 %v1375
        %v1512 = vpop.f32.mrf.mxu0
        %v1513 = vadd.f32 0.0, %v1512
        %1514 = vmatmul.f32.gmra.mxu0 %v1378
        %v1515 = vpop.f32.mrf.mxu0
        %v1516 = vadd.f32 0.0, %v1515
        %1517 = vmatmul.f32.gmra.mxu0 %v1381
        %v1518 = vpop.f32.mrf.mxu0
        %v1519 = vadd.f32 0.0, %v1518
        %1520 = vmatmul.f32.gmra.mxu0 %v1384
        %v1521 = vpop.f32.mrf.mxu0
        %v1522 = vadd.f32 0.0, %v1521
        %1523 = vmatmul.f32.gmra.mxu0 %v1387
        %v1524 = vpop.f32.mrf.mxu0
        %v1525 = vadd.f32 0.0, %v1524
        %1526 = vmatmul.f32.gmra.mxu0 %v1390
        %v1527 = vpop.f32.mrf.mxu0
        %v1528 = vadd.f32 0.0, %v1527
        %1529 = vmatmul.f32.gmra.mxu0 %v1393
        %v1530 = vpop.f32.mrf.mxu0
        %v1531 = vadd.f32 0.0, %v1530
        %1532 = vmatmul.f32.gmra.mxu0 %v1396
        %v1533 = vpop.f32.mrf.mxu0
        %v1534 = vadd.f32 0.0, %v1533
        %1535 = vmatmul.f32.gmra.mxu0 %v1399
        %v1536 = vpop.f32.mrf.mxu0
        %v1537 = vadd.f32 0.0, %v1536
        %1538 = vmatmul.f32.gmra.mxu0 %v1402
        %v1539 = vpop.f32.mrf.mxu0
        %v1540 = vadd.f32 0.0, %v1539
        %1541 = vmatmul.f32.gmra.mxu0 %v1405
        %v1542 = vpop.f32.mrf.mxu0
        %v1543 = vadd.f32 0.0, %v1542
        %1544 = vmatmul.f32.gmra.mxu0 %v1408
        %v1545 = vpop.f32.mrf.mxu0
        %v1546 = vadd.f32 0.0, %v1545
        %1547 = vmatmul.f32.gmra.mxu0 %v1411
        %v1548 = vpop.f32.mrf.mxu0
        %v1549 = vadd.f32 0.0, %v1548
        %1550 = vdwg.mxu0
        %v1551 = vadd.f32 %v1315, %v1434
        %v1552 = vadd.f32 %v1316, %v1437
        %v1553 = vadd.f32 %v1317, %v1440
        %v1554 = vadd.f32 %v1318, %v1443
        %v1555 = vadd.f32 %v1319, %v1446
        %v1556 = vadd.f32 %v1320, %v1449
        %v1557 = vadd.f32 %v1321, %v1452
        %v1558 = vadd.f32 %v1322, %v1455
        %v1559 = vadd.f32 %v1323, %v1458
        %v1560 = vadd.f32 %v1324, %v1461
        %v1561 = vadd.f32 %v1325, %v1464
        %v1562 = vadd.f32 %v1326, %v1467
        %v1563 = vadd.f32 %v1327, %v1470
        %v1564 = vadd.f32 %v1328, %v1473
        %v1565 = vadd.f32 %v1329, %v1476
        %v1566 = vadd.f32 %v1330, %v1479
        %v1567 = vadd.f32 %v1331, %v1504
        %v1568 = vadd.f32 %v1332, %v1507
        %v1569 = vadd.f32 %v1333, %v1510
        %v1570 = vadd.f32 %v1334, %v1513
        %v1571 = vadd.f32 %v1335, %v1516
        %v1572 = vadd.f32 %v1336, %v1519
        %v1573 = vadd.f32 %v1337, %v1522
        %v1574 = vadd.f32 %v1338, %v1525
        %v1575 = vadd.f32 %v1339, %v1528
        %v1576 = vadd.f32 %v1340, %v1531
        %v1577 = vadd.f32 %v1341, %v1534
        %v1578 = vadd.f32 %v1342, %v1537
        %v1579 = vadd.f32 %v1343, %v1540
        %v1580 = vadd.f32 %v1344, %v1543
        %v1581 = vadd.f32 %v1345, %v1546
        %v1582 = vadd.f32 %v1346, %v1549
        %v1583 = vld [vmem:[%s1110 + $0x2] sm:$0xff]
        %v1584 = vld [vmem:[%s1110 + $0xa] sm:$0xff]
        %v1585 = vld [vmem:[%s1110 + $0x1a] sm:$0xff]
        %v1586 = vld [vmem:[%s1110 + $0x22] sm:$0xff]
        %v1587 = vld [vmem:[%s1110 + $0x32] sm:$0xff]
        %v1588 = vld [vmem:[%s1110 + $0x3a] sm:$0xff]
        %v1589 = vld [vmem:[%s1110 + $0x4a] sm:$0xff]
        %v1590 = vld [vmem:[%s1110 + $0x52] sm:$0xff]
        %v1591 = vld [vmem:[%s1110 + $0x62] sm:$0xff]
        %v1592 = vld [vmem:[%s1110 + $0x6a] sm:$0xff]
        %v1593 = vld [vmem:[%s1110 + $0x7a] sm:$0xff]
        %v1594 = vld [vmem:[%s1110 + $0x82] sm:$0xff]
        %v1595 = vld [vmem:[%s1110 + $0x92] sm:$0xff]
        %v1596 = vld [vmem:[%s1110 + $0x9a] sm:$0xff]
        %v1597 = vld [vmem:[%s1110 + $0xaa] sm:$0xff]
        %v1598 = vld [vmem:[%s1110 + $0xb2] sm:$0xff]
        %s1599 = scalar_lea.vmem %s3, 20
        %v1600 = vld [vmem:[%s1599] sm:$0xf]
        %v1602 = vsel %vm426, %v1583, 0
        %v1605 = vsel %vm426, %v1584, 0
        %v1608 = vsel %vm426, %v1585, 0
        %v1611 = vsel %vm426, %v1586, 0
        %v1614 = vsel %vm426, %v1587, 0
        %v1617 = vsel %vm426, %v1588, 0
        %v1620 = vsel %vm426, %v1589, 0
        %v1623 = vsel %vm426, %v1590, 0
        %v1626 = vsel %vm426, %v1591, 0
        %v1629 = vsel %vm426, %v1592, 0
        %v1632 = vsel %vm426, %v1593, 0
        %v1635 = vsel %vm426, %v1594, 0
        %v1638 = vsel %vm426, %v1595, 0
        %v1641 = vsel %vm426, %v1596, 0
        %v1644 = vsel %vm426, %v1597, 0
        %v1647 = vsel %vm426, %v1598, 0
        %v1650 = vsel %vm551, %v1600, 0
        %1652 = vmatpush.msra.mxu0 0.0
        %1653 = vmatpush.msra.mxu0 0.0
        %1654 = vmatpush.msra.mxu0 0.0
        %1655 = vmatpush.msra.mxu0 0.0
        %1656 = vmatpush.msra.mxu0 0.0
        %1657 = vmatpush.msra.mxu0 0.0
        %1658 = vmatpush.msra.mxu0 0.0
        %1659 = vmatpush.msra.mxu0 0.0
        %1660 = vmatpush.msra.mxu0 0.0
        %1661 = vmatpush.msra.mxu0 0.0
        %1662 = vmatpush.msra.mxu0 0.0
        %1663 = vmatpush.msra.mxu0 0.0
        %1664 = vmatpush.msra.mxu0 0.0
        %1665 = vmatpush.msra.mxu0 0.0
        %1666 = vmatpush.msra.mxu0 0.0
        %1667 = vmatpush.msra.mxu0 %v1650
        %1668 = vmatmul.f32.gmra.mxu0 %v1602
        %v1669 = vpop.f32.mrf.mxu0
        %v1670 = vadd.f32 0.0, %v1669
        %1671 = vmatmul.f32.gmra.mxu0 %v1605
        %v1672 = vpop.f32.mrf.mxu0
        %v1673 = vadd.f32 0.0, %v1672
        %1674 = vmatmul.f32.gmra.mxu0 %v1608
        %v1675 = vpop.f32.mrf.mxu0
        %v1676 = vadd.f32 0.0, %v1675
        %1677 = vmatmul.f32.gmra.mxu0 %v1611
        %v1678 = vpop.f32.mrf.mxu0
        %v1679 = vadd.f32 0.0, %v1678
        %1680 = vmatmul.f32.gmra.mxu0 %v1614
        %v1681 = vpop.f32.mrf.mxu0
        %v1682 = vadd.f32 0.0, %v1681
        %1683 = vmatmul.f32.gmra.mxu0 %v1617
        %v1684 = vpop.f32.mrf.mxu0
        %v1685 = vadd.f32 0.0, %v1684
        %1686 = vmatmul.f32.gmra.mxu0 %v1620
        %v1687 = vpop.f32.mrf.mxu0
        %v1688 = vadd.f32 0.0, %v1687
        %1689 = vmatmul.f32.gmra.mxu0 %v1623
        %v1690 = vpop.f32.mrf.mxu0
        %v1691 = vadd.f32 0.0, %v1690
        %1692 = vmatmul.f32.gmra.mxu0 %v1626
        %v1693 = vpop.f32.mrf.mxu0
        %v1694 = vadd.f32 0.0, %v1693
        %1695 = vmatmul.f32.gmra.mxu0 %v1629
        %v1696 = vpop.f32.mrf.mxu0
        %v1697 = vadd.f32 0.0, %v1696
        %1698 = vmatmul.f32.gmra.mxu0 %v1632
        %v1699 = vpop.f32.mrf.mxu0
        %v1700 = vadd.f32 0.0, %v1699
        %1701 = vmatmul.f32.gmra.mxu0 %v1635
        %v1702 = vpop.f32.mrf.mxu0
        %v1703 = vadd.f32 0.0, %v1702
        %1704 = vmatmul.f32.gmra.mxu0 %v1638
        %v1705 = vpop.f32.mrf.mxu0
        %v1706 = vadd.f32 0.0, %v1705
        %1707 = vmatmul.f32.gmra.mxu0 %v1641
        %v1708 = vpop.f32.mrf.mxu0
        %v1709 = vadd.f32 0.0, %v1708
        %1710 = vmatmul.f32.gmra.mxu0 %v1644
        %v1711 = vpop.f32.mrf.mxu0
        %v1712 = vadd.f32 0.0, %v1711
        %1713 = vmatmul.f32.gmra.mxu0 %v1647
        %v1714 = vpop.f32.mrf.mxu0
        %v1715 = vadd.f32 0.0, %v1714
        %1716 = vdwg.mxu0
        %s1717 = scalar_lea.vmem %s3, 56
        %v1718 = vld [vmem:[%s1717] sm:$0xf]
        %v1720 = vsel %vm551, %v1718, 0
        %1722 = vmatpush.msra.mxu0 0.0
        %1723 = vmatpush.msra.mxu0 0.0
        %1724 = vmatpush.msra.mxu0 0.0
        %1725 = vmatpush.msra.mxu0 0.0
        %1726 = vmatpush.msra.mxu0 0.0
        %1727 = vmatpush.msra.mxu0 0.0
        %1728 = vmatpush.msra.mxu0 0.0
        %1729 = vmatpush.msra.mxu0 0.0
        %1730 = vmatpush.msra.mxu0 0.0
        %1731 = vmatpush.msra.mxu0 0.0
        %1732 = vmatpush.msra.mxu0 0.0
        %1733 = vmatpush.msra.mxu0 0.0
        %1734 = vmatpush.msra.mxu0 0.0
        %1735 = vmatpush.msra.mxu0 0.0
        %1736 = vmatpush.msra.mxu0 0.0
        %1737 = vmatpush.msra.mxu0 %v1720
        %1738 = vmatmul.f32.gmra.mxu0 %v1602
        %v1739 = vpop.f32.mrf.mxu0
        %v1740 = vadd.f32 0.0, %v1739
        %1741 = vmatmul.f32.gmra.mxu0 %v1605
        %v1742 = vpop.f32.mrf.mxu0
        %v1743 = vadd.f32 0.0, %v1742
        %1744 = vmatmul.f32.gmra.mxu0 %v1608
        %v1745 = vpop.f32.mrf.mxu0
        %v1746 = vadd.f32 0.0, %v1745
        %1747 = vmatmul.f32.gmra.mxu0 %v1611
        %v1748 = vpop.f32.mrf.mxu0
        %v1749 = vadd.f32 0.0, %v1748
        %1750 = vmatmul.f32.gmra.mxu0 %v1614
        %v1751 = vpop.f32.mrf.mxu0
        %v1752 = vadd.f32 0.0, %v1751
        %1753 = vmatmul.f32.gmra.mxu0 %v1617
        %v1754 = vpop.f32.mrf.mxu0
        %v1755 = vadd.f32 0.0, %v1754
        %1756 = vmatmul.f32.gmra.mxu0 %v1620
        %v1757 = vpop.f32.mrf.mxu0
        %v1758 = vadd.f32 0.0, %v1757
        %1759 = vmatmul.f32.gmra.mxu0 %v1623
        %v1760 = vpop.f32.mrf.mxu0
        %v1761 = vadd.f32 0.0, %v1760
        %1762 = vmatmul.f32.gmra.mxu0 %v1626
        %v1763 = vpop.f32.mrf.mxu0
        %v1764 = vadd.f32 0.0, %v1763
        %1765 = vmatmul.f32.gmra.mxu0 %v1629
        %v1766 = vpop.f32.mrf.mxu0
        %v1767 = vadd.f32 0.0, %v1766
        %1768 = vmatmul.f32.gmra.mxu0 %v1632
        %v1769 = vpop.f32.mrf.mxu0
        %v1770 = vadd.f32 0.0, %v1769
        %1771 = vmatmul.f32.gmra.mxu0 %v1635
        %v1772 = vpop.f32.mrf.mxu0
        %v1773 = vadd.f32 0.0, %v1772
        %1774 = vmatmul.f32.gmra.mxu0 %v1638
        %v1775 = vpop.f32.mrf.mxu0
        %v1776 = vadd.f32 0.0, %v1775
        %1777 = vmatmul.f32.gmra.mxu0 %v1641
        %v1778 = vpop.f32.mrf.mxu0
        %v1779 = vadd.f32 0.0, %v1778
        %1780 = vmatmul.f32.gmra.mxu0 %v1644
        %v1781 = vpop.f32.mrf.mxu0
        %v1782 = vadd.f32 0.0, %v1781
        %1783 = vmatmul.f32.gmra.mxu0 %v1647
        %v1784 = vpop.f32.mrf.mxu0
        %v1785 = vadd.f32 0.0, %v1784
        %1786 = vdwg.mxu0
        %v1787 = vadd.f32 %v1551, %v1670
        %v1788 = vadd.f32 %v1552, %v1673
        %v1789 = vadd.f32 %v1553, %v1676
        %v1790 = vadd.f32 %v1554, %v1679
        %v1791 = vadd.f32 %v1555, %v1682
        %v1792 = vadd.f32 %v1556, %v1685
        %v1793 = vadd.f32 %v1557, %v1688
        %v1794 = vadd.f32 %v1558, %v1691
        %v1795 = vadd.f32 %v1559, %v1694
        %v1796 = vadd.f32 %v1560, %v1697
        %v1797 = vadd.f32 %v1561, %v1700
        %v1798 = vadd.f32 %v1562, %v1703
        %v1799 = vadd.f32 %v1563, %v1706
        %v1800 = vadd.f32 %v1564, %v1709
        %v1801 = vadd.f32 %v1565, %v1712
        %v1802 = vadd.f32 %v1566, %v1715
        %v1803 = vadd.f32 %v1567, %v1740
        %v1804 = vadd.f32 %v1568, %v1743
        %v1805 = vadd.f32 %v1569, %v1746
        %v1806 = vadd.f32 %v1570, %v1749
        %v1807 = vadd.f32 %v1571, %v1752
        %v1808 = vadd.f32 %v1572, %v1755
        %v1809 = vadd.f32 %v1573, %v1758
        %v1810 = vadd.f32 %v1574, %v1761
        %v1811 = vadd.f32 %v1575, %v1764
        %v1812 = vadd.f32 %v1576, %v1767
        %v1813 = vadd.f32 %v1577, %v1770
        %v1814 = vadd.f32 %v1578, %v1773
        %v1815 = vadd.f32 %v1579, %v1776
        %v1816 = vadd.f32 %v1580, %v1779
        %v1817 = vadd.f32 %v1581, %v1782
        %v1818 = vadd.f32 %v1582, %v1785
        %s1819 = scalar_lea.vmem [#allocation2], 48
        %v1820 = vld [vmem:[%s1819] sm:$0xff]
        %v1821 = vld [vmem:[%s1819 + $0x8] sm:$0xff]
        %v1822 = vld [vmem:[%s1819 + $0x18] sm:$0xff]
        %v1823 = vld [vmem:[%s1819 + $0x20] sm:$0xff]
        %v1824 = vld [vmem:[%s1819 + $0x30] sm:$0xff]
        %v1825 = vld [vmem:[%s1819 + $0x38] sm:$0xff]
        %v1826 = vld [vmem:[%s1819 + $0x48] sm:$0xff]
        %v1827 = vld [vmem:[%s1819 + $0x50] sm:$0xff]
        %v1828 = vld [vmem:[%s1819 + $0x60] sm:$0xff]
        %v1829 = vld [vmem:[%s1819 + $0x68] sm:$0xff]
        %v1830 = vld [vmem:[%s1819 + $0x78] sm:$0xff]
        %v1831 = vld [vmem:[%s1819 + $0x80] sm:$0xff]
        %v1832 = vld [vmem:[%s1819 + $0x90] sm:$0xff]
        %v1833 = vld [vmem:[%s1819 + $0x98] sm:$0xff]
        %v1834 = vld [vmem:[%s1819 + $0xa8] sm:$0xff]
        %v1835 = vld [vmem:[%s1819 + $0xb0] sm:$0xff]
        %s1836 = scalar_lea.vmem %s3, 24
        %v1837 = vld [vmem:[%s1836] sm:$0xf]
        %v1839 = vsel %vm426, %v1820, 0
        %v1842 = vsel %vm426, %v1821, 0
        %v1845 = vsel %vm426, %v1822, 0
        %v1848 = vsel %vm426, %v1823, 0
        %v1851 = vsel %vm426, %v1824, 0
        %v1854 = vsel %vm426, %v1825, 0
        %v1857 = vsel %vm426, %v1826, 0
        %v1860 = vsel %vm426, %v1827, 0
        %v1863 = vsel %vm426, %v1828, 0
        %v1866 = vsel %vm426, %v1829, 0
        %v1869 = vsel %vm426, %v1830, 0
        %v1872 = vsel %vm426, %v1831, 0
        %v1875 = vsel %vm426, %v1832, 0
        %v1878 = vsel %vm426, %v1833, 0
        %v1881 = vsel %vm426, %v1834, 0
        %v1884 = vsel %vm426, %v1835, 0
        %v1887 = vsel %vm551, %v1837, 0
        %1889 = vmatpush.msra.mxu0 0.0
        %1890 = vmatpush.msra.mxu0 0.0
        %1891 = vmatpush.msra.mxu0 0.0
        %1892 = vmatpush.msra.mxu0 0.0
        %1893 = vmatpush.msra.mxu0 0.0
        %1894 = vmatpush.msra.mxu0 0.0
        %1895 = vmatpush.msra.mxu0 0.0
        %1896 = vmatpush.msra.mxu0 0.0
        %1897 = vmatpush.msra.mxu0 0.0
        %1898 = vmatpush.msra.mxu0 0.0
        %1899 = vmatpush.msra.mxu0 0.0
        %1900 = vmatpush.msra.mxu0 0.0
        %1901 = vmatpush.msra.mxu0 0.0
        %1902 = vmatpush.msra.mxu0 0.0
        %1903 = vmatpush.msra.mxu0 0.0
        %1904 = vmatpush.msra.mxu0 %v1887
        %1905 = vmatmul.f32.gmra.mxu0 %v1839
        %v1906 = vpop.f32.mrf.mxu0
        %v1907 = vadd.f32 0.0, %v1906
        %1908 = vmatmul.f32.gmra.mxu0 %v1842
        %v1909 = vpop.f32.mrf.mxu0
        %v1910 = vadd.f32 0.0, %v1909
        %1911 = vmatmul.f32.gmra.mxu0 %v1845
        %v1912 = vpop.f32.mrf.mxu0
        %v1913 = vadd.f32 0.0, %v1912
        %1914 = vmatmul.f32.gmra.mxu0 %v1848
        %v1915 = vpop.f32.mrf.mxu0
        %v1916 = vadd.f32 0.0, %v1915
        %1917 = vmatmul.f32.gmra.mxu0 %v1851
        %v1918 = vpop.f32.mrf.mxu0
        %v1919 = vadd.f32 0.0, %v1918
        %1920 = vmatmul.f32.gmra.mxu0 %v1854
        %v1921 = vpop.f32.mrf.mxu0
        %v1922 = vadd.f32 0.0, %v1921
        %1923 = vmatmul.f32.gmra.mxu0 %v1857
        %v1924 = vpop.f32.mrf.mxu0
        %v1925 = vadd.f32 0.0, %v1924
        %1926 = vmatmul.f32.gmra.mxu0 %v1860
        %v1927 = vpop.f32.mrf.mxu0
        %v1928 = vadd.f32 0.0, %v1927
        %1929 = vmatmul.f32.gmra.mxu0 %v1863
        %v1930 = vpop.f32.mrf.mxu0
        %v1931 = vadd.f32 0.0, %v1930
        %1932 = vmatmul.f32.gmra.mxu0 %v1866
        %v1933 = vpop.f32.mrf.mxu0
        %v1934 = vadd.f32 0.0, %v1933
        %1935 = vmatmul.f32.gmra.mxu0 %v1869
        %v1936 = vpop.f32.mrf.mxu0
        %v1937 = vadd.f32 0.0, %v1936
        %1938 = vmatmul.f32.gmra.mxu0 %v1872
        %v1939 = vpop.f32.mrf.mxu0
        %v1940 = vadd.f32 0.0, %v1939
        %1941 = vmatmul.f32.gmra.mxu0 %v1875
        %v1942 = vpop.f32.mrf.mxu0
        %v1943 = vadd.f32 0.0, %v1942
        %1944 = vmatmul.f32.gmra.mxu0 %v1878
        %v1945 = vpop.f32.mrf.mxu0
        %v1946 = vadd.f32 0.0, %v1945
        %1947 = vmatmul.f32.gmra.mxu0 %v1881
        %v1948 = vpop.f32.mrf.mxu0
        %v1949 = vadd.f32 0.0, %v1948
        %1950 = vmatmul.f32.gmra.mxu0 %v1884
        %v1951 = vpop.f32.mrf.mxu0
        %v1952 = vadd.f32 0.0, %v1951
        %1953 = vdwg.mxu0
        %s1954 = scalar_lea.vmem %s3, 60
        %v1955 = vld [vmem:[%s1954] sm:$0xf]
        %v1957 = vsel %vm551, %v1955, 0
        %1959 = vmatpush.msra.mxu0 0.0
        %1960 = vmatpush.msra.mxu0 0.0
        %1961 = vmatpush.msra.mxu0 0.0
        %1962 = vmatpush.msra.mxu0 0.0
        %1963 = vmatpush.msra.mxu0 0.0
        %1964 = vmatpush.msra.mxu0 0.0
        %1965 = vmatpush.msra.mxu0 0.0
        %1966 = vmatpush.msra.mxu0 0.0
        %1967 = vmatpush.msra.mxu0 0.0
        %1968 = vmatpush.msra.mxu0 0.0
        %1969 = vmatpush.msra.mxu0 0.0
        %1970 = vmatpush.msra.mxu0 0.0
        %1971 = vmatpush.msra.mxu0 0.0
        %1972 = vmatpush.msra.mxu0 0.0
        %1973 = vmatpush.msra.mxu0 0.0
        %1974 = vmatpush.msra.mxu0 %v1957
        %1975 = vmatmul.f32.gmra.mxu0 %v1839
        %v1976 = vpop.f32.mrf.mxu0
        %v1977 = vadd.f32 0.0, %v1976
        %1978 = vmatmul.f32.gmra.mxu0 %v1842
        %v1979 = vpop.f32.mrf.mxu0
        %v1980 = vadd.f32 0.0, %v1979
        %1981 = vmatmul.f32.gmra.mxu0 %v1845
        %v1982 = vpop.f32.mrf.mxu0
        %v1983 = vadd.f32 0.0, %v1982
        %1984 = vmatmul.f32.gmra.mxu0 %v1848
        %v1985 = vpop.f32.mrf.mxu0
        %v1986 = vadd.f32 0.0, %v1985
        %1987 = vmatmul.f32.gmra.mxu0 %v1851
        %v1988 = vpop.f32.mrf.mxu0
        %v1989 = vadd.f32 0.0, %v1988
        %1990 = vmatmul.f32.gmra.mxu0 %v1854
        %v1991 = vpop.f32.mrf.mxu0
        %v1992 = vadd.f32 0.0, %v1991
        %1993 = vmatmul.f32.gmra.mxu0 %v1857
        %v1994 = vpop.f32.mrf.mxu0
        %v1995 = vadd.f32 0.0, %v1994
        %1996 = vmatmul.f32.gmra.mxu0 %v1860
        %v1997 = vpop.f32.mrf.mxu0
        %v1998 = vadd.f32 0.0, %v1997
        %1999 = vmatmul.f32.gmra.mxu0 %v1863
        %v2000 = vpop.f32.mrf.mxu0
        %v2001 = vadd.f32 0.0, %v2000
        %2002 = vmatmul.f32.gmra.mxu0 %v1866
        %v2003 = vpop.f32.mrf.mxu0
        %v2004 = vadd.f32 0.0, %v2003
        %2005 = vmatmul.f32.gmra.mxu0 %v1869
        %v2006 = vpop.f32.mrf.mxu0
        %v2007 = vadd.f32 0.0, %v2006
        %2008 = vmatmul.f32.gmra.mxu0 %v1872
        %v2009 = vpop.f32.mrf.mxu0
        %v2010 = vadd.f32 0.0, %v2009
        %2011 = vmatmul.f32.gmra.mxu0 %v1875
        %v2012 = vpop.f32.mrf.mxu0
        %v2013 = vadd.f32 0.0, %v2012
        %2014 = vmatmul.f32.gmra.mxu0 %v1878
        %v2015 = vpop.f32.mrf.mxu0
        %v2016 = vadd.f32 0.0, %v2015
        %2017 = vmatmul.f32.gmra.mxu0 %v1881
        %v2018 = vpop.f32.mrf.mxu0
        %v2019 = vadd.f32 0.0, %v2018
        %2020 = vmatmul.f32.gmra.mxu0 %v1884
        %v2021 = vpop.f32.mrf.mxu0
        %v2022 = vadd.f32 0.0, %v2021
        %2023 = vdwg.mxu0
        %v2024 = vadd.f32 %v1787, %v1907
        %v2025 = vadd.f32 %v1788, %v1910
        %v2026 = vadd.f32 %v1789, %v1913
        %v2027 = vadd.f32 %v1790, %v1916
        %v2028 = vadd.f32 %v1791, %v1919
        %v2029 = vadd.f32 %v1792, %v1922
        %v2030 = vadd.f32 %v1793, %v1925
        %v2031 = vadd.f32 %v1794, %v1928
        %v2032 = vadd.f32 %v1795, %v1931
        %v2033 = vadd.f32 %v1796, %v1934
        %v2034 = vadd.f32 %v1797, %v1937
        %v2035 = vadd.f32 %v1798, %v1940
        %v2036 = vadd.f32 %v1799, %v1943
        %v2037 = vadd.f32 %v1800, %v1946
        %v2038 = vadd.f32 %v1801, %v1949
        %v2039 = vadd.f32 %v1802, %v1952
        %v2040 = vadd.f32 %v1803, %v1977
        %v2041 = vadd.f32 %v1804, %v1980
        %v2042 = vadd.f32 %v1805, %v1983
        %v2043 = vadd.f32 %v1806, %v1986
        %v2044 = vadd.f32 %v1807, %v1989
        %v2045 = vadd.f32 %v1808, %v1992
        %v2046 = vadd.f32 %v1809, %v1995
        %v2047 = vadd.f32 %v1810, %v1998
        %v2048 = vadd.f32 %v1811, %v2001
        %v2049 = vadd.f32 %v1812, %v2004
        %v2050 = vadd.f32 %v1813, %v2007
        %v2051 = vadd.f32 %v1814, %v2010
        %v2052 = vadd.f32 %v1815, %v2013
        %v2053 = vadd.f32 %v1816, %v2016
        %v2054 = vadd.f32 %v1817, %v2019
        %v2055 = vadd.f32 %v1818, %v2022
        %v2056 = vld [vmem:[%s1819 + $0x1] sm:$0xff]
        %v2057 = vld [vmem:[%s1819 + $0x9] sm:$0xff]
        %v2058 = vld [vmem:[%s1819 + $0x19] sm:$0xff]
        %v2059 = vld [vmem:[%s1819 + $0x21] sm:$0xff]
        %v2060 = vld [vmem:[%s1819 + $0x31] sm:$0xff]
        %v2061 = vld [vmem:[%s1819 + $0x39] sm:$0xff]
        %v2062 = vld [vmem:[%s1819 + $0x49] sm:$0xff]
        %v2063 = vld [vmem:[%s1819 + $0x51] sm:$0xff]
        %v2064 = vld [vmem:[%s1819 + $0x61] sm:$0xff]
        %v2065 = vld [vmem:[%s1819 + $0x69] sm:$0xff]
        %v2066 = vld [vmem:[%s1819 + $0x79] sm:$0xff]
        %v2067 = vld [vmem:[%s1819 + $0x81] sm:$0xff]
        %v2068 = vld [vmem:[%s1819 + $0x91] sm:$0xff]
        %v2069 = vld [vmem:[%s1819 + $0x99] sm:$0xff]
        %v2070 = vld [vmem:[%s1819 + $0xa9] sm:$0xff]
        %v2071 = vld [vmem:[%s1819 + $0xb1] sm:$0xff]
        %s2072 = scalar_lea.vmem %s3, 28
        %v2073 = vld [vmem:[%s2072] sm:$0xf]
        %v2075 = vsel %vm426, %v2056, 0
        %v2078 = vsel %vm426, %v2057, 0
        %v2081 = vsel %vm426, %v2058, 0
        %v2084 = vsel %vm426, %v2059, 0
        %v2087 = vsel %vm426, %v2060, 0
        %v2090 = vsel %vm426, %v2061, 0
        %v2093 = vsel %vm426, %v2062, 0
        %v2096 = vsel %vm426, %v2063, 0
        %v2099 = vsel %vm426, %v2064, 0
        %v2102 = vsel %vm426, %v2065, 0
        %v2105 = vsel %vm426, %v2066, 0
        %v2108 = vsel %vm426, %v2067, 0
        %v2111 = vsel %vm426, %v2068, 0
        %v2114 = vsel %vm426, %v2069, 0
        %v2117 = vsel %vm426, %v2070, 0
        %v2120 = vsel %vm426, %v2071, 0
        %v2123 = vsel %vm551, %v2073, 0
        %2125 = vmatpush.msra.mxu0 0.0
        %2126 = vmatpush.msra.mxu0 0.0
        %2127 = vmatpush.msra.mxu0 0.0
        %2128 = vmatpush.msra.mxu0 0.0
        %2129 = vmatpush.msra.mxu0 0.0
        %2130 = vmatpush.msra.mxu0 0.0
        %2131 = vmatpush.msra.mxu0 0.0
        %2132 = vmatpush.msra.mxu0 0.0
        %2133 = vmatpush.msra.mxu0 0.0
        %2134 = vmatpush.msra.mxu0 0.0
        %2135 = vmatpush.msra.mxu0 0.0
        %2136 = vmatpush.msra.mxu0 0.0
        %2137 = vmatpush.msra.mxu0 0.0
        %2138 = vmatpush.msra.mxu0 0.0
        %2139 = vmatpush.msra.mxu0 0.0
        %2140 = vmatpush.msra.mxu0 %v2123
        %2141 = vmatmul.f32.gmra.mxu0 %v2075
        %v2142 = vpop.f32.mrf.mxu0
        %v2143 = vadd.f32 0.0, %v2142
        %2144 = vmatmul.f32.gmra.mxu0 %v2078
        %v2145 = vpop.f32.mrf.mxu0
        %v2146 = vadd.f32 0.0, %v2145
        %2147 = vmatmul.f32.gmra.mxu0 %v2081
        %v2148 = vpop.f32.mrf.mxu0
        %v2149 = vadd.f32 0.0, %v2148
        %2150 = vmatmul.f32.gmra.mxu0 %v2084
        %v2151 = vpop.f32.mrf.mxu0
        %v2152 = vadd.f32 0.0, %v2151
        %2153 = vmatmul.f32.gmra.mxu0 %v2087
        %v2154 = vpop.f32.mrf.mxu0
        %v2155 = vadd.f32 0.0, %v2154
        %2156 = vmatmul.f32.gmra.mxu0 %v2090
        %v2157 = vpop.f32.mrf.mxu0
        %v2158 = vadd.f32 0.0, %v2157
        %2159 = vmatmul.f32.gmra.mxu0 %v2093
        %v2160 = vpop.f32.mrf.mxu0
        %v2161 = vadd.f32 0.0, %v2160
        %2162 = vmatmul.f32.gmra.mxu0 %v2096
        %v2163 = vpop.f32.mrf.mxu0
        %v2164 = vadd.f32 0.0, %v2163
        %2165 = vmatmul.f32.gmra.mxu0 %v2099
        %v2166 = vpop.f32.mrf.mxu0
        %v2167 = vadd.f32 0.0, %v2166
        %2168 = vmatmul.f32.gmra.mxu0 %v2102
        %v2169 = vpop.f32.mrf.mxu0
        %v2170 = vadd.f32 0.0, %v2169
        %2171 = vmatmul.f32.gmra.mxu0 %v2105
        %v2172 = vpop.f32.mrf.mxu0
        %v2173 = vadd.f32 0.0, %v2172
        %2174 = vmatmul.f32.gmra.mxu0 %v2108
        %v2175 = vpop.f32.mrf.mxu0
        %v2176 = vadd.f32 0.0, %v2175
        %2177 = vmatmul.f32.gmra.mxu0 %v2111
        %v2178 = vpop.f32.mrf.mxu0
        %v2179 = vadd.f32 0.0, %v2178
        %2180 = vmatmul.f32.gmra.mxu0 %v2114
        %v2181 = vpop.f32.mrf.mxu0
        %v2182 = vadd.f32 0.0, %v2181
        %2183 = vmatmul.f32.gmra.mxu0 %v2117
        %v2184 = vpop.f32.mrf.mxu0
        %v2185 = vadd.f32 0.0, %v2184
        %2186 = vmatmul.f32.gmra.mxu0 %v2120
        %v2187 = vpop.f32.mrf.mxu0
        %v2188 = vadd.f32 0.0, %v2187
        %2189 = vdwg.mxu0
        %s2190 = scalar_lea.vmem %s3, 64
        %v2191 = vld [vmem:[%s2190] sm:$0xf]
        %v2193 = vsel %vm551, %v2191, 0
        %2195 = vmatpush.msra.mxu0 0.0
        %2196 = vmatpush.msra.mxu0 0.0
        %2197 = vmatpush.msra.mxu0 0.0
        %2198 = vmatpush.msra.mxu0 0.0
        %2199 = vmatpush.msra.mxu0 0.0
        %2200 = vmatpush.msra.mxu0 0.0
        %2201 = vmatpush.msra.mxu0 0.0
        %2202 = vmatpush.msra.mxu0 0.0
        %2203 = vmatpush.msra.mxu0 0.0
        %2204 = vmatpush.msra.mxu0 0.0
        %2205 = vmatpush.msra.mxu0 0.0
        %2206 = vmatpush.msra.mxu0 0.0
        %2207 = vmatpush.msra.mxu0 0.0
        %2208 = vmatpush.msra.mxu0 0.0
        %2209 = vmatpush.msra.mxu0 0.0
        %2210 = vmatpush.msra.mxu0 %v2193
        %2211 = vmatmul.f32.gmra.mxu0 %v2075
        %v2212 = vpop.f32.mrf.mxu0
        %v2213 = vadd.f32 0.0, %v2212
        %2214 = vmatmul.f32.gmra.mxu0 %v2078
        %v2215 = vpop.f32.mrf.mxu0
        %v2216 = vadd.f32 0.0, %v2215
        %2217 = vmatmul.f32.gmra.mxu0 %v2081
        %v2218 = vpop.f32.mrf.mxu0
        %v2219 = vadd.f32 0.0, %v2218
        %2220 = vmatmul.f32.gmra.mxu0 %v2084
        %v2221 = vpop.f32.mrf.mxu0
        %v2222 = vadd.f32 0.0, %v2221
        %2223 = vmatmul.f32.gmra.mxu0 %v2087
        %v2224 = vpop.f32.mrf.mxu0
        %v2225 = vadd.f32 0.0, %v2224
        %2226 = vmatmul.f32.gmra.mxu0 %v2090
        %v2227 = vpop.f32.mrf.mxu0
        %v2228 = vadd.f32 0.0, %v2227
        %2229 = vmatmul.f32.gmra.mxu0 %v2093
        %v2230 = vpop.f32.mrf.mxu0
        %v2231 = vadd.f32 0.0, %v2230
        %2232 = vmatmul.f32.gmra.mxu0 %v2096
        %v2233 = vpop.f32.mrf.mxu0
        %v2234 = vadd.f32 0.0, %v2233
        %2235 = vmatmul.f32.gmra.mxu0 %v2099
        %v2236 = vpop.f32.mrf.mxu0
        %v2237 = vadd.f32 0.0, %v2236
        %2238 = vmatmul.f32.gmra.mxu0 %v2102
        %v2239 = vpop.f32.mrf.mxu0
        %v2240 = vadd.f32 0.0, %v2239
        %2241 = vmatmul.f32.gmra.mxu0 %v2105
        %v2242 = vpop.f32.mrf.mxu0
        %v2243 = vadd.f32 0.0, %v2242
        %2244 = vmatmul.f32.gmra.mxu0 %v2108
        %v2245 = vpop.f32.mrf.mxu0
        %v2246 = vadd.f32 0.0, %v2245
        %2247 = vmatmul.f32.gmra.mxu0 %v2111
        %v2248 = vpop.f32.mrf.mxu0
        %v2249 = vadd.f32 0.0, %v2248
        %2250 = vmatmul.f32.gmra.mxu0 %v2114
        %v2251 = vpop.f32.mrf.mxu0
        %v2252 = vadd.f32 0.0, %v2251
        %2253 = vmatmul.f32.gmra.mxu0 %v2117
        %v2254 = vpop.f32.mrf.mxu0
        %v2255 = vadd.f32 0.0, %v2254
        %2256 = vmatmul.f32.gmra.mxu0 %v2120
        %v2257 = vpop.f32.mrf.mxu0
        %v2258 = vadd.f32 0.0, %v2257
        %2259 = vdwg.mxu0
        %v2260 = vadd.f32 %v2024, %v2143
        %v2261 = vadd.f32 %v2025, %v2146
        %v2262 = vadd.f32 %v2026, %v2149
        %v2263 = vadd.f32 %v2027, %v2152
        %v2264 = vadd.f32 %v2028, %v2155
        %v2265 = vadd.f32 %v2029, %v2158
        %v2266 = vadd.f32 %v2030, %v2161
        %v2267 = vadd.f32 %v2031, %v2164
        %v2268 = vadd.f32 %v2032, %v2167
        %v2269 = vadd.f32 %v2033, %v2170
        %v2270 = vadd.f32 %v2034, %v2173
        %v2271 = vadd.f32 %v2035, %v2176
        %v2272 = vadd.f32 %v2036, %v2179
        %v2273 = vadd.f32 %v2037, %v2182
        %v2274 = vadd.f32 %v2038, %v2185
        %v2275 = vadd.f32 %v2039, %v2188
        %v2276 = vadd.f32 %v2040, %v2213
        %v2277 = vadd.f32 %v2041, %v2216
        %v2278 = vadd.f32 %v2042, %v2219
        %v2279 = vadd.f32 %v2043, %v2222
        %v2280 = vadd.f32 %v2044, %v2225
        %v2281 = vadd.f32 %v2045, %v2228
        %v2282 = vadd.f32 %v2046, %v2231
        %v2283 = vadd.f32 %v2047, %v2234
        %v2284 = vadd.f32 %v2048, %v2237
        %v2285 = vadd.f32 %v2049, %v2240
        %v2286 = vadd.f32 %v2050, %v2243
        %v2287 = vadd.f32 %v2051, %v2246
        %v2288 = vadd.f32 %v2052, %v2249
        %v2289 = vadd.f32 %v2053, %v2252
        %v2290 = vadd.f32 %v2054, %v2255
        %v2291 = vadd.f32 %v2055, %v2258
        %v2292 = vld [vmem:[%s1819 + $0x2] sm:$0xff]
        %v2293 = vld [vmem:[%s1819 + $0xa] sm:$0xff]
        %v2294 = vld [vmem:[%s1819 + $0x1a] sm:$0xff]
        %v2295 = vld [vmem:[%s1819 + $0x22] sm:$0xff]
        %v2296 = vld [vmem:[%s1819 + $0x32] sm:$0xff]
        %v2297 = vld [vmem:[%s1819 + $0x3a] sm:$0xff]
        %v2298 = vld [vmem:[%s1819 + $0x4a] sm:$0xff]
        %v2299 = vld [vmem:[%s1819 + $0x52] sm:$0xff]
        %v2300 = vld [vmem:[%s1819 + $0x62] sm:$0xff]
        %v2301 = vld [vmem:[%s1819 + $0x6a] sm:$0xff]
        %v2302 = vld [vmem:[%s1819 + $0x7a] sm:$0xff]
        %v2303 = vld [vmem:[%s1819 + $0x82] sm:$0xff]
        %v2304 = vld [vmem:[%s1819 + $0x92] sm:$0xff]
        %v2305 = vld [vmem:[%s1819 + $0x9a] sm:$0xff]
        %v2306 = vld [vmem:[%s1819 + $0xaa] sm:$0xff]
        %v2307 = vld [vmem:[%s1819 + $0xb2] sm:$0xff]
        %s2308 = scalar_lea.vmem %s3, 32
        %v2309 = vld [vmem:[%s2308] sm:$0xf]
        %v2311 = vsel %vm426, %v2292, 0
        %v2314 = vsel %vm426, %v2293, 0
        %v2317 = vsel %vm426, %v2294, 0
        %v2320 = vsel %vm426, %v2295, 0
        %v2323 = vsel %vm426, %v2296, 0
        %v2326 = vsel %vm426, %v2297, 0
        %v2329 = vsel %vm426, %v2298, 0
        %v2332 = vsel %vm426, %v2299, 0
        %v2335 = vsel %vm426, %v2300, 0
        %v2338 = vsel %vm426, %v2301, 0
        %v2341 = vsel %vm426, %v2302, 0
        %v2344 = vsel %vm426, %v2303, 0
        %v2347 = vsel %vm426, %v2304, 0
        %v2350 = vsel %vm426, %v2305, 0
        %v2353 = vsel %vm426, %v2306, 0
        %v2356 = vsel %vm426, %v2307, 0
        %v2359 = vsel %vm551, %v2309, 0
        %2361 = vmatpush.msra.mxu0 0.0
        %2362 = vmatpush.msra.mxu0 0.0
        %2363 = vmatpush.msra.mxu0 0.0
        %2364 = vmatpush.msra.mxu0 0.0
        %2365 = vmatpush.msra.mxu0 0.0
        %2366 = vmatpush.msra.mxu0 0.0
        %2367 = vmatpush.msra.mxu0 0.0
        %2368 = vmatpush.msra.mxu0 0.0
        %2369 = vmatpush.msra.mxu0 0.0
        %2370 = vmatpush.msra.mxu0 0.0
        %2371 = vmatpush.msra.mxu0 0.0
        %2372 = vmatpush.msra.mxu0 0.0
        %2373 = vmatpush.msra.mxu0 0.0
        %2374 = vmatpush.msra.mxu0 0.0
        %2375 = vmatpush.msra.mxu0 0.0
        %2376 = vmatpush.msra.mxu0 %v2359
        %2377 = vmatmul.f32.gmra.mxu0 %v2311
        %v2378 = vpop.f32.mrf.mxu0
        %v2379 = vadd.f32 0.0, %v2378
        %2380 = vmatmul.f32.gmra.mxu0 %v2314
        %v2381 = vpop.f32.mrf.mxu0
        %v2382 = vadd.f32 0.0, %v2381
        %2383 = vmatmul.f32.gmra.mxu0 %v2317
        %v2384 = vpop.f32.mrf.mxu0
        %v2385 = vadd.f32 0.0, %v2384
        %2386 = vmatmul.f32.gmra.mxu0 %v2320
        %v2387 = vpop.f32.mrf.mxu0
        %v2388 = vadd.f32 0.0, %v2387
        %2389 = vmatmul.f32.gmra.mxu0 %v2323
        %v2390 = vpop.f32.mrf.mxu0
        %v2391 = vadd.f32 0.0, %v2390
        %2392 = vmatmul.f32.gmra.mxu0 %v2326
        %v2393 = vpop.f32.mrf.mxu0
        %v2394 = vadd.f32 0.0, %v2393
        %2395 = vmatmul.f32.gmra.mxu0 %v2329
        %v2396 = vpop.f32.mrf.mxu0
        %v2397 = vadd.f32 0.0, %v2396
        %2398 = vmatmul.f32.gmra.mxu0 %v2332
        %v2399 = vpop.f32.mrf.mxu0
        %v2400 = vadd.f32 0.0, %v2399
        %2401 = vmatmul.f32.gmra.mxu0 %v2335
        %v2402 = vpop.f32.mrf.mxu0
        %v2403 = vadd.f32 0.0, %v2402
        %2404 = vmatmul.f32.gmra.mxu0 %v2338
        %v2405 = vpop.f32.mrf.mxu0
        %v2406 = vadd.f32 0.0, %v2405
        %2407 = vmatmul.f32.gmra.mxu0 %v2341
        %v2408 = vpop.f32.mrf.mxu0
        %v2409 = vadd.f32 0.0, %v2408
        %2410 = vmatmul.f32.gmra.mxu0 %v2344
        %v2411 = vpop.f32.mrf.mxu0
        %v2412 = vadd.f32 0.0, %v2411
        %2413 = vmatmul.f32.gmra.mxu0 %v2347
        %v2414 = vpop.f32.mrf.mxu0
        %v2415 = vadd.f32 0.0, %v2414
        %2416 = vmatmul.f32.gmra.mxu0 %v2350
        %v2417 = vpop.f32.mrf.mxu0
        %v2418 = vadd.f32 0.0, %v2417
        %2419 = vmatmul.f32.gmra.mxu0 %v2353
        %v2420 = vpop.f32.mrf.mxu0
        %v2421 = vadd.f32 0.0, %v2420
        %2422 = vmatmul.f32.gmra.mxu0 %v2356
        %v2423 = vpop.f32.mrf.mxu0
        %v2424 = vadd.f32 0.0, %v2423
        %2425 = vdwg.mxu0
        %s2426 = scalar_lea.vmem %s3, 68
        %v2427 = vld [vmem:[%s2426] sm:$0xf]
        %v2429 = vsel %vm551, %v2427, 0
        %2431 = vmatpush.msra.mxu0 0.0
        %2432 = vmatpush.msra.mxu0 0.0
        %2433 = vmatpush.msra.mxu0 0.0
        %2434 = vmatpush.msra.mxu0 0.0
        %2435 = vmatpush.msra.mxu0 0.0
        %2436 = vmatpush.msra.mxu0 0.0
        %2437 = vmatpush.msra.mxu0 0.0
        %2438 = vmatpush.msra.mxu0 0.0
        %2439 = vmatpush.msra.mxu0 0.0
        %2440 = vmatpush.msra.mxu0 0.0
        %2441 = vmatpush.msra.mxu0 0.0
        %2442 = vmatpush.msra.mxu0 0.0
        %2443 = vmatpush.msra.mxu0 0.0
        %2444 = vmatpush.msra.mxu0 0.0
        %2445 = vmatpush.msra.mxu0 0.0
        %2446 = vmatpush.msra.mxu0 %v2429
        %2447 = vmatmul.f32.gmra.mxu0 %v2311
        %v2448 = vpop.f32.mrf.mxu0
        %v2449 = vadd.f32 0.0, %v2448
        %2450 = vmatmul.f32.gmra.mxu0 %v2314
        %v2451 = vpop.f32.mrf.mxu0
        %v2452 = vadd.f32 0.0, %v2451
        %2453 = vmatmul.f32.gmra.mxu0 %v2317
        %v2454 = vpop.f32.mrf.mxu0
        %v2455 = vadd.f32 0.0, %v2454
        %2456 = vmatmul.f32.gmra.mxu0 %v2320
        %v2457 = vpop.f32.mrf.mxu0
        %v2458 = vadd.f32 0.0, %v2457
        %2459 = vmatmul.f32.gmra.mxu0 %v2323
        %v2460 = vpop.f32.mrf.mxu0
        %v2461 = vadd.f32 0.0, %v2460
        %2462 = vmatmul.f32.gmra.mxu0 %v2326
        %v2463 = vpop.f32.mrf.mxu0
        %v2464 = vadd.f32 0.0, %v2463
        %2465 = vmatmul.f32.gmra.mxu0 %v2329
        %v2466 = vpop.f32.mrf.mxu0
        %v2467 = vadd.f32 0.0, %v2466
        %2468 = vmatmul.f32.gmra.mxu0 %v2332
        %v2469 = vpop.f32.mrf.mxu0
        %v2470 = vadd.f32 0.0, %v2469
        %2471 = vmatmul.f32.gmra.mxu0 %v2335
        %v2472 = vpop.f32.mrf.mxu0
        %v2473 = vadd.f32 0.0, %v2472
        %2474 = vmatmul.f32.gmra.mxu0 %v2338
        %v2475 = vpop.f32.mrf.mxu0
        %v2476 = vadd.f32 0.0, %v2475
        %2477 = vmatmul.f32.gmra.mxu0 %v2341
        %v2478 = vpop.f32.mrf.mxu0
        %v2479 = vadd.f32 0.0, %v2478
        %2480 = vmatmul.f32.gmra.mxu0 %v2344
        %v2481 = vpop.f32.mrf.mxu0
        %v2482 = vadd.f32 0.0, %v2481
        %2483 = vmatmul.f32.gmra.mxu0 %v2347
        %v2484 = vpop.f32.mrf.mxu0
        %v2485 = vadd.f32 0.0, %v2484
        %2486 = vmatmul.f32.gmra.mxu0 %v2350
        %v2487 = vpop.f32.mrf.mxu0
        %v2488 = vadd.f32 0.0, %v2487
        %2489 = vmatmul.f32.gmra.mxu0 %v2353
        %v2490 = vpop.f32.mrf.mxu0
        %v2491 = vadd.f32 0.0, %v2490
        %2492 = vmatmul.f32.gmra.mxu0 %v2356
        %v2493 = vpop.f32.mrf.mxu0
        %v2494 = vadd.f32 0.0, %v2493
        %2495 = vdwg.mxu0
        %v2496 = vadd.f32 %v2260, %v2379
        %v2497 = vadd.f32 %v2261, %v2382
        %v2498 = vadd.f32 %v2262, %v2385
        %v2499 = vadd.f32 %v2263, %v2388
        %v2500 = vadd.f32 %v2264, %v2391
        %v2501 = vadd.f32 %v2265, %v2394
        %v2502 = vadd.f32 %v2266, %v2397
        %v2503 = vadd.f32 %v2267, %v2400
        %v2504 = vadd.f32 %v2268, %v2403
        %v2505 = vadd.f32 %v2269, %v2406
        %v2506 = vadd.f32 %v2270, %v2409
        %v2507 = vadd.f32 %v2271, %v2412
        %v2508 = vadd.f32 %v2272, %v2415
        %v2509 = vadd.f32 %v2273, %v2418
        %v2510 = vadd.f32 %v2274, %v2421
        %v2511 = vadd.f32 %v2275, %v2424
        %v2512 = vadd.f32 %v2276, %v2449
        %v2513 = vadd.f32 %v2277, %v2452
        %v2514 = vadd.f32 %v2278, %v2455
        %v2515 = vadd.f32 %v2279, %v2458
        %v2516 = vadd.f32 %v2280, %v2461
        %v2517 = vadd.f32 %v2281, %v2464
        %v2518 = vadd.f32 %v2282, %v2467
        %v2519 = vadd.f32 %v2283, %v2470
        %v2520 = vadd.f32 %v2284, %v2473
        %v2521 = vadd.f32 %v2285, %v2476
        %v2522 = vadd.f32 %v2286, %v2479
        %v2523 = vadd.f32 %v2287, %v2482
        %v2524 = vadd.f32 %v2288, %v2485
        %v2525 = vadd.f32 %v2289, %v2488
        %v2526 = vadd.f32 %v2290, %v2491
        %v2527 = vadd.f32 %v2291, %v2494
        %vm2528 = vcmask 130048
        %v2529 = vsel %vm2528, %v2496, 0.0
        %v2530 = vsel %vm2528, %v2497, 0.0
        %v2531 = vadd.f32 %v2529, %v2530
        %v2532 = vsel %vm2528, %v2498, 0.0
        %v2533 = vadd.f32 %v2531, %v2532
        %v2534 = vsel %vm2528, %v2499, 0.0
        %v2535 = vadd.f32 %v2533, %v2534
        %v2536 = vsel %vm2528, %v2500, 0.0
        %v2537 = vadd.f32 %v2535, %v2536
        %v2538 = vsel %vm2528, %v2501, 0.0
        %v2539 = vadd.f32 %v2537, %v2538
        %v2540 = vsel %vm2528, %v2502, 0.0
        %v2541 = vadd.f32 %v2539, %v2540
        %v2542 = vsel %vm2528, %v2503, 0.0
        %v2543 = vadd.f32 %v2541, %v2542
        %v2544 = vsel %vm2528, %v2504, 0.0
        %v2545 = vadd.f32 %v2543, %v2544
        %v2546 = vsel %vm2528, %v2505, 0.0
        %v2547 = vadd.f32 %v2545, %v2546
        %v2548 = vsel %vm2528, %v2506, 0.0
        %v2549 = vadd.f32 %v2547, %v2548
        %v2550 = vsel %vm2528, %v2507, 0.0
        %v2551 = vadd.f32 %v2549, %v2550
        %v2552 = vsel %vm2528, %v2508, 0.0
        %v2553 = vadd.f32 %v2551, %v2552
        %v2554 = vsel %vm2528, %v2509, 0.0
        %v2555 = vadd.f32 %v2553, %v2554
        %v2556 = vsel %vm2528, %v2510, 0.0
        %v2557 = vadd.f32 %v2555, %v2556
        %v2558 = vsel %vm2528, %v2511, 0.0
        %v2559 = vadd.f32 %v2557, %v2558
        %v2560 = vrot.slane %v2559, 4
        %v2561 = vadd.f32 %v2559, %v2560
        %v2562 = vrot.slane %v2561, 2
        %v2563 = vadd.f32 %v2561, %v2562
        %v2564 = vrot.slane %v2563, 1
        %v2565 = vadd.f32 %v2563, %v2564
        %v2566 = vsel %vm2528, %v2512, 0.0
        %v2567 = vsel %vm2528, %v2513, 0.0
        %v2568 = vadd.f32 %v2566, %v2567
        %v2569 = vsel %vm2528, %v2514, 0.0
        %v2570 = vadd.f32 %v2568, %v2569
        %v2571 = vsel %vm2528, %v2515, 0.0
        %v2572 = vadd.f32 %v2570, %v2571
        %v2573 = vsel %vm2528, %v2516, 0.0
        %v2574 = vadd.f32 %v2572, %v2573
        %v2575 = vsel %vm2528, %v2517, 0.0
        %v2576 = vadd.f32 %v2574, %v2575
        %v2577 = vsel %vm2528, %v2518, 0.0
        %v2578 = vadd.f32 %v2576, %v2577
        %v2579 = vsel %vm2528, %v2519, 0.0
        %v2580 = vadd.f32 %v2578, %v2579
        %v2581 = vsel %vm2528, %v2520, 0.0
        %v2582 = vadd.f32 %v2580, %v2581
        %v2583 = vsel %vm2528, %v2521, 0.0
        %v2584 = vadd.f32 %v2582, %v2583
        %v2585 = vsel %vm2528, %v2522, 0.0
        %v2586 = vadd.f32 %v2584, %v2585
        %v2587 = vsel %vm2528, %v2523, 0.0
        %v2588 = vadd.f32 %v2586, %v2587
        %v2589 = vsel %vm2528, %v2524, 0.0
        %v2590 = vadd.f32 %v2588, %v2589
        %v2591 = vsel %vm2528, %v2525, 0.0
        %v2592 = vadd.f32 %v2590, %v2591
        %v2593 = vsel %vm2528, %v2526, 0.0
        %v2594 = vadd.f32 %v2592, %v2593
        %v2595 = vsel %vm2528, %v2527, 0.0
        %v2596 = vadd.f32 %v2594, %v2595
        %v2597 = vrot.slane %v2596, 4
        %v2598 = vadd.f32 %v2596, %v2597
        %v2599 = vrot.slane %v2598, 2
        %v2600 = vadd.f32 %v2598, %v2599
        %v2601 = vrot.slane %v2600, 1
        %v2602 = vadd.f32 %v2600, %v2601
        %v2603 = vadd.f32 %v2565, %v2602
        %v2604 = vmul.f32 %v2496, %v2496
        %v2605 = vmul.f32 %v2497, %v2497
        %v2606 = vmul.f32 %v2498, %v2498
        %v2607 = vmul.f32 %v2499, %v2499
        %v2608 = vmul.f32 %v2500, %v2500
        %v2609 = vmul.f32 %v2501, %v2501
        %v2610 = vmul.f32 %v2502, %v2502
        %v2611 = vmul.f32 %v2503, %v2503
        %v2612 = vmul.f32 %v2504, %v2504
        %v2613 = vmul.f32 %v2505, %v2505
        %v2614 = vmul.f32 %v2506, %v2506
        %v2615 = vmul.f32 %v2507, %v2507
        %v2616 = vmul.f32 %v2508, %v2508
        %v2617 = vmul.f32 %v2509, %v2509
        %v2618 = vmul.f32 %v2510, %v2510
        %v2619 = vmul.f32 %v2511, %v2511
        %v2620 = vsel %vm2528, %v2604, 0.0
        %v2621 = vsel %vm2528, %v2605, 0.0
        %v2622 = vadd.f32 %v2620, %v2621
        %v2623 = vsel %vm2528, %v2606, 0.0
        %v2624 = vadd.f32 %v2622, %v2623
        %v2625 = vsel %vm2528, %v2607, 0.0
        %v2626 = vadd.f32 %v2624, %v2625
        %v2627 = vsel %vm2528, %v2608, 0.0
        %v2628 = vadd.f32 %v2626, %v2627
        %v2629 = vsel %vm2528, %v2609, 0.0
        %v2630 = vadd.f32 %v2628, %v2629
        %v2631 = vsel %vm2528, %v2610, 0.0
        %v2632 = vadd.f32 %v2630, %v2631
        %v2633 = vsel %vm2528, %v2611, 0.0
        %v2634 = vadd.f32 %v2632, %v2633
        %v2635 = vsel %vm2528, %v2612, 0.0
        %v2636 = vadd.f32 %v2634, %v2635
        %v2637 = vsel %vm2528, %v2613, 0.0
        %v2638 = vadd.f32 %v2636, %v2637
        %v2639 = vsel %vm2528, %v2614, 0.0
        %v2640 = vadd.f32 %v2638, %v2639
        %v2641 = vsel %vm2528, %v2615, 0.0
        %v2642 = vadd.f32 %v2640, %v2641
        %v2643 = vsel %vm2528, %v2616, 0.0
        %v2644 = vadd.f32 %v2642, %v2643
        %v2645 = vsel %vm2528, %v2617, 0.0
        %v2646 = vadd.f32 %v2644, %v2645
        %v2647 = vsel %vm2528, %v2618, 0.0
        %v2648 = vadd.f32 %v2646, %v2647
        %v2649 = vsel %vm2528, %v2619, 0.0
        %v2650 = vadd.f32 %v2648, %v2649
        %v2651 = vrot.slane %v2650, 4
        %v2652 = vadd.f32 %v2650, %v2651
        %v2653 = vrot.slane %v2652, 2
        %v2654 = vadd.f32 %v2652, %v2653
        %v2655 = vrot.slane %v2654, 1
        %v2656 = vadd.f32 %v2654, %v2655
        %v2657 = vmul.f32 %v2512, %v2512
        %v2658 = vmul.f32 %v2513, %v2513
        %v2659 = vmul.f32 %v2514, %v2514
        %v2660 = vmul.f32 %v2515, %v2515
        %v2661 = vmul.f32 %v2516, %v2516
        %v2662 = vmul.f32 %v2517, %v2517
        %v2663 = vmul.f32 %v2518, %v2518
        %v2664 = vmul.f32 %v2519, %v2519
        %v2665 = vmul.f32 %v2520, %v2520
        %v2666 = vmul.f32 %v2521, %v2521
        %v2667 = vmul.f32 %v2522, %v2522
        %v2668 = vmul.f32 %v2523, %v2523
        %v2669 = vmul.f32 %v2524, %v2524
        %v2670 = vmul.f32 %v2525, %v2525
        %v2671 = vmul.f32 %v2526, %v2526
        %v2672 = vmul.f32 %v2527, %v2527
        %v2673 = vsel %vm2528, %v2657, 0.0
        %v2674 = vsel %vm2528, %v2658, 0.0
        %v2675 = vadd.f32 %v2673, %v2674
        %v2676 = vsel %vm2528, %v2659, 0.0
        %v2677 = vadd.f32 %v2675, %v2676
        %v2678 = vsel %vm2528, %v2660, 0.0
        %v2679 = vadd.f32 %v2677, %v2678
        %v2680 = vsel %vm2528, %v2661, 0.0
        %v2681 = vadd.f32 %v2679, %v2680
        %v2682 = vsel %vm2528, %v2662, 0.0
        %v2683 = vadd.f32 %v2681, %v2682
        %v2684 = vsel %vm2528, %v2663, 0.0
        %v2685 = vadd.f32 %v2683, %v2684
        %v2686 = vsel %vm2528, %v2664, 0.0
        %v2687 = vadd.f32 %v2685, %v2686
        %v2688 = vsel %vm2528, %v2665, 0.0
        %v2689 = vadd.f32 %v2687, %v2688
        %v2690 = vsel %vm2528, %v2666, 0.0
        %v2691 = vadd.f32 %v2689, %v2690
        %v2692 = vsel %vm2528, %v2667, 0.0
        %v2693 = vadd.f32 %v2691, %v2692
        %v2694 = vsel %vm2528, %v2668, 0.0
        %v2695 = vadd.f32 %v2693, %v2694
        %v2696 = vsel %vm2528, %v2669, 0.0
        %v2697 = vadd.f32 %v2695, %v2696
        %v2698 = vsel %vm2528, %v2670, 0.0
        %v2699 = vadd.f32 %v2697, %v2698
        %v2700 = vsel %vm2528, %v2671, 0.0
        %v2701 = vadd.f32 %v2699, %v2700
        %v2702 = vsel %vm2528, %v2672, 0.0
        %v2703 = vadd.f32 %v2701, %v2702
        %v2704 = vrot.slane %v2703, 4
        %v2705 = vadd.f32 %v2703, %v2704
        %v2706 = vrot.slane %v2705, 2
        %v2707 = vadd.f32 %v2705, %v2706
        %v2708 = vrot.slane %v2707, 1
        %v2709 = vadd.f32 %v2707, %v2708
        %v2710 = vadd.f32 %v2656, %v2709
        %2712 = vrot.lane.b32.xlu0 %v2603, 120
        %v2713 = vpop.permute.xlu0 %2712
        %v2715 = vadd.f32 %v2603, %v2713
        %vm2716 = vcmask 57344
        %2717 = vst.msk [vmem:[%s401] sm:$0x1] %vm2716, %v2715
        %2719 = vrot.lane.b32.xlu0 %v2710, 120
        %v2720 = vpop.permute.xlu0 %2719
        %v2722 = vadd.f32 %v2710, %v2720
        %2723 = vst.msk [vmem:[%s401 + $0x1] sm:$0x1] %vm2716, %v2722
        %vm2724 = vcmask 64512
        %2725 = vst.msk [vmem:[%s333] sm:$0xff] %vm2724, %v2496
        %2726 = vst.msk [vmem:[%s333 + $0x8] sm:$0xff] %vm2724, %v2497
        %2727 = vst.msk [vmem:[%s333 + $0x10] sm:$0xff] %vm2724, %v2498
        %2728 = vst.msk [vmem:[%s333 + $0x18] sm:$0xff] %vm2724, %v2499
        %2729 = vst.msk [vmem:[%s333 + $0x20] sm:$0xff] %vm2724, %v2500
        %2730 = vst.msk [vmem:[%s333 + $0x28] sm:$0xff] %vm2724, %v2501
        %2731 = vst.msk [vmem:[%s333 + $0x30] sm:$0xff] %vm2724, %v2502
        %2732 = vst.msk [vmem:[%s333 + $0x38] sm:$0xff] %vm2724, %v2503
        %2733 = vst.msk [vmem:[%s333 + $0x40] sm:$0xff] %vm2724, %v2504
        %2734 = vst.msk [vmem:[%s333 + $0x48] sm:$0xff] %vm2724, %v2505
        %2735 = vst.msk [vmem:[%s333 + $0x50] sm:$0xff] %vm2724, %v2506
        %2736 = vst.msk [vmem:[%s333 + $0x58] sm:$0xff] %vm2724, %v2507
        %2737 = vst.msk [vmem:[%s333 + $0x60] sm:$0xff] %vm2724, %v2508
        %2738 = vst.msk [vmem:[%s333 + $0x68] sm:$0xff] %vm2724, %v2509
        %2739 = vst.msk [vmem:[%s333 + $0x70] sm:$0xff] %vm2724, %v2510
        %2740 = vst.msk [vmem:[%s333 + $0x78] sm:$0xff] %vm2724, %v2511
        %2757 = vrot.lane.b32.xlu0 %v2496, 120
        %v2758 = vpop.permute.xlu0 %2757
        %2759 = vrot.lane.b32.xlu0 %v2497, 120
        %v2760 = vpop.permute.xlu0 %2759
        %2761 = vrot.lane.b32.xlu0 %v2498, 120
        %v2762 = vpop.permute.xlu0 %2761
        %2763 = vrot.lane.b32.xlu0 %v2499, 120
        %v2764 = vpop.permute.xlu0 %2763
        %2765 = vrot.lane.b32.xlu0 %v2500, 120
        %v2766 = vpop.permute.xlu0 %2765
        %2767 = vrot.lane.b32.xlu0 %v2501, 120
        %v2768 = vpop.permute.xlu0 %2767
        %2769 = vrot.lane.b32.xlu0 %v2502, 120
        %v2770 = vpop.permute.xlu0 %2769
        %2771 = vrot.lane.b32.xlu0 %v2503, 120
        %v2772 = vpop.permute.xlu0 %2771
        %2773 = vrot.lane.b32.xlu0 %v2504, 120
        %v2774 = vpop.permute.xlu0 %2773
        %2775 = vrot.lane.b32.xlu0 %v2505, 120
        %v2776 = vpop.permute.xlu0 %2775
        %2777 = vrot.lane.b32.xlu0 %v2506, 120
        %v2778 = vpop.permute.xlu0 %2777
        %2779 = vrot.lane.b32.xlu0 %v2507, 120
        %v2780 = vpop.permute.xlu0 %2779
        %2781 = vrot.lane.b32.xlu0 %v2508, 120
        %v2782 = vpop.permute.xlu0 %2781
        %2783 = vrot.lane.b32.xlu0 %v2509, 120
        %v2784 = vpop.permute.xlu0 %2783
        %2785 = vrot.lane.b32.xlu0 %v2510, 120
        %v2786 = vpop.permute.xlu0 %2785
        %2787 = vrot.lane.b32.xlu0 %v2511, 120
        %v2788 = vpop.permute.xlu0 %2787
        %s2805 = scalar_lea.vmem %s333, 128 [#allocation3]
        %2806 = vst.msk [vmem:[%s2805] sm:$0xff] %vm2724, %v2758
        %2807 = vst.msk [vmem:[%s2805 + $0x8] sm:$0xff] %vm2724, %v2760
        %2808 = vst.msk [vmem:[%s2805 + $0x10] sm:$0xff] %vm2724, %v2762
        %2809 = vst.msk [vmem:[%s2805 + $0x18] sm:$0xff] %vm2724, %v2764
        %2810 = vst.msk [vmem:[%s2805 + $0x20] sm:$0xff] %vm2724, %v2766
        %2811 = vst.msk [vmem:[%s2805 + $0x28] sm:$0xff] %vm2724, %v2768
        %2812 = vst.msk [vmem:[%s2805 + $0x30] sm:$0xff] %vm2724, %v2770
        %2813 = vst.msk [vmem:[%s2805 + $0x38] sm:$0xff] %vm2724, %v2772
        %2814 = vst.msk [vmem:[%s2805 + $0x40] sm:$0xff] %vm2724, %v2774
        %2815 = vst.msk [vmem:[%s2805 + $0x48] sm:$0xff] %vm2724, %v2776
        %2816 = vst.msk [vmem:[%s2805 + $0x50] sm:$0xff] %vm2724, %v2778
        %2817 = vst.msk [vmem:[%s2805 + $0x58] sm:$0xff] %vm2724, %v2780
        %2818 = vst.msk [vmem:[%s2805 + $0x60] sm:$0xff] %vm2724, %v2782
        %2819 = vst.msk [vmem:[%s2805 + $0x68] sm:$0xff] %vm2724, %v2784
        %2820 = vst.msk [vmem:[%s2805 + $0x70] sm:$0xff] %vm2724, %v2786
        %2821 = vst.msk [vmem:[%s2805 + $0x78] sm:$0xff] %vm2724, %v2788
        %s2822 = scalar_lea.vmem %s333, 256 [#allocation3]
        %2823 = vst.msk [vmem:[%s2822] sm:$0xff] %vm2724, %v2512
        %2824 = vst.msk [vmem:[%s2822 + $0x8] sm:$0xff] %vm2724, %v2513
        %2825 = vst.msk [vmem:[%s2822 + $0x10] sm:$0xff] %vm2724, %v2514
        %2826 = vst.msk [vmem:[%s2822 + $0x18] sm:$0xff] %vm2724, %v2515
        %2827 = vst.msk [vmem:[%s2822 + $0x20] sm:$0xff] %vm2724, %v2516
        %2828 = vst.msk [vmem:[%s2822 + $0x28] sm:$0xff] %vm2724, %v2517
        %2829 = vst.msk [vmem:[%s2822 + $0x30] sm:$0xff] %vm2724, %v2518
        %2830 = vst.msk [vmem:[%s2822 + $0x38] sm:$0xff] %vm2724, %v2519
        %2831 = vst.msk [vmem:[%s2822 + $0x40] sm:$0xff] %vm2724, %v2520
        %2832 = vst.msk [vmem:[%s2822 + $0x48] sm:$0xff] %vm2724, %v2521
        %2833 = vst.msk [vmem:[%s2822 + $0x50] sm:$0xff] %vm2724, %v2522
        %2834 = vst.msk [vmem:[%s2822 + $0x58] sm:$0xff] %vm2724, %v2523
        %2835 = vst.msk [vmem:[%s2822 + $0x60] sm:$0xff] %vm2724, %v2524
        %2836 = vst.msk [vmem:[%s2822 + $0x68] sm:$0xff] %vm2724, %v2525
        %2837 = vst.msk [vmem:[%s2822 + $0x70] sm:$0xff] %vm2724, %v2526
        %2838 = vst.msk [vmem:[%s2822 + $0x78] sm:$0xff] %vm2724, %v2527
        %2855 = vrot.lane.b32.xlu0 %v2512, 120
        %v2856 = vpop.permute.xlu0 %2855
        %2857 = vrot.lane.b32.xlu0 %v2513, 120
        %v2858 = vpop.permute.xlu0 %2857
        %2859 = vrot.lane.b32.xlu0 %v2514, 120
        %v2860 = vpop.permute.xlu0 %2859
        %2861 = vrot.lane.b32.xlu0 %v2515, 120
        %v2862 = vpop.permute.xlu0 %2861
        %2863 = vrot.lane.b32.xlu0 %v2516, 120
        %v2864 = vpop.permute.xlu0 %2863
        %2865 = vrot.lane.b32.xlu0 %v2517, 120
        %v2866 = vpop.permute.xlu0 %2865
        %2867 = vrot.lane.b32.xlu0 %v2518, 120
        %v2868 = vpop.permute.xlu0 %2867
        %2869 = vrot.lane.b32.xlu0 %v2519, 120
        %v2870 = vpop.permute.xlu0 %2869
        %2871 = vrot.lane.b32.xlu0 %v2520, 120
        %v2872 = vpop.permute.xlu0 %2871
        %2873 = vrot.lane.b32.xlu0 %v2521, 120
        %v2874 = vpop.permute.xlu0 %2873
        %2875 = vrot.lane.b32.xlu0 %v2522, 120
        %v2876 = vpop.permute.xlu0 %2875
        %2877 = vrot.lane.b32.xlu0 %v2523, 120
        %v2878 = vpop.permute.xlu0 %2877
        %2879 = vrot.lane.b32.xlu0 %v2524, 120
        %v2880 = vpop.permute.xlu0 %2879
        %2881 = vrot.lane.b32.xlu0 %v2525, 120
        %v2882 = vpop.permute.xlu0 %2881
        %2883 = vrot.lane.b32.xlu0 %v2526, 120
        %v2884 = vpop.permute.xlu0 %2883
        %2885 = vrot.lane.b32.xlu0 %v2527, 120
        %v2886 = vpop.permute.xlu0 %2885
        %s2903 = scalar_lea.vmem %s333, 384 [#allocation3]
        %2904 = vst.msk [vmem:[%s2903] sm:$0xff] %vm2724, %v2856
        %2905 = vst.msk [vmem:[%s2903 + $0x8] sm:$0xff] %vm2724, %v2858
        %2906 = vst.msk [vmem:[%s2903 + $0x10] sm:$0xff] %vm2724, %v2860
        %2907 = vst.msk [vmem:[%s2903 + $0x18] sm:$0xff] %vm2724, %v2862
        %2908 = vst.msk [vmem:[%s2903 + $0x20] sm:$0xff] %vm2724, %v2864
        %2909 = vst.msk [vmem:[%s2903 + $0x28] sm:$0xff] %vm2724, %v2866
        %2910 = vst.msk [vmem:[%s2903 + $0x30] sm:$0xff] %vm2724, %v2868
        %2911 = vst.msk [vmem:[%s2903 + $0x38] sm:$0xff] %vm2724, %v2870
        %2912 = vst.msk [vmem:[%s2903 + $0x40] sm:$0xff] %vm2724, %v2872
        %2913 = vst.msk [vmem:[%s2903 + $0x48] sm:$0xff] %vm2724, %v2874
        %2914 = vst.msk [vmem:[%s2903 + $0x50] sm:$0xff] %vm2724, %v2876
        %2915 = vst.msk [vmem:[%s2903 + $0x58] sm:$0xff] %vm2724, %v2878
        %2916 = vst.msk [vmem:[%s2903 + $0x60] sm:$0xff] %vm2724, %v2880
        %2917 = vst.msk [vmem:[%s2903 + $0x68] sm:$0xff] %vm2724, %v2882
        %2918 = vst.msk [vmem:[%s2903 + $0x70] sm:$0xff] %vm2724, %v2884
        %2919 = vst.msk [vmem:[%s2903 + $0x78] sm:$0xff] %vm2724, %v2886
        %s2920 = sand.u32 %s154, 1
        %s2921 = sand.u32 %s154, 1
        %s2922 = smul.addr %s2921, 512
        %s2923 = scalar_lea.vmem [#allocation3], %s2922
        %p2924 = scmp.lt.s32.totalorder %s21, 1
        %s2925 = scalar_select %p2924, %s21, 1
        %p2926 = scmp.lt.s32.totalorder %s22, 1
        %s2927 = scalar_select %p2926, %s22, 1
        %s2928 = smul.addr %s2925, 2
        %s2929 = sadd.s32 %s2927, %s2928
        %s2930 = smul.addr %s2929, 2
        %s2931 = scalar_lea.vmem %s5, %s2930
        // Predicated region
        $region37: #{up_conv_forward.2} parent=35 // pred_check
          %p2932 = pneg %p164
        $region38: #{up_conv_forward.2} parent=35 // pred_check_branch
          %2934 = sbr.rel (%p2932) target = $region40
        $region39: #{up_conv_forward.2} parent=35 // pred_region
          %s2935 = smul.u32 8, %s22
          %s2936 = smul.addr %s2935, 2
          %s2937 = smul.addr %s21, 128
          %s2938 = sadd.s32 %s2936, %s2937
          %s2939 = smul.addr %s2938, 8
          %s2940 = scalar_lea.vmem %s4, %s2939
          // Predicated region
          $region41: #{up_conv_forward.2} parent=39 // pred_check
            _
          $region42: #{up_conv_forward.2} parent=39 // pred_check_branch
            %2942 = sbr.rel (0) target = $region44
          $region43: #{up_conv_forward.2} parent=39 // pred_region
            // Predicated region
            $region45: #{up_conv_forward.2} parent=43 // pred_check
              _
            $region46: #{up_conv_forward.2} parent=43 // pred_check_branch
              %2944 = sbr.rel (0) target = $region48
            $region47: #{up_conv_forward.2} parent=43 // pred_region
              // Predicated region
              $region60: #{up_conv_forward.2} parent=47 // pred_check
                _
              $region61: #{up_conv_forward.2} parent=47 // pred_check_branch
                %3086 = sbr.rel (0) target = $region63
              $region62: #{up_conv_forward.2} parent=47 // pred_region
                loop: start=0, step=1, limit=1
                $region64: #{up_conv_forward.2} parent=62 // loop_pre_header
                  _
                $region65: #{up_conv_forward.2} parent=62 // loop_header
                  %s3088 = sphi 0, %s3092
                  %p3089 = scmp.ge.s32.totalorder %s3088, 1
                  %s3093 = sphi %s2923, %s2923
                  %s3094 = sphi %s2940, %s2940
                $region66: #{up_conv_forward.2} parent=62 // loop_header_branch
                  %3091 = sbr.rel (%p3089) target = $region70
                $region67: #{up_conv_forward.2} parent=62 // loop_body
                  %v3095 = vld [vmem:[%s3093] sm:$0xff]
                  %3096 = vst [vmem:[%s3094] sm:$0xff] %v3095
                  %v3097 = vld [vmem:[%s3093 + $0x8] sm:$0xff]
                  %3098 = vst [vmem:[%s3094 + $0x8] sm:$0xff] %v3097
                  %v3099 = vld [vmem:[%s3093 + $0x10] sm:$0xff]
                  %3100 = vst [vmem:[%s3094 + $0x10] sm:$0xff] %v3099
                  %v3101 = vld [vmem:[%s3093 + $0x18] sm:$0xff]
                  %3102 = vst [vmem:[%s3094 + $0x18] sm:$0xff] %v3101
                  %v3103 = vld [vmem:[%s3093 + $0x20] sm:$0xff]
                  %3104 = vst [vmem:[%s3094 + $0x20] sm:$0xff] %v3103
                  %v3105 = vld [vmem:[%s3093 + $0x28] sm:$0xff]
                  %3106 = vst [vmem:[%s3094 + $0x28] sm:$0xff] %v3105
                  %v3107 = vld [vmem:[%s3093 + $0x30] sm:$0xff]
                  %3108 = vst [vmem:[%s3094 + $0x30] sm:$0xff] %v3107
                  %v3109 = vld [vmem:[%s3093 + $0x38] sm:$0xff]
                  %3110 = vst [vmem:[%s3094 + $0x38] sm:$0xff] %v3109
                  %v3111 = vld [vmem:[%s3093 + $0x40] sm:$0xff]
                  %3112 = vst [vmem:[%s3094 + $0x40] sm:$0xff] %v3111
                  %v3113 = vld [vmem:[%s3093 + $0x48] sm:$0xff]
                  %3114 = vst [vmem:[%s3094 + $0x48] sm:$0xff] %v3113
                  %v3115 = vld [vmem:[%s3093 + $0x50] sm:$0xff]
                  %3116 = vst [vmem:[%s3094 + $0x50] sm:$0xff] %v3115
                  %v3117 = vld [vmem:[%s3093 + $0x58] sm:$0xff]
                  %3118 = vst [vmem:[%s3094 + $0x58] sm:$0xff] %v3117
                  %v3119 = vld [vmem:[%s3093 + $0x60] sm:$0xff]
                  %3120 = vst [vmem:[%s3094 + $0x60] sm:$0xff] %v3119
                  %v3121 = vld [vmem:[%s3093 + $0x68] sm:$0xff]
                  %3122 = vst [vmem:[%s3094 + $0x68] sm:$0xff] %v3121
                  %v3123 = vld [vmem:[%s3093 + $0x70] sm:$0xff]
                  %3124 = vst [vmem:[%s3094 + $0x70] sm:$0xff] %v3123
                  %v3125 = vld [vmem:[%s3093 + $0x78] sm:$0xff]
                  %3126 = vst [vmem:[%s3094 + $0x78] sm:$0xff] %v3125
                  %v3127 = vld [vmem:[%s3093 + $0x80] sm:$0xff]
                  %3128 = vst [vmem:[%s3094 + $0x100] sm:$0xff] %v3127
                  %v3129 = vld [vmem:[%s3093 + $0x88] sm:$0xff]
                  %3130 = vst [vmem:[%s3094 + $0x108] sm:$0xff] %v3129
                  %v3131 = vld [vmem:[%s3093 + $0x90] sm:$0xff]
                  %3132 = vst [vmem:[%s3094 + $0x110] sm:$0xff] %v3131
                  %v3133 = vld [vmem:[%s3093 + $0x98] sm:$0xff]
                  %3134 = vst [vmem:[%s3094 + $0x118] sm:$0xff] %v3133
                  %v3135 = vld [vmem:[%s3093 + $0xa0] sm:$0xff]
                  %3136 = vst [vmem:[%s3094 + $0x120] sm:$0xff] %v3135
                  %v3137 = vld [vmem:[%s3093 + $0xa8] sm:$0xff]
                  %3138 = vst [vmem:[%s3094 + $0x128] sm:$0xff] %v3137
                  %v3139 = vld [vmem:[%s3093 + $0xb0] sm:$0xff]
                  %3140 = vst [vmem:[%s3094 + $0x130] sm:$0xff] %v3139
                  %v3141 = vld [vmem:[%s3093 + $0xb8] sm:$0xff]
                  %3142 = vst [vmem:[%s3094 + $0x138] sm:$0xff] %v3141
                  %v3143 = vld [vmem:[%s3093 + $0xc0] sm:$0xff]
                  %3144 = vst [vmem:[%s3094 + $0x140] sm:$0xff] %v3143
                  %v3145 = vld [vmem:[%s3093 + $0xc8] sm:$0xff]
                  %3146 = vst [vmem:[%s3094 + $0x148] sm:$0xff] %v3145
                  %v3147 = vld [vmem:[%s3093 + $0xd0] sm:$0xff]
                  %3148 = vst [vmem:[%s3094 + $0x150] sm:$0xff] %v3147
                  %v3149 = vld [vmem:[%s3093 + $0xd8] sm:$0xff]
                  %3150 = vst [vmem:[%s3094 + $0x158] sm:$0xff] %v3149
                  %v3151 = vld [vmem:[%s3093 + $0xe0] sm:$0xff]
                  %3152 = vst [vmem:[%s3094 + $0x160] sm:$0xff] %v3151
                  %v3153 = vld [vmem:[%s3093 + $0xe8] sm:$0xff]
                  %3154 = vst [vmem:[%s3094 + $0x168] sm:$0xff] %v3153
                  %v3155 = vld [vmem:[%s3093 + $0xf0] sm:$0xff]
                  %3156 = vst [vmem:[%s3094 + $0x170] sm:$0xff] %v3155
                  %v3157 = vld [vmem:[%s3093 + $0xf8] sm:$0xff]
                  %3158 = vst [vmem:[%s3094 + $0x178] sm:$0xff] %v3157
                  %v3159 = vld [vmem:[%s3093 + $0x100] sm:$0xff]
                  %3160 = vst [vmem:[%s3094 + $0x200] sm:$0xff] %v3159
                  %v3161 = vld [vmem:[%s3093 + $0x108] sm:$0xff]
                  %3162 = vst [vmem:[%s3094 + $0x208] sm:$0xff] %v3161
                  %v3163 = vld [vmem:[%s3093 + $0x110] sm:$0xff]
                  %3164 = vst [vmem:[%s3094 + $0x210] sm:$0xff] %v3163
                  %v3165 = vld [vmem:[%s3093 + $0x118] sm:$0xff]
                  %3166 = vst [vmem:[%s3094 + $0x218] sm:$0xff] %v3165
                  %v3167 = vld [vmem:[%s3093 + $0x120] sm:$0xff]
                  %3168 = vst [vmem:[%s3094 + $0x220] sm:$0xff] %v3167
                  %v3169 = vld [vmem:[%s3093 + $0x128] sm:$0xff]
                  %3170 = vst [vmem:[%s3094 + $0x228] sm:$0xff] %v3169
                  %v3171 = vld [vmem:[%s3093 + $0x130] sm:$0xff]
                  %3172 = vst [vmem:[%s3094 + $0x230] sm:$0xff] %v3171
                  %v3173 = vld [vmem:[%s3093 + $0x138] sm:$0xff]
                  %3174 = vst [vmem:[%s3094 + $0x238] sm:$0xff] %v3173
                  %v3175 = vld [vmem:[%s3093 + $0x140] sm:$0xff]
                  %3176 = vst [vmem:[%s3094 + $0x240] sm:$0xff] %v3175
                  %v3177 = vld [vmem:[%s3093 + $0x148] sm:$0xff]
                  %3178 = vst [vmem:[%s3094 + $0x248] sm:$0xff] %v3177
                  %v3179 = vld [vmem:[%s3093 + $0x150] sm:$0xff]
                  %3180 = vst [vmem:[%s3094 + $0x250] sm:$0xff] %v3179
                  %v3181 = vld [vmem:[%s3093 + $0x158] sm:$0xff]
                  %3182 = vst [vmem:[%s3094 + $0x258] sm:$0xff] %v3181
                  %v3183 = vld [vmem:[%s3093 + $0x160] sm:$0xff]
                  %3184 = vst [vmem:[%s3094 + $0x260] sm:$0xff] %v3183
                  %v3185 = vld [vmem:[%s3093 + $0x168] sm:$0xff]
                  %3186 = vst [vmem:[%s3094 + $0x268] sm:$0xff] %v3185
                  %v3187 = vld [vmem:[%s3093 + $0x170] sm:$0xff]
                  %3188 = vst [vmem:[%s3094 + $0x270] sm:$0xff] %v3187
                  %v3189 = vld [vmem:[%s3093 + $0x178] sm:$0xff]
                  %3190 = vst [vmem:[%s3094 + $0x278] sm:$0xff] %v3189
                  %v3191 = vld [vmem:[%s3093 + $0x180] sm:$0xff]
                  %3192 = vst [vmem:[%s3094 + $0x300] sm:$0xff] %v3191
                  %v3193 = vld [vmem:[%s3093 + $0x188] sm:$0xff]
                  %3194 = vst [vmem:[%s3094 + $0x308] sm:$0xff] %v3193
                  %v3195 = vld [vmem:[%s3093 + $0x190] sm:$0xff]
                  %3196 = vst [vmem:[%s3094 + $0x310] sm:$0xff] %v3195
                  %v3197 = vld [vmem:[%s3093 + $0x198] sm:$0xff]
                  %3198 = vst [vmem:[%s3094 + $0x318] sm:$0xff] %v3197
                  %v3199 = vld [vmem:[%s3093 + $0x1a0] sm:$0xff]
                  %3200 = vst [vmem:[%s3094 + $0x320] sm:$0xff] %v3199
                  %v3201 = vld [vmem:[%s3093 + $0x1a8] sm:$0xff]
                  %3202 = vst [vmem:[%s3094 + $0x328] sm:$0xff] %v3201
                  %v3203 = vld [vmem:[%s3093 + $0x1b0] sm:$0xff]
                  %3204 = vst [vmem:[%s3094 + $0x330] sm:$0xff] %v3203
                  %v3205 = vld [vmem:[%s3093 + $0x1b8] sm:$0xff]
                  %3206 = vst [vmem:[%s3094 + $0x338] sm:$0xff] %v3205
                  %v3207 = vld [vmem:[%s3093 + $0x1c0] sm:$0xff]
                  %3208 = vst [vmem:[%s3094 + $0x340] sm:$0xff] %v3207
                  %v3209 = vld [vmem:[%s3093 + $0x1c8] sm:$0xff]
                  %3210 = vst [vmem:[%s3094 + $0x348] sm:$0xff] %v3209
                  %v3211 = vld [vmem:[%s3093 + $0x1d0] sm:$0xff]
                  %3212 = vst [vmem:[%s3094 + $0x350] sm:$0xff] %v3211
                  %v3213 = vld [vmem:[%s3093 + $0x1d8] sm:$0xff]
                  %3214 = vst [vmem:[%s3094 + $0x358] sm:$0xff] %v3213
                  %v3215 = vld [vmem:[%s3093 + $0x1e0] sm:$0xff]
                  %3216 = vst [vmem:[%s3094 + $0x360] sm:$0xff] %v3215
                  %v3217 = vld [vmem:[%s3093 + $0x1e8] sm:$0xff]
                  %3218 = vst [vmem:[%s3094 + $0x368] sm:$0xff] %v3217
                  %v3219 = vld [vmem:[%s3093 + $0x1f0] sm:$0xff]
                  %3220 = vst [vmem:[%s3094 + $0x370] sm:$0xff] %v3219
                  %v3221 = vld [vmem:[%s3093 + $0x1f8] sm:$0xff]
                  %3222 = vst [vmem:[%s3094 + $0x378] sm:$0xff] %v3221
                $region68: #{up_conv_forward.2} parent=62 // loop_footer
                  %s3092 = sadd.s32 1, %s3088
                $region69: #{up_conv_forward.2} parent=62 // loop_footer_branch
                  %3087 = sbr.rel target = $region65
                $region70: #{up_conv_forward.2} parent=62 // loop_exit
                  _
              $region63: #{up_conv_forward.2} parent=47 // pred_fallthru
                _
              // Predicated region
              $region71: #{up_conv_forward.2} parent=47 // pred_check
                _
              $region72: #{up_conv_forward.2} parent=47 // pred_check_branch
                %3224 = sbr.rel target = $region74
              $region73: #{up_conv_forward.2} parent=47 // pred_region
                _
              $region74: #{up_conv_forward.2} parent=47 // pred_fallthru
                _
            $region48: #{up_conv_forward.2} parent=43 // pred_fallthru
              _
            // Predicated region
            $region49: #{up_conv_forward.2} parent=43 // pred_check
              _
            $region50: #{up_conv_forward.2} parent=43 // pred_check_branch
              %2946 = sbr.rel target = $region52
            $region51: #{up_conv_forward.2} parent=43 // pred_region
              %s2948 = ssub.s32 256, 1
              loop: start=0, step=1, limit=1
              $region53: #{up_conv_forward.2} parent=51 // loop_pre_header
                _
              $region54: #{up_conv_forward.2} parent=51 // loop_header
                %s2950 = sphi 0, %s2954
                %p2951 = scmp.ge.s32.totalorder %s2950, 1
                %s2955 = sphi %s2923, %s2923
                %s2956 = sphi %s2940, %s2940
              $region55: #{up_conv_forward.2} parent=51 // loop_header_branch
                %2953 = sbr.rel (%p2951) target = $region59
              $region56: #{up_conv_forward.2} parent=51 // loop_body
                %v2957 = vld [vmem:[%s2955] sm:%s2948]
                %2958 = vst [vmem:[%s2956] sm:%s2948] %v2957
                %v2959 = vld [vmem:[%s2955 + $0x8] sm:%s2948]
                %2960 = vst [vmem:[%s2956 + $0x8] sm:%s2948] %v2959
                %v2961 = vld [vmem:[%s2955 + $0x10] sm:%s2948]
                %2962 = vst [vmem:[%s2956 + $0x10] sm:%s2948] %v2961
                %v2963 = vld [vmem:[%s2955 + $0x18] sm:%s2948]
                %2964 = vst [vmem:[%s2956 + $0x18] sm:%s2948] %v2963
                %v2965 = vld [vmem:[%s2955 + $0x20] sm:%s2948]
                %2966 = vst [vmem:[%s2956 + $0x20] sm:%s2948] %v2965
                %v2967 = vld [vmem:[%s2955 + $0x28] sm:%s2948]
                %2968 = vst [vmem:[%s2956 + $0x28] sm:%s2948] %v2967
                %v2969 = vld [vmem:[%s2955 + $0x30] sm:%s2948]
                %2970 = vst [vmem:[%s2956 + $0x30] sm:%s2948] %v2969
                %v2971 = vld [vmem:[%s2955 + $0x38] sm:%s2948]
                %2972 = vst [vmem:[%s2956 + $0x38] sm:%s2948] %v2971
                %v2973 = vld [vmem:[%s2955 + $0x40] sm:%s2948]
                %2974 = vst [vmem:[%s2956 + $0x40] sm:%s2948] %v2973
                %v2975 = vld [vmem:[%s2955 + $0x48] sm:%s2948]
                %2976 = vst [vmem:[%s2956 + $0x48] sm:%s2948] %v2975
                %v2977 = vld [vmem:[%s2955 + $0x50] sm:%s2948]
                %2978 = vst [vmem:[%s2956 + $0x50] sm:%s2948] %v2977
                %v2979 = vld [vmem:[%s2955 + $0x58] sm:%s2948]
                %2980 = vst [vmem:[%s2956 + $0x58] sm:%s2948] %v2979
                %v2981 = vld [vmem:[%s2955 + $0x60] sm:%s2948]
                %2982 = vst [vmem:[%s2956 + $0x60] sm:%s2948] %v2981
                %v2983 = vld [vmem:[%s2955 + $0x68] sm:%s2948]
                %2984 = vst [vmem:[%s2956 + $0x68] sm:%s2948] %v2983
                %v2985 = vld [vmem:[%s2955 + $0x70] sm:%s2948]
                %2986 = vst [vmem:[%s2956 + $0x70] sm:%s2948] %v2985
                %v2987 = vld [vmem:[%s2955 + $0x78] sm:%s2948]
                %2988 = vst [vmem:[%s2956 + $0x78] sm:%s2948] %v2987
                %v2989 = vld [vmem:[%s2955 + $0x80] sm:%s2948]
                %2990 = vst [vmem:[%s2956 + $0x100] sm:%s2948] %v2989
                %v2991 = vld [vmem:[%s2955 + $0x88] sm:%s2948]
                %2992 = vst [vmem:[%s2956 + $0x108] sm:%s2948] %v2991
                %v2993 = vld [vmem:[%s2955 + $0x90] sm:%s2948]
                %2994 = vst [vmem:[%s2956 + $0x110] sm:%s2948] %v2993
                %v2995 = vld [vmem:[%s2955 + $0x98] sm:%s2948]
                %2996 = vst [vmem:[%s2956 + $0x118] sm:%s2948] %v2995
                %v2997 = vld [vmem:[%s2955 + $0xa0] sm:%s2948]
                %2998 = vst [vmem:[%s2956 + $0x120] sm:%s2948] %v2997
                %v2999 = vld [vmem:[%s2955 + $0xa8] sm:%s2948]
                %3000 = vst [vmem:[%s2956 + $0x128] sm:%s2948] %v2999
                %v3001 = vld [vmem:[%s2955 + $0xb0] sm:%s2948]
                %3002 = vst [vmem:[%s2956 + $0x130] sm:%s2948] %v3001
                %v3003 = vld [vmem:[%s2955 + $0xb8] sm:%s2948]
                %3004 = vst [vmem:[%s2956 + $0x138] sm:%s2948] %v3003
                %v3005 = vld [vmem:[%s2955 + $0xc0] sm:%s2948]
                %3006 = vst [vmem:[%s2956 + $0x140] sm:%s2948] %v3005
                %v3007 = vld [vmem:[%s2955 + $0xc8] sm:%s2948]
                %3008 = vst [vmem:[%s2956 + $0x148] sm:%s2948] %v3007
                %v3009 = vld [vmem:[%s2955 + $0xd0] sm:%s2948]
                %3010 = vst [vmem:[%s2956 + $0x150] sm:%s2948] %v3009
                %v3011 = vld [vmem:[%s2955 + $0xd8] sm:%s2948]
                %3012 = vst [vmem:[%s2956 + $0x158] sm:%s2948] %v3011
                %v3013 = vld [vmem:[%s2955 + $0xe0] sm:%s2948]
                %3014 = vst [vmem:[%s2956 + $0x160] sm:%s2948] %v3013
                %v3015 = vld [vmem:[%s2955 + $0xe8] sm:%s2948]
                %3016 = vst [vmem:[%s2956 + $0x168] sm:%s2948] %v3015
                %v3017 = vld [vmem:[%s2955 + $0xf0] sm:%s2948]
                %3018 = vst [vmem:[%s2956 + $0x170] sm:%s2948] %v3017
                %v3019 = vld [vmem:[%s2955 + $0xf8] sm:%s2948]
                %3020 = vst [vmem:[%s2956 + $0x178] sm:%s2948] %v3019
                %v3021 = vld [vmem:[%s2955 + $0x100] sm:%s2948]
                %3022 = vst [vmem:[%s2956 + $0x200] sm:%s2948] %v3021
                %v3023 = vld [vmem:[%s2955 + $0x108] sm:%s2948]
                %3024 = vst [vmem:[%s2956 + $0x208] sm:%s2948] %v3023
                %v3025 = vld [vmem:[%s2955 + $0x110] sm:%s2948]
                %3026 = vst [vmem:[%s2956 + $0x210] sm:%s2948] %v3025
                %v3027 = vld [vmem:[%s2955 + $0x118] sm:%s2948]
                %3028 = vst [vmem:[%s2956 + $0x218] sm:%s2948] %v3027
                %v3029 = vld [vmem:[%s2955 + $0x120] sm:%s2948]
                %3030 = vst [vmem:[%s2956 + $0x220] sm:%s2948] %v3029
                %v3031 = vld [vmem:[%s2955 + $0x128] sm:%s2948]
                %3032 = vst [vmem:[%s2956 + $0x228] sm:%s2948] %v3031
                %v3033 = vld [vmem:[%s2955 + $0x130] sm:%s2948]
                %3034 = vst [vmem:[%s2956 + $0x230] sm:%s2948] %v3033
                %v3035 = vld [vmem:[%s2955 + $0x138] sm:%s2948]
                %3036 = vst [vmem:[%s2956 + $0x238] sm:%s2948] %v3035
                %v3037 = vld [vmem:[%s2955 + $0x140] sm:%s2948]
                %3038 = vst [vmem:[%s2956 + $0x240] sm:%s2948] %v3037
                %v3039 = vld [vmem:[%s2955 + $0x148] sm:%s2948]
                %3040 = vst [vmem:[%s2956 + $0x248] sm:%s2948] %v3039
                %v3041 = vld [vmem:[%s2955 + $0x150] sm:%s2948]
                %3042 = vst [vmem:[%s2956 + $0x250] sm:%s2948] %v3041
                %v3043 = vld [vmem:[%s2955 + $0x158] sm:%s2948]
                %3044 = vst [vmem:[%s2956 + $0x258] sm:%s2948] %v3043
                %v3045 = vld [vmem:[%s2955 + $0x160] sm:%s2948]
                %3046 = vst [vmem:[%s2956 + $0x260] sm:%s2948] %v3045
                %v3047 = vld [vmem:[%s2955 + $0x168] sm:%s2948]
                %3048 = vst [vmem:[%s2956 + $0x268] sm:%s2948] %v3047
                %v3049 = vld [vmem:[%s2955 + $0x170] sm:%s2948]
                %3050 = vst [vmem:[%s2956 + $0x270] sm:%s2948] %v3049
                %v3051 = vld [vmem:[%s2955 + $0x178] sm:%s2948]
                %3052 = vst [vmem:[%s2956 + $0x278] sm:%s2948] %v3051
                %v3053 = vld [vmem:[%s2955 + $0x180] sm:%s2948]
                %3054 = vst [vmem:[%s2956 + $0x300] sm:%s2948] %v3053
                %v3055 = vld [vmem:[%s2955 + $0x188] sm:%s2948]
                %3056 = vst [vmem:[%s2956 + $0x308] sm:%s2948] %v3055
                %v3057 = vld [vmem:[%s2955 + $0x190] sm:%s2948]
                %3058 = vst [vmem:[%s2956 + $0x310] sm:%s2948] %v3057
                %v3059 = vld [vmem:[%s2955 + $0x198] sm:%s2948]
                %3060 = vst [vmem:[%s2956 + $0x318] sm:%s2948] %v3059
                %v3061 = vld [vmem:[%s2955 + $0x1a0] sm:%s2948]
                %3062 = vst [vmem:[%s2956 + $0x320] sm:%s2948] %v3061
                %v3063 = vld [vmem:[%s2955 + $0x1a8] sm:%s2948]
                %3064 = vst [vmem:[%s2956 + $0x328] sm:%s2948] %v3063
                %v3065 = vld [vmem:[%s2955 + $0x1b0] sm:%s2948]
                %3066 = vst [vmem:[%s2956 + $0x330] sm:%s2948] %v3065
                %v3067 = vld [vmem:[%s2955 + $0x1b8] sm:%s2948]
                %3068 = vst [vmem:[%s2956 + $0x338] sm:%s2948] %v3067
                %v3069 = vld [vmem:[%s2955 + $0x1c0] sm:%s2948]
                %3070 = vst [vmem:[%s2956 + $0x340] sm:%s2948] %v3069
                %v3071 = vld [vmem:[%s2955 + $0x1c8] sm:%s2948]
                %3072 = vst [vmem:[%s2956 + $0x348] sm:%s2948] %v3071
                %v3073 = vld [vmem:[%s2955 + $0x1d0] sm:%s2948]
                %3074 = vst [vmem:[%s2956 + $0x350] sm:%s2948] %v3073
                %v3075 = vld [vmem:[%s2955 + $0x1d8] sm:%s2948]
                %3076 = vst [vmem:[%s2956 + $0x358] sm:%s2948] %v3075
                %v3077 = vld [vmem:[%s2955 + $0x1e0] sm:%s2948]
                %3078 = vst [vmem:[%s2956 + $0x360] sm:%s2948] %v3077
                %v3079 = vld [vmem:[%s2955 + $0x1e8] sm:%s2948]
                %3080 = vst [vmem:[%s2956 + $0x368] sm:%s2948] %v3079
                %v3081 = vld [vmem:[%s2955 + $0x1f0] sm:%s2948]
                %3082 = vst [vmem:[%s2956 + $0x370] sm:%s2948] %v3081
                %v3083 = vld [vmem:[%s2955 + $0x1f8] sm:%s2948]
                %3084 = vst [vmem:[%s2956 + $0x378] sm:%s2948] %v3083
              $region57: #{up_conv_forward.2} parent=51 // loop_footer
                %s2954 = sadd.s32 1, %s2950
              $region58: #{up_conv_forward.2} parent=51 // loop_footer_branch
                %2949 = sbr.rel target = $region54
              $region59: #{up_conv_forward.2} parent=51 // loop_exit
                _
            $region52: #{up_conv_forward.2} parent=43 // pred_fallthru
              _
          $region44: #{up_conv_forward.2} parent=39 // pred_fallthru
            _
          %3225 = vnop
        $region40: #{up_conv_forward.2} parent=35 // pred_fallthru
          _
        // Predicated region
        $region75: #{up_conv_forward.2} parent=35 // pred_check
          %p3226 = pneg %p192
        $region76: #{up_conv_forward.2} parent=35 // pred_check_branch
          %3228 = sbr.rel (%p3226) target = $region78
        $region77: #{up_conv_forward.2} parent=35 // pred_region
          _
        $region78: #{up_conv_forward.2} parent=35 // pred_fallthru
          _
      $region36: #{up_conv_forward.2} parent=5 // pred_fallthru
        _
      %p3229 = scmp.le.s32.totalorder 2, %s12
      // Predicated region
      $region79: #{up_conv_forward.2} parent=5 // pred_check
        %p3230 = pneg %p3229
      $region80: #{up_conv_forward.2} parent=5 // pred_check_branch
        %3232 = sbr.rel (%p3230) target = $region82
      $region81: #{up_conv_forward.2} parent=5 // pred_region
        %s3233 = ssub.s32 %s12, 2
        // Predicated region
        $region83: #{up_conv_forward.2} parent=81 // pred_check
          %p3234 = pneg %p170
        $region84: #{up_conv_forward.2} parent=81 // pred_check_branch
          %3236 = sbr.rel (%p3234) target = $region86
        $region85: #{up_conv_forward.2} parent=81 // pred_region
          %s3237 = sand.u32 %s155, 1
          %s3238 = sand.u32 %s155, 1
          %s3239 = smul.addr %s3238, 512
          %s3240 = scalar_lea.vmem [#allocation3], %s3239
        $region86: #{up_conv_forward.2} parent=81 // pred_fallthru
          _
        // Predicated region
        $region87: #{up_conv_forward.2} parent=81 // pred_check
          %p3241 = pneg %p198
        $region88: #{up_conv_forward.2} parent=81 // pred_check_branch
          %3243 = sbr.rel (%p3241) target = $region90
        $region89: #{up_conv_forward.2} parent=81 // pred_region
          %p3244 = scmp.lt.s32.totalorder %s23, 1
          %s3245 = scalar_select %p3244, %s23, 1
          %p3246 = scmp.lt.s32.totalorder %s24, 1
          %s3247 = scalar_select %p3246, %s24, 1
          %s3248 = smul.addr %s3245, 2
          %s3249 = sadd.s32 %s3247, %s3248
          %s3250 = smul.addr %s3249, 2
          %s3251 = scalar_lea.vmem %s5, %s3250
        $region90: #{up_conv_forward.2} parent=81 // pred_fallthru
          _
      $region82: #{up_conv_forward.2} parent=5 // pred_fallthru
        _
    $region6: #{up_conv_forward.2} parent=1 // loop_footer
      %s16 = sadd.s32 1, %s12
    $region7: #{up_conv_forward.2} parent=1 // loop_footer_branch
      %11 = sbr.rel target = $region3
    $region8: #{up_conv_forward.2} parent=1 // loop_exit
      _

</llo_original>
